<compile_context>
chip_gen: v5e
topology: v5e:2x2
jax: 0.10.0
libtpu: 0.0.40
codegen_flags: <defaults>
</compile_context>

<pallas_src>
import functools

import jax
import jax.numpy as jnp
from jax import lax
from jax.experimental import pallas as pl
from jax.experimental.pallas import tpu as pltpu


_HEAD_PAD = 128   # lane-dense width of the fused head / probability slab


def _resident_spec(shape):
    """Full-array block with a constant index_map -> DMA'd once, stays in VMEM."""
    zeros = (0,) * len(shape)
    return pl.BlockSpec(shape, lambda i: zeros)


# ----------------------------------------------------------------------------
# Pallas kernel: fully fused multi-step ActorNet decode (single invocation).
# ----------------------------------------------------------------------------
def _make_actor_fused_kernel(B, H, num_layers, output_size):
    NL = num_layers
    O = output_size

    def kernel(*refs):
        (oh_ref, embexp_ref, win_ref, bin_ref) = refs[:4]
        lstm_refs = refs[4:4 + 3 * NL]          # per layer: wih, whh, b(ih+hh)
        (gamma_ref, beta_ref, wheads_ref, bheads_ref, h0_ref, c0_ref,
         probs_ref, hout_ref, cout_ref, gin_sc) = refs[4 + 3 * NL:]

        S = oh_ref.shape[0] // B                # number of decode steps

        # ------------------------------------------------------------------
        # Step-independent front end, batched over ALL decode steps at once:
        #   one-hot -> embedding expand -> input_layer -> layer-0 wih + bias.
        # (Padding columns/rows of emb_exp / win are zero, so this is exact.)
        # ------------------------------------------------------------------
        wih0_ref = lstm_refs[0]
        b0_ref = lstm_refs[2]
        x_emb = jnp.dot(oh_ref[...], embexp_ref[...],
                        preferred_element_type=jnp.float32)      # (S*B, 2K_pad)
        x = jnp.dot(x_emb, win_ref[...],
                    preferred_element_type=jnp.float32) + bin_ref[...]
        g0 = jnp.dot(x, wih0_ref[...],
                     preferred_element_type=jnp.float32) + b0_ref[...]
        for i in range(S):                       # split into per-step VMEM slabs
            gin_sc[i] = g0[i * B:(i + 1) * B, :]

        # Hoist weights / affine params out of the serial step loop.
        whh_w = [lstm_refs[3 * l + 1][...] for l in range(NL)]
        wih_w = [None] + [lstm_refs[3 * l][...] for l in range(1, NL)]
        b_w = [None] + [lstm_refs[3 * l + 2][...] for l in range(1, NL)]
        gamma = gamma_ref[...]
        beta = beta_ref[...]
        w_heads = wheads_ref[...]
        b_heads = bheads_ref[...]

        # Loop-invariant row one-hot masks and head-segment lane masks.
        row_idx = lax.broadcasted_iota(jnp.int32, (B, 1), 0)
        row_masks = [(row_idx == r).astype(jnp.float32) for r in range(B)]
        lane = lax.broadcasted_iota(jnp.int32, (1, _HEAD_PAD), 1)
        m_sym = lane < O
        m_pos = jnp.logical_and(lane >= O, lane < O + 3)
        neg = jnp.float32(-1e30)

        def cell(gates, c_prev):
            # Two full-vreg EUP activations on (1, 4H), then slice.
            sg = jax.nn.sigmoid(gates)
            th = jnp.tanh(gates)
            i_g = sg[:, 0 * H:1 * H]
            f_g = sg[:, 1 * H:2 * H]
            g_g = th[:, 2 * H:3 * H]
            o_g = sg[:, 3 * H:4 * H]
            c_new = f_g * c_prev + i_g * g_g
            h_new = o_g * jnp.tanh(c_new)
            return h_new, c_new

        def step(t, carry):
            h, c = carry
            h = list(h)
            c = list(c)

            # ---- wavefronted stacked LSTM over the B "time" rows ----------
            out_prev = None
            for l in range(NL):
                if l == 0:
                    gin_l = gin_sc[t]                            # (B, 4H)
                else:
                    # Batched (B,H)@(H,4H) input projection for layer l; only
                    # the h @ whh term stays on the serial per-row path.
                    gin_l = jnp.dot(out_prev, wih_w[l],
                                    preferred_element_type=jnp.float32) + b_w[l]
                out_l = jnp.zeros((B, H), jnp.float32)
                for row in range(B):
                    gates = gin_l[row:row + 1, :] + jnp.dot(
                        h[l], whh_w[l], preferred_element_type=jnp.float32)
                    h[l], c[l] = cell(gates, c[l])
                    out_l = out_l + row_masks[row] * h[l]
                out_prev = out_l

            # ---- BatchNorm1d (training-mode batch stats), gamma folded -----
            mean = jnp.mean(out_prev, axis=0, keepdims=True)
            var = jnp.mean((out_prev - mean) ** 2, axis=0, keepdims=True)
            scale = gamma * lax.rsqrt(var + 1e-5)
            out_bn = (out_prev - mean) * scale + beta

            # GaussianActivation: exp(-x^2)
            g_act = jnp.exp(-(out_bn * out_bn))

            # Fused, lane-dense heads: [fc_output | fc_position | zero pad].
            logits = jnp.dot(g_act, w_heads,
                             preferred_element_type=jnp.float32) + b_heads

            # Segmented softmax over the two disjoint lane ranges; pad lanes
            # contribute exp(-1e30-...) == 0, so there is no leakage.
            logit_s = jnp.where(m_sym, logits, neg)
            logit_p = jnp.where(m_pos, logits, neg)
            e_s = jnp.exp(logit_s - jnp.max(logit_s, axis=-1, keepdims=True))
            e_p = jnp.exp(logit_p - jnp.max(logit_p, axis=-1, keepdims=True))
            probs = (e_s / jnp.sum(e_s, axis=-1, keepdims=True)
                     + e_p / jnp.sum(e_p, axis=-1, keepdims=True))
            probs_ref[t] = probs                                 # (B, 128) dense

            return tuple(h), tuple(c)

        h_init = tuple(h0_ref[l:l + 1, :] for l in range(NL))
        c_init = tuple(c0_ref[l:l + 1, :] for l in range(NL))
        h_fin, c_fin = lax.fori_loop(0, S, step, (h_init, c_init),
                                     unroll=True)

        for l in range(NL):
            hout_ref[l:l + 1, :] = h_fin[l]
            cout_ref[l:l + 1, :] = c_fin[l]

    return kernel


# ----------------------------------------------------------------------------
# Python-side ActorNet wrapper (parameter setup + pallas_call glue).
# ----------------------------------------------------------------------------
class ActorNetPallas:

    def __init__(self, batch_size, input_size, hidden_size, num_layers,
                 output_size, symbol_len, key):
        self.B = batch_size
        self.L = symbol_len
        self.K = 3 + 2 * symbol_len             # tokens per lstm_input row
        self.KL = self.K * self.L
        self.KL_pad = ((self.KL + 127) // 128) * 128      # lane-aligned
        self.TWO_K = 2 * self.K
        self.TWO_K_pad = ((self.TWO_K + 7) // 8) * 8      # sublane-aligned
        self.input_size = input_size
        self.H = hidden_size
        self.num_layers = num_layers
        self.output_size = output_size
        self.params = self._init_params(key)

    def _init_params(self, key):
        # NOTE: weights are randomly initialized directly in (in, 4H) layout
        # with i,f,g,o gate order and pre-folded (bih+bhh) bias.  Loading real
        # PyTorch weights would require transposing weight_ih/weight_hh and
        # re-verifying the gate ordering.
        L, K, I, H, NL, O = (self.L, self.K, self.input_size, self.H,
                             self.num_layers, self.output_size)
        keys = iter(jax.random.split(key, 8 + 4 * NL))
        u = lambda k, shape, s: jax.random.uniform(k, shape, jnp.float32, -s, s)

        p = {}
        # nn.Embedding(L, 2)
        emb = jax.random.normal(next(keys), (L, 2), jnp.float32)
        p["emb"] = emb
        # Exact embedding-expansion matrix, zero-padded:
        #   emb_exp[k*L + l, 2*k + d] = emb[l, d]
        eye_k = jnp.eye(K, dtype=jnp.float32)
        emb_exp = (eye_k[:, None, :, None]
                   * emb[None, :, None, :]).reshape(K * L, 2 * K)
        p["emb_exp"] = (jnp.zeros((self.KL_pad, self.TWO_K_pad), jnp.float32)
                        .at[:K * L, :2 * K].set(emb_exp))
        # nn.Linear(2K, input_size)  (stored transposed (in, out), rows padded)
        win = u(next(keys), (2 * K, I), 0.2)
        p["win"] = (jnp.zeros((self.TWO_K_pad, I), jnp.float32)
                    .at[:2 * K, :].set(win))
        p["b_in"] = u(next(keys), (1, I), 0.2)
        # nn.LSTM(input_size, hidden, num_layers): biases pre-folded (bih+bhh)
        p["wih"], p["whh"], p["b_l"] = [], [], []
        for l in range(NL):
            in_l = I if l == 0 else H
            p["wih"].append(u(next(keys), (in_l, 4 * H), 0.2))
            p["whh"].append(u(next(keys), (H, 4 * H), 0.2))
            bih = u(next(keys), (1, 4 * H), 0.2)
            bhh = u(next(keys), (1, 4 * H), 0.2)
            p["b_l"].append(bih + bhh)
        # nn.BatchNorm1d(hidden) default affine init (training-mode stats;
        # eval-mode running stats are not modeled).
        p["gamma"] = jnp.ones((1, H), jnp.float32)
        p["beta"] = jnp.zeros((1, H), jnp.float32)
        # Fused, lane-dense heads: [Linear(H,O) | Linear(H,3) | zero pad].
        wout = u(next(keys), (H, O), 0.2)
        b_out = u(next(keys), (1, O), 0.2)
        wpos = u(next(keys), (H, 3), 0.2)
        b_pos = u(next(keys), (1, 3), 0.2)
        p["w_heads"] = (jnp.zeros((H, _HEAD_PAD), jnp.float32)
                        .at[:, :O].set(wout).at[:, O:O + 3].set(wpos))
        p["b_heads"] = (jnp.zeros((1, _HEAD_PAD), jnp.float32)
                        .at[:, :O].set(b_out).at[:, O:O + 3].set(b_pos))
        return p

    @functools.partial(jax.jit, static_argnums=0)
    def run(self, lstm_inputs, h0, c0):
        """Fused multi-step decode in a single kernel launch.

        lstm_inputs: (n_steps, B, K) int32 symbol indices.
        Returns (probs_sym (n_steps,B,O), probs_pos (n_steps,B,3), h, c).
        """
        n_steps = lstm_inputs.shape[0]
        B, H, NL, O = self.B, self.H, self.num_layers, self.output_size
        p = self.params

        # one-hot encoding for all steps at once (index glue, no float math),
        # reshaped to one (n_steps*B, KL_pad) slab for the batched front end.
        oh = jax.nn.one_hot(lstm_inputs, self.L, dtype=jnp.float32)
        oh = oh.reshape(n_steps * B, self.KL)
        oh = jnp.pad(oh, ((0, 0), (0, self.KL_pad - self.KL)))

        inputs = [oh, p["emb_exp"], p["win"], p["b_in"]]
        in_specs = [
            _resident_spec(oh.shape),
            _resident_spec(p["emb_exp"].shape),
            _resident_spec(p["win"].shape),
            _resident_spec(p["b_in"].shape),
        ]
        for l in range(NL):
            for name in ("wih", "whh", "b_l"):
                arr = p[name][l]
                inputs.append(arr)
                in_specs.append(_resident_spec(arr.shape))
        for name in ("gamma", "beta", "w_heads", "b_heads"):
            inputs.append(p[name])
            in_specs.append(_resident_spec(p[name].shape))
        inputs += [h0, c0]
        in_specs += [_resident_spec((NL, H)), _resident_spec((NL, H))]

        out_shape = (
            jax.ShapeDtypeStruct((n_steps, B, _HEAD_PAD), jnp.float32),
            jax.ShapeDtypeStruct((NL, H), jnp.float32),
            jax.ShapeDtypeStruct((NL, H), jnp.float32),
        )
        out_specs = (
            _resident_spec((n_steps, B, _HEAD_PAD)),
            _resident_spec((NL, H)),
            _resident_spec((NL, H)),
        )

        kernel = _make_actor_fused_kernel(B, H, NL, O)
        grid_spec = pltpu.PrefetchScalarGridSpec(
            num_scalar_prefetch=0,
            grid=(1,),
            in_specs=in_specs,
            out_specs=out_specs,
            scratch_shapes=[pltpu.VMEM((n_steps, B, 4 * H), jnp.float32)],
        )
        probs, h, c = pl.pallas_call(
            kernel,
            out_shape=out_shape,
            grid_spec=grid_spec,
            compiler_params=pltpu.CompilerParams(
                dimension_semantics=("arbitrary",)),
        )(*inputs)

        probs_sym = probs[:, :, :O]
        probs_pos = probs[:, :, O:O + 3]
        return probs_sym, probs_pos, h, c


# ----------------------------------------------------------------------------
# Driver
# ----------------------------------------------------------------------------
if __name__ == "__main__":
    batch_size = 4
    symbol_len = 5          # symbol_set.length
    input_size = 32
    hidden_size = 32
    num_layers = 2
    output_size = symbol_len

    key = jax.random.PRNGKey(0)
    k_param, k_state, k_loop = jax.random.split(key, 3)

    net = ActorNetPallas(batch_size, input_size, hidden_size, num_layers,
                         output_size, symbol_len, k_param)

    # torch.rand((num_layers, hidden_size)) equivalents
    kh, kc = jax.random.split(k_state)
    h0 = jax.random.uniform(kh, (num_layers, hidden_size), jnp.float32)
    c0 = jax.random.uniform(kc, (num_layers, hidden_size), jnp.float32)

    # TODO(synk): the original while-loop termination depends on TreeTable
    # symbolic-tree construction (host-side Python with data-dependent control
    # flow); run a fixed number of decode steps with stand-in getInput data.
    n_steps = 3
    k_loop, k_in, k_a1, k_a2 = jax.random.split(k_loop, 4)
    lstm_inputs = jax.random.randint(k_in, (n_steps, batch_size, net.K), 0,
                                     symbol_len, dtype=jnp.int32)

    # ONE fused kernel launch covers every decode step.
    probs_sym, probs_pos, h, c = net.run(lstm_inputs, h0, c0)

    # Categorical sample + log_prob for all steps (glue, matches Categorical)
    finished = jnp.zeros((batch_size,), jnp.int32)
    action1 = jax.random.categorical(k_a1, jnp.log(probs_sym), axis=-1)
    action2 = jax.random.categorical(k_a2, jnp.log(probs_pos), axis=-1)
    lp1 = jnp.log(jnp.take_along_axis(probs_sym, action1[..., None],
                                      axis=-1))[..., 0]
    lp2 = jnp.log(jnp.take_along_axis(probs_pos, action2[..., None],
                                      axis=-1))[..., 0]
    # updateByFinished: zero out log-probs of finished rows
    lp1 = jnp.where(finished[None, :] == 1, 0.0, lp1)
    lp2 = jnp.where(finished[None, :] == 1, 0.0, lp2)

    jax.block_until_ready((lp1, lp2, h, c))
    assert lp1.shape == (n_steps, batch_size)
    assert lp2.shape == (n_steps, batch_size)
    assert h.shape == (num_layers, hidden_size)
    assert c.shape == (num_layers, hidden_size)
    assert bool(jnp.all(jnp.isfinite(lp1)))
    assert bool(jnp.all(jnp.isfinite(lp2)))
    assert bool(jnp.all(probs_sym >= 0.0)) and bool(jnp.all(probs_pos >= 0.0))
    assert bool(jnp.all(jnp.abs(jnp.sum(probs_sym, -1) - 1.0) < 1e-3))
    assert bool(jnp.all(jnp.abs(jnp.sum(probs_pos, -1) - 1.0) < 1e-3))
    print("KERNEL_OK")
</pallas_src>

<mosaic_0001>
module attributes {stable_mosaic.version = 11 : i64} {
  func.func @kernel(%arg0: i32, %arg1: memref<12x128xf32, #tpu.memory_space<vmem>>, %arg2: memref<128x32xf32, #tpu.memory_space<vmem>>, %arg3: memref<32x32xf32, #tpu.memory_space<vmem>>, %arg4: memref<1x32xf32, #tpu.memory_space<vmem>>, %arg5: memref<32x128xf32, #tpu.memory_space<vmem>>, %arg6: memref<32x128xf32, #tpu.memory_space<vmem>>, %arg7: memref<1x128xf32, #tpu.memory_space<vmem>>, %arg8: memref<32x128xf32, #tpu.memory_space<vmem>>, %arg9: memref<32x128xf32, #tpu.memory_space<vmem>>, %arg10: memref<1x128xf32, #tpu.memory_space<vmem>>, %arg11: memref<1x32xf32, #tpu.memory_space<vmem>>, %arg12: memref<1x32xf32, #tpu.memory_space<vmem>>, %arg13: memref<32x128xf32, #tpu.memory_space<vmem>>, %arg14: memref<1x128xf32, #tpu.memory_space<vmem>>, %arg15: memref<2x32xf32, #tpu.memory_space<vmem>>, %arg16: memref<2x32xf32, #tpu.memory_space<vmem>>, %arg17: memref<3x4x128xf32, #tpu.memory_space<vmem>>, %arg18: memref<2x32xf32, #tpu.memory_space<vmem>>, %arg19: memref<2x32xf32, #tpu.memory_space<vmem>>, %arg20: memref<3x4x128xf32, #tpu.memory_space<vmem>>) attributes {dimension_semantics = [#tpu.dimension_semantics<arbitrary>], iteration_bounds = array<i64: 1>, scalar_prefetch = 0 : i64, scratch_operands = 1 : i64, tpu.core_type = #tpu.core_type<tc>, window_params = [{pipeline_mode = #tpu.pipeline_mode<synchronous>, transform_indices = @transform_0, window_bounds = array<i64: 12, 128>}, {pipeline_mode = #tpu.pipeline_mode<synchronous>, transform_indices = @transform_1, window_bounds = array<i64: 128, 32>}, {pipeline_mode = #tpu.pipeline_mode<synchronous>, transform_indices = @transform_2, window_bounds = array<i64: 32, 32>}, {pipeline_mode = #tpu.pipeline_mode<synchronous>, transform_indices = @transform_3, window_bounds = array<i64: 1, 32>}, {pipeline_mode = #tpu.pipeline_mode<synchronous>, transform_indices = @transform_4, window_bounds = array<i64: 32, 128>}, {pipeline_mode = #tpu.pipeline_mode<synchronous>, transform_indices = @transform_5, window_bounds = array<i64: 32, 128>}, {pipeline_mode = #tpu.pipeline_mode<synchronous>, transform_indices = @transform_6, window_bounds = array<i64: 1, 128>}, {pipeline_mode = #tpu.pipeline_mode<synchronous>, transform_indices = @transform_7, window_bounds = array<i64: 32, 128>}, {pipeline_mode = #tpu.pipeline_mode<synchronous>, transform_indices = @transform_8, window_bounds = array<i64: 32, 128>}, {pipeline_mode = #tpu.pipeline_mode<synchronous>, transform_indices = @transform_9, window_bounds = array<i64: 1, 128>}, {pipeline_mode = #tpu.pipeline_mode<synchronous>, transform_indices = @transform_10, window_bounds = array<i64: 1, 32>}, {pipeline_mode = #tpu.pipeline_mode<synchronous>, transform_indices = @transform_11, window_bounds = array<i64: 1, 32>}, {pipeline_mode = #tpu.pipeline_mode<synchronous>, transform_indices = @transform_12, window_bounds = array<i64: 32, 128>}, {pipeline_mode = #tpu.pipeline_mode<synchronous>, transform_indices = @transform_13, window_bounds = array<i64: 1, 128>}, {pipeline_mode = #tpu.pipeline_mode<synchronous>, transform_indices = @transform_14, window_bounds = array<i64: 2, 32>}, {pipeline_mode = #tpu.pipeline_mode<synchronous>, transform_indices = @transform_15, window_bounds = array<i64: 2, 32>}, {pipeline_mode = #tpu.pipeline_mode<synchronous>, transform_indices = @transform_16, window_bounds = array<i64: 3, 4, 128>}, {pipeline_mode = #tpu.pipeline_mode<synchronous>, transform_indices = @transform_17, window_bounds = array<i64: 2, 32>}, {pipeline_mode = #tpu.pipeline_mode<synchronous>, transform_indices = @transform_18, window_bounds = array<i64: 2, 32>}]} {
    %c0 = arith.constant 0 : index
    %c0_0 = arith.constant 0 : index
    %0 = vector.load %arg1[%c0, %c0_0] : memref<12x128xf32, #tpu.memory_space<vmem>>, vector<12x128xf32>
    %c0_1 = arith.constant 0 : index
    %c0_2 = arith.constant 0 : index
    %1 = vector.load %arg2[%c0_1, %c0_2] : memref<128x32xf32, #tpu.memory_space<vmem>>, vector<128x32xf32>
    %cst = arith.constant dense<0.000000e+00> : vector<12x32xf32>
    %2 = tpu.matmul %0, %1, %cst {dimension_numbers = #tpu.dot_dimension_numbers<[1], [0], [0], [1], [0, 0, 1, 1], [], []>} : vector<12x128xf32>, vector<128x32xf32>, vector<12x32xf32> -> vector<12x32xf32>
    %c0_3 = arith.constant 0 : index
    %c0_4 = arith.constant 0 : index
    %3 = vector.load %arg3[%c0_3, %c0_4] : memref<32x32xf32, #tpu.memory_space<vmem>>, vector<32x32xf32>
    %cst_5 = arith.constant dense<0.000000e+00> : vector<12x32xf32>
    %4 = tpu.matmul %2, %3, %cst_5 {dimension_numbers = #tpu.dot_dimension_numbers<[1], [0], [0], [1], [0, 0, 1, 1], [], []>} : vector<12x32xf32>, vector<32x32xf32>, vector<12x32xf32> -> vector<12x32xf32>
    %c0_6 = arith.constant 0 : index
    %c0_7 = arith.constant 0 : index
    %5 = vector.load %arg4[%c0_6, %c0_7] : memref<1x32xf32, #tpu.memory_space<vmem>>, vector<1x32xf32>
    %6 = vector.broadcast %5 : vector<1x32xf32> to vector<12x32xf32>
    %7 = arith.addf %4, %6 : vector<12x32xf32>
    %c0_8 = arith.constant 0 : index
    %c0_9 = arith.constant 0 : index
    %8 = vector.load %arg5[%c0_8, %c0_9] : memref<32x128xf32, #tpu.memory_space<vmem>>, vector<32x128xf32>
    %cst_10 = arith.constant dense<0.000000e+00> : vector<12x128xf32>
    %9 = tpu.matmul %7, %8, %cst_10 {dimension_numbers = #tpu.dot_dimension_numbers<[1], [0], [0], [1], [0, 0, 1, 1], [], []>} : vector<12x32xf32>, vector<32x128xf32>, vector<12x128xf32> -> vector<12x128xf32>
    %c0_11 = arith.constant 0 : index
    %c0_12 = arith.constant 0 : index
    %10 = vector.load %arg7[%c0_11, %c0_12] : memref<1x128xf32, #tpu.memory_space<vmem>>, vector<1x128xf32>
    %11 = vector.broadcast %10 : vector<1x128xf32> to vector<12x128xf32>
    %12 = arith.addf %9, %11 : vector<12x128xf32>
    %13 = vector.extract_strided_slice %12 {offsets = [0, 0], sizes = [4, 128], strides = [1, 1]} : vector<12x128xf32> to vector<4x128xf32>
    %c0_13 = arith.constant 0 : index
    %c0_14 = arith.constant 0 : index
    %c0_15 = arith.constant 0 : index
    %14 = vector.load %arg20[%c0_13, %c0_14, %c0_15] : memref<3x4x128xf32, #tpu.memory_space<vmem>>, vector<1x4x128xf32>
    %15 = vector.shape_cast %14 : vector<1x4x128xf32> to vector<4x128xf32>
    %16 = vector.shape_cast %13 : vector<4x128xf32> to vector<1x4x128xf32>
    tpu.vector_store %arg20[%c0_13, %c0_14, %c0_15], %16 {strides = array<i32>} : memref<3x4x128xf32, #tpu.memory_space<vmem>>, vector<1x4x128xf32>,
    %17 = vector.extract_strided_slice %12 {offsets = [4, 0], sizes = [4, 128], strides = [1, 1]} : vector<12x128xf32> to vector<4x128xf32>
    %c1 = arith.constant 1 : index
    %c0_16 = arith.constant 0 : index
    %c0_17 = arith.constant 0 : index
    %18 = vector.load %arg20[%c1, %c0_16, %c0_17] : memref<3x4x128xf32, #tpu.memory_space<vmem>>, vector<1x4x128xf32>
    %19 = vector.shape_cast %18 : vector<1x4x128xf32> to vector<4x128xf32>
    %20 = vector.shape_cast %17 : vector<4x128xf32> to vector<1x4x128xf32>
    tpu.vector_store %arg20[%c1, %c0_16, %c0_17], %20 {strides = array<i32>} : memref<3x4x128xf32, #tpu.memory_space<vmem>>, vector<1x4x128xf32>,
    %21 = vector.extract_strided_slice %12 {offsets = [8, 0], sizes = [4, 128], strides = [1, 1]} : vector<12x128xf32> to vector<4x128xf32>
    %c2 = arith.constant 2 : index
    %c0_18 = arith.constant 0 : index
    %c0_19 = arith.constant 0 : index
    %22 = vector.load %arg20[%c2, %c0_18, %c0_19] : memref<3x4x128xf32, #tpu.memory_space<vmem>>, vector<1x4x128xf32>
    %23 = vector.shape_cast %22 : vector<1x4x128xf32> to vector<4x128xf32>
    %24 = vector.shape_cast %21 : vector<4x128xf32> to vector<1x4x128xf32>
    tpu.vector_store %arg20[%c2, %c0_18, %c0_19], %24 {strides = array<i32>} : memref<3x4x128xf32, #tpu.memory_space<vmem>>, vector<1x4x128xf32>,
    %c0_20 = arith.constant 0 : index
    %c0_21 = arith.constant 0 : index
    %25 = vector.load %arg6[%c0_20, %c0_21] : memref<32x128xf32, #tpu.memory_space<vmem>>, vector<32x128xf32>
    %c0_22 = arith.constant 0 : index
    %c0_23 = arith.constant 0 : index
    %26 = vector.load %arg9[%c0_22, %c0_23] : memref<32x128xf32, #tpu.memory_space<vmem>>, vector<32x128xf32>
    %c0_24 = arith.constant 0 : index
    %c0_25 = arith.constant 0 : index
    %27 = vector.load %arg8[%c0_24, %c0_25] : memref<32x128xf32, #tpu.memory_space<vmem>>, vector<32x128xf32>
    %c0_26 = arith.constant 0 : index
    %c0_27 = arith.constant 0 : index
    %28 = vector.load %arg10[%c0_26, %c0_27] : memref<1x128xf32, #tpu.memory_space<vmem>>, vector<1x128xf32>
    %c0_28 = arith.constant 0 : index
    %c0_29 = arith.constant 0 : index
    %29 = vector.load %arg11[%c0_28, %c0_29] : memref<1x32xf32, #tpu.memory_space<vmem>>, vector<1x32xf32>
    %c0_30 = arith.constant 0 : index
    %c0_31 = arith.constant 0 : index
    %30 = vector.load %arg12[%c0_30, %c0_31] : memref<1x32xf32, #tpu.memory_space<vmem>>, vector<1x32xf32>
    %c0_32 = arith.constant 0 : index
    %c0_33 = arith.constant 0 : index
    %31 = vector.load %arg13[%c0_32, %c0_33] : memref<32x128xf32, #tpu.memory_space<vmem>>, vector<32x128xf32>
    %c0_34 = arith.constant 0 : index
    %c0_35 = arith.constant 0 : index
    %32 = vector.load %arg14[%c0_34, %c0_35] : memref<1x128xf32, #tpu.memory_space<vmem>>, vector<1x128xf32>
    %33 = tpu.iota {dimensions = array<i32: 0>} : vector<4x1xi32>
    %c0_i32 = arith.constant 0 : i32
    %34 = vector.broadcast %c0_i32 : i32 to vector<4x1xi32>
    %35 = arith.cmpi eq, %33, %34 : vector<4x1xi32>
    %36 = arith.extui %35 : vector<4x1xi1> to vector<4x1xi32>
    %37 = arith.sitofp %36 : vector<4x1xi32> to vector<4x1xf32>
    %c1_i32 = arith.constant 1 : i32
    %38 = vector.broadcast %c1_i32 : i32 to vector<4x1xi32>
    %39 = arith.cmpi eq, %33, %38 : vector<4x1xi32>
    %40 = arith.extui %39 : vector<4x1xi1> to vector<4x1xi32>
    %41 = arith.sitofp %40 : vector<4x1xi32> to vector<4x1xf32>
    %c2_i32 = arith.constant 2 : i32
    %42 = vector.broadcast %c2_i32 : i32 to vector<4x1xi32>
    %43 = arith.cmpi eq, %33, %42 : vector<4x1xi32>
    %44 = arith.extui %43 : vector<4x1xi1> to vector<4x1xi32>
    %45 = arith.sitofp %44 : vector<4x1xi32> to vector<4x1xf32>
    %c3_i32 = arith.constant 3 : i32
    %46 = vector.broadcast %c3_i32 : i32 to vector<4x1xi32>
    %47 = arith.cmpi eq, %33, %46 : vector<4x1xi32>
    %48 = arith.extui %47 : vector<4x1xi1> to vector<4x1xi32>
    %49 = arith.sitofp %48 : vector<4x1xi32> to vector<4x1xf32>
    %50 = tpu.iota {dimensions = array<i32: 1>} : vector<1x128xi32>
    %c5_i32 = arith.constant 5 : i32
    %51 = vector.broadcast %c5_i32 : i32 to vector<1x128xi32>
    %52 = arith.cmpi slt, %50, %51 : vector<1x128xi32>
    %c5_i32_36 = arith.constant 5 : i32
    %53 = vector.broadcast %c5_i32_36 : i32 to vector<1x128xi32>
    %54 = arith.cmpi sge, %50, %53 : vector<1x128xi32>
    %c8_i32 = arith.constant 8 : i32
    %55 = vector.broadcast %c8_i32 : i32 to vector<1x128xi32>
    %56 = arith.cmpi slt, %50, %55 : vector<1x128xi32>
    %57 = arith.andi %54, %56 : vector<1x128xi1>
    %c0_37 = arith.constant 0 : index
    %c0_38 = arith.constant 0 : index
    %58 = vector.load %arg15[%c0_37, %c0_38] : memref<2x32xf32, #tpu.memory_space<vmem>>, vector<1x32xf32>
    %c1_39 = arith.constant 1 : index
    %c0_40 = arith.constant 0 : index
    %59 = vector.load %arg15[%c1_39, %c0_40] : memref<2x32xf32, #tpu.memory_space<vmem>>, vector<1x32xf32>
    %c0_41 = arith.constant 0 : index
    %c0_42 = arith.constant 0 : index
    %60 = vector.load %arg16[%c0_41, %c0_42] : memref<2x32xf32, #tpu.memory_space<vmem>>, vector<1x32xf32>
    %c1_43 = arith.constant 1 : index
    %c0_44 = arith.constant 0 : index
    %61 = vector.load %arg16[%c1_43, %c0_44] : memref<2x32xf32, #tpu.memory_space<vmem>>, vector<1x32xf32>
    %cst_45 = arith.constant -1.000000e+30 : f32
    %c0_i32_46 = arith.constant 0 : i32
    %62 = arith.index_cast %c0_i32_46 : i32 to index
    %c0_47 = arith.constant 0 : index
    %c0_48 = arith.constant 0 : index
    %63 = vector.load %arg20[%62, %c0_47, %c0_48] : memref<3x4x128xf32, #tpu.memory_space<vmem>>, vector<1x4x128xf32>
    %64 = vector.shape_cast %63 : vector<1x4x128xf32> to vector<4x128xf32>
    %cst_49 = arith.constant 0.000000e+00 : f32
    %65 = vector.broadcast %cst_49 : f32 to vector<4x32xf32>
    %66 = vector.extract_strided_slice %64 {offsets = [0, 0], sizes = [1, 128], strides = [1, 1]} : vector<4x128xf32> to vector<1x128xf32>
    %cst_50 = arith.constant dense<0.000000e+00> : vector<1x128xf32>
    %67 = tpu.matmul %58, %25, %cst_50 {dimension_numbers = #tpu.dot_dimension_numbers<[1], [0], [0], [1], [0, 0, 1, 1], [], []>} : vector<1x32xf32>, vector<32x128xf32>, vector<1x128xf32> -> vector<1x128xf32>
    %68 = arith.addf %66, %67 : vector<1x128xf32>
    %69 = arith.negf %68 : vector<1x128xf32>
    %70 = math.exp %69 : vector<1x128xf32>
    %cst_51 = arith.constant 1.000000e+00 : f32
    %71 = vector.broadcast %cst_51 : f32 to vector<1x128xf32>
    %72 = arith.addf %71, %70 : vector<1x128xf32>
    %73 = arith.divf %71, %72 : vector<1x128xf32>
    %74 = math.tanh %68 : vector<1x128xf32>
    %75 = vector.extract_strided_slice %73 {offsets = [0, 0], sizes = [1, 32], strides = [1, 1]} : vector<1x128xf32> to vector<1x32xf32>
    %76 = vector.extract_strided_slice %73 {offsets = [0, 32], sizes = [1, 32], strides = [1, 1]} : vector<1x128xf32> to vector<1x32xf32>
    %77 = vector.extract_strided_slice %74 {offsets = [0, 64], sizes = [1, 32], strides = [1, 1]} : vector<1x128xf32> to vector<1x32xf32>
    %78 = vector.extract_strided_slice %73 {offsets = [0, 96], sizes = [1, 32], strides = [1, 1]} : vector<1x128xf32> to vector<1x32xf32>
    %79 = arith.mulf %76, %60 : vector<1x32xf32>
    %80 = arith.mulf %75, %77 : vector<1x32xf32>
    %81 = arith.addf %79, %80 : vector<1x32xf32>
    %82 = math.tanh %81 : vector<1x32xf32>
    %83 = arith.mulf %78, %82 : vector<1x32xf32>
    %84 = vector.broadcast %37 : vector<4x1xf32> to vector<4x32xf32>
    %85 = vector.broadcast %83 : vector<1x32xf32> to vector<4x32xf32>
    %86 = arith.mulf %84, %85 : vector<4x32xf32>
    %87 = arith.addf %65, %86 : vector<4x32xf32>
    %88 = vector.extract_strided_slice %64 {offsets = [1, 0], sizes = [1, 128], strides = [1, 1]} : vector<4x128xf32> to vector<1x128xf32>
    %cst_52 = arith.constant dense<0.000000e+00> : vector<1x128xf32>
    %89 = tpu.matmul %83, %25, %cst_52 {dimension_numbers = #tpu.dot_dimension_numbers<[1], [0], [0], [1], [0, 0, 1, 1], [], []>} : vector<1x32xf32>, vector<32x128xf32>, vector<1x128xf32> -> vector<1x128xf32>
    %90 = arith.addf %88, %89 : vector<1x128xf32>
    %91 = arith.negf %90 : vector<1x128xf32>
    %92 = math.exp %91 : vector<1x128xf32>
    %cst_53 = arith.constant 1.000000e+00 : f32
    %93 = vector.broadcast %cst_53 : f32 to vector<1x128xf32>
    %94 = arith.addf %93, %92 : vector<1x128xf32>
    %95 = arith.divf %93, %94 : vector<1x128xf32>
    %96 = math.tanh %90 : vector<1x128xf32>
    %97 = vector.extract_strided_slice %95 {offsets = [0, 0], sizes = [1, 32], strides = [1, 1]} : vector<1x128xf32> to vector<1x32xf32>
    %98 = vector.extract_strided_slice %95 {offsets = [0, 32], sizes = [1, 32], strides = [1, 1]} : vector<1x128xf32> to vector<1x32xf32>
    %99 = vector.extract_strided_slice %96 {offsets = [0, 64], sizes = [1, 32], strides = [1, 1]} : vector<1x128xf32> to vector<1x32xf32>
    %100 = vector.extract_strided_slice %95 {offsets = [0, 96], sizes = [1, 32], strides = [1, 1]} : vector<1x128xf32> to vector<1x32xf32>
    %101 = arith.mulf %98, %81 : vector<1x32xf32>
    %102 = arith.mulf %97, %99 : vector<1x32xf32>
    %103 = arith.addf %101, %102 : vector<1x32xf32>
    %104 = math.tanh %103 : vector<1x32xf32>
    %105 = arith.mulf %100, %104 : vector<1x32xf32>
    %106 = vector.broadcast %41 : vector<4x1xf32> to vector<4x32xf32>
    %107 = vector.broadcast %105 : vector<1x32xf32> to vector<4x32xf32>
    %108 = arith.mulf %106, %107 : vector<4x32xf32>
    %109 = arith.addf %87, %108 : vector<4x32xf32>
    %110 = vector.extract_strided_slice %64 {offsets = [2, 0], sizes = [1, 128], strides = [1, 1]} : vector<4x128xf32> to vector<1x128xf32>
    %cst_54 = arith.constant dense<0.000000e+00> : vector<1x128xf32>
    %111 = tpu.matmul %105, %25, %cst_54 {dimension_numbers = #tpu.dot_dimension_numbers<[1], [0], [0], [1], [0, 0, 1, 1], [], []>} : vector<1x32xf32>, vector<32x128xf32>, vector<1x128xf32> -> vector<1x128xf32>
    %112 = arith.addf %110, %111 : vector<1x128xf32>
    %113 = arith.negf %112 : vector<1x128xf32>
    %114 = math.exp %113 : vector<1x128xf32>
    %cst_55 = arith.constant 1.000000e+00 : f32
    %115 = vector.broadcast %cst_55 : f32 to vector<1x128xf32>
    %116 = arith.addf %115, %114 : vector<1x128xf32>
    %117 = arith.divf %115, %116 : vector<1x128xf32>
    %118 = math.tanh %112 : vector<1x128xf32>
    %119 = vector.extract_strided_slice %117 {offsets = [0, 0], sizes = [1, 32], strides = [1, 1]} : vector<1x128xf32> to vector<1x32xf32>
    %120 = vector.extract_strided_slice %117 {offsets = [0, 32], sizes = [1, 32], strides = [1, 1]} : vector<1x128xf32> to vector<1x32xf32>
    %121 = vector.extract_strided_slice %118 {offsets = [0, 64], sizes = [1, 32], strides = [1, 1]} : vector<1x128xf32> to vector<1x32xf32>
    %122 = vector.extract_strided_slice %117 {offsets = [0, 96], sizes = [1, 32], strides = [1, 1]} : vector<1x128xf32> to vector<1x32xf32>
    %123 = arith.mulf %120, %103 : vector<1x32xf32>
    %124 = arith.mulf %119, %121 : vector<1x32xf32>
    %125 = arith.addf %123, %124 : vector<1x32xf32>
    %126 = math.tanh %125 : vector<1x32xf32>
    %127 = arith.mulf %122, %126 : vector<1x32xf32>
    %128 = vector.broadcast %45 : vector<4x1xf32> to vector<4x32xf32>
    %129 = vector.broadcast %127 : vector<1x32xf32> to vector<4x32xf32>
    %130 = arith.mulf %128, %129 : vector<4x32xf32>
    %131 = arith.addf %109, %130 : vector<4x32xf32>
    %132 = vector.extract_strided_slice %64 {offsets = [3, 0], sizes = [1, 128], strides = [1, 1]} : vector<4x128xf32> to vector<1x128xf32>
    %cst_56 = arith.constant dense<0.000000e+00> : vector<1x128xf32>
    %133 = tpu.matmul %127, %25, %cst_56 {dimension_numbers = #tpu.dot_dimension_numbers<[1], [0], [0], [1], [0, 0, 1, 1], [], []>} : vector<1x32xf32>, vector<32x128xf32>, vector<1x128xf32> -> vector<1x128xf32>
    %134 = arith.addf %132, %133 : vector<1x128xf32>
    %135 = arith.negf %134 : vector<1x128xf32>
    %136 = math.exp %135 : vector<1x128xf32>
    %cst_57 = arith.constant 1.000000e+00 : f32
    %137 = vector.broadcast %cst_57 : f32 to vector<1x128xf32>
    %138 = arith.addf %137, %136 : vector<1x128xf32>
    %139 = arith.divf %137, %138 : vector<1x128xf32>
    %140 = math.tanh %134 : vector<1x128xf32>
    %141 = vector.extract_strided_slice %139 {offsets = [0, 0], sizes = [1, 32], strides = [1, 1]} : vector<1x128xf32> to vector<1x32xf32>
    %142 = vector.extract_strided_slice %139 {offsets = [0, 32], sizes = [1, 32], strides = [1, 1]} : vector<1x128xf32> to vector<1x32xf32>
    %143 = vector.extract_strided_slice %140 {offsets = [0, 64], sizes = [1, 32], strides = [1, 1]} : vector<1x128xf32> to vector<1x32xf32>
    %144 = vector.extract_strided_slice %139 {offsets = [0, 96], sizes = [1, 32], strides = [1, 1]} : vector<1x128xf32> to vector<1x32xf32>
    %145 = arith.mulf %142, %125 : vector<1x32xf32>
    %146 = arith.mulf %141, %143 : vector<1x32xf32>
    %147 = arith.addf %145, %146 : vector<1x32xf32>
    %148 = math.tanh %147 : vector<1x32xf32>
    %149 = arith.mulf %144, %148 : vector<1x32xf32>
    %150 = vector.broadcast %49 : vector<4x1xf32> to vector<4x32xf32>
    %151 = vector.broadcast %149 : vector<1x32xf32> to vector<4x32xf32>
    %152 = arith.mulf %150, %151 : vector<4x32xf32>
    %153 = arith.addf %131, %152 : vector<4x32xf32>
    %cst_58 = arith.constant dense<0.000000e+00> : vector<4x128xf32>
    %154 = tpu.matmul %153, %27, %cst_58 {dimension_numbers = #tpu.dot_dimension_numbers<[1], [0], [0], [1], [0, 0, 1, 1], [], []>} : vector<4x32xf32>, vector<32x128xf32>, vector<4x128xf32> -> vector<4x128xf32>
    %155 = vector.broadcast %28 : vector<1x128xf32> to vector<4x128xf32>
    %156 = arith.addf %154, %155 : vector<4x128xf32>
    %cst_59 = arith.constant 0.000000e+00 : f32
    %157 = vector.broadcast %cst_59 : f32 to vector<4x32xf32>
    %158 = vector.extract_strided_slice %156 {offsets = [0, 0], sizes = [1, 128], strides = [1, 1]} : vector<4x128xf32> to vector<1x128xf32>
    %cst_60 = arith.constant dense<0.000000e+00> : vector<1x128xf32>
    %159 = tpu.matmul %59, %26, %cst_60 {dimension_numbers = #tpu.dot_dimension_numbers<[1], [0], [0], [1], [0, 0, 1, 1], [], []>} : vector<1x32xf32>, vector<32x128xf32>, vector<1x128xf32> -> vector<1x128xf32>
    %160 = arith.addf %158, %159 : vector<1x128xf32>
    %161 = arith.negf %160 : vector<1x128xf32>
    %162 = math.exp %161 : vector<1x128xf32>
    %cst_61 = arith.constant 1.000000e+00 : f32
    %163 = vector.broadcast %cst_61 : f32 to vector<1x128xf32>
    %164 = arith.addf %163, %162 : vector<1x128xf32>
    %165 = arith.divf %163, %164 : vector<1x128xf32>
    %166 = math.tanh %160 : vector<1x128xf32>
    %167 = vector.extract_strided_slice %165 {offsets = [0, 0], sizes = [1, 32], strides = [1, 1]} : vector<1x128xf32> to vector<1x32xf32>
    %168 = vector.extract_strided_slice %165 {offsets = [0, 32], sizes = [1, 32], strides = [1, 1]} : vector<1x128xf32> to vector<1x32xf32>
    %169 = vector.extract_strided_slice %166 {offsets = [0, 64], sizes = [1, 32], strides = [1, 1]} : vector<1x128xf32> to vector<1x32xf32>
    %170 = vector.extract_strided_slice %165 {offsets = [0, 96], sizes = [1, 32], strides = [1, 1]} : vector<1x128xf32> to vector<1x32xf32>
    %171 = arith.mulf %168, %61 : vector<1x32xf32>
    %172 = arith.mulf %167, %169 : vector<1x32xf32>
    %173 = arith.addf %171, %172 : vector<1x32xf32>
    %174 = math.tanh %173 : vector<1x32xf32>
    %175 = arith.mulf %170, %174 : vector<1x32xf32>
    %176 = vector.broadcast %37 : vector<4x1xf32> to vector<4x32xf32>
    %177 = vector.broadcast %175 : vector<1x32xf32> to vector<4x32xf32>
    %178 = arith.mulf %176, %177 : vector<4x32xf32>
    %179 = arith.addf %157, %178 : vector<4x32xf32>
    %180 = vector.extract_strided_slice %156 {offsets = [1, 0], sizes = [1, 128], strides = [1, 1]} : vector<4x128xf32> to vector<1x128xf32>
    %cst_62 = arith.constant dense<0.000000e+00> : vector<1x128xf32>
    %181 = tpu.matmul %175, %26, %cst_62 {dimension_numbers = #tpu.dot_dimension_numbers<[1], [0], [0], [1], [0, 0, 1, 1], [], []>} : vector<1x32xf32>, vector<32x128xf32>, vector<1x128xf32> -> vector<1x128xf32>
    %182 = arith.addf %180, %181 : vector<1x128xf32>
    %183 = arith.negf %182 : vector<1x128xf32>
    %184 = math.exp %183 : vector<1x128xf32>
    %cst_63 = arith.constant 1.000000e+00 : f32
    %185 = vector.broadcast %cst_63 : f32 to vector<1x128xf32>
    %186 = arith.addf %185, %184 : vector<1x128xf32>
    %187 = arith.divf %185, %186 : vector<1x128xf32>
    %188 = math.tanh %182 : vector<1x128xf32>
    %189 = vector.extract_strided_slice %187 {offsets = [0, 0], sizes = [1, 32], strides = [1, 1]} : vector<1x128xf32> to vector<1x32xf32>
    %190 = vector.extract_strided_slice %187 {offsets = [0, 32], sizes = [1, 32], strides = [1, 1]} : vector<1x128xf32> to vector<1x32xf32>
    %191 = vector.extract_strided_slice %188 {offsets = [0, 64], sizes = [1, 32], strides = [1, 1]} : vector<1x128xf32> to vector<1x32xf32>
    %192 = vector.extract_strided_slice %187 {offsets = [0, 96], sizes = [1, 32], strides = [1, 1]} : vector<1x128xf32> to vector<1x32xf32>
    %193 = arith.mulf %190, %173 : vector<1x32xf32>
    %194 = arith.mulf %189, %191 : vector<1x32xf32>
    %195 = arith.addf %193, %194 : vector<1x32xf32>
    %196 = math.tanh %195 : vector<1x32xf32>
    %197 = arith.mulf %192, %196 : vector<1x32xf32>
    %198 = vector.broadcast %41 : vector<4x1xf32> to vector<4x32xf32>
    %199 = vector.broadcast %197 : vector<1x32xf32> to vector<4x32xf32>
    %200 = arith.mulf %198, %199 : vector<4x32xf32>
    %201 = arith.addf %179, %200 : vector<4x32xf32>
    %202 = vector.extract_strided_slice %156 {offsets = [2, 0], sizes = [1, 128], strides = [1, 1]} : vector<4x128xf32> to vector<1x128xf32>
    %cst_64 = arith.constant dense<0.000000e+00> : vector<1x128xf32>
    %203 = tpu.matmul %197, %26, %cst_64 {dimension_numbers = #tpu.dot_dimension_numbers<[1], [0], [0], [1], [0, 0, 1, 1], [], []>} : vector<1x32xf32>, vector<32x128xf32>, vector<1x128xf32> -> vector<1x128xf32>
    %204 = arith.addf %202, %203 : vector<1x128xf32>
    %205 = arith.negf %204 : vector<1x128xf32>
    %206 = math.exp %205 : vector<1x128xf32>
    %cst_65 = arith.constant 1.000000e+00 : f32
    %207 = vector.broadcast %cst_65 : f32 to vector<1x128xf32>
    %208 = arith.addf %207, %206 : vector<1x128xf32>
    %209 = arith.divf %207, %208 : vector<1x128xf32>
    %210 = math.tanh %204 : vector<1x128xf32>
    %211 = vector.extract_strided_slice %209 {offsets = [0, 0], sizes = [1, 32], strides = [1, 1]} : vector<1x128xf32> to vector<1x32xf32>
    %212 = vector.extract_strided_slice %209 {offsets = [0, 32], sizes = [1, 32], strides = [1, 1]} : vector<1x128xf32> to vector<1x32xf32>
    %213 = vector.extract_strided_slice %210 {offsets = [0, 64], sizes = [1, 32], strides = [1, 1]} : vector<1x128xf32> to vector<1x32xf32>
    %214 = vector.extract_strided_slice %209 {offsets = [0, 96], sizes = [1, 32], strides = [1, 1]} : vector<1x128xf32> to vector<1x32xf32>
    %215 = arith.mulf %212, %195 : vector<1x32xf32>
    %216 = arith.mulf %211, %213 : vector<1x32xf32>
    %217 = arith.addf %215, %216 : vector<1x32xf32>
    %218 = math.tanh %217 : vector<1x32xf32>
    %219 = arith.mulf %214, %218 : vector<1x32xf32>
    %220 = vector.broadcast %45 : vector<4x1xf32> to vector<4x32xf32>
    %221 = vector.broadcast %219 : vector<1x32xf32> to vector<4x32xf32>
    %222 = arith.mulf %220, %221 : vector<4x32xf32>
    %223 = arith.addf %201, %222 : vector<4x32xf32>
    %224 = vector.extract_strided_slice %156 {offsets = [3, 0], sizes = [1, 128], strides = [1, 1]} : vector<4x128xf32> to vector<1x128xf32>
    %cst_66 = arith.constant dense<0.000000e+00> : vector<1x128xf32>
    %225 = tpu.matmul %219, %26, %cst_66 {dimension_numbers = #tpu.dot_dimension_numbers<[1], [0], [0], [1], [0, 0, 1, 1], [], []>} : vector<1x32xf32>, vector<32x128xf32>, vector<1x128xf32> -> vector<1x128xf32>
    %226 = arith.addf %224, %225 : vector<1x128xf32>
    %227 = arith.negf %226 : vector<1x128xf32>
    %228 = math.exp %227 : vector<1x128xf32>
    %cst_67 = arith.constant 1.000000e+00 : f32
    %229 = vector.broadcast %cst_67 : f32 to vector<1x128xf32>
    %230 = arith.addf %229, %228 : vector<1x128xf32>
    %231 = arith.divf %229, %230 : vector<1x128xf32>
    %232 = math.tanh %226 : vector<1x128xf32>
    %233 = vector.extract_strided_slice %231 {offsets = [0, 0], sizes = [1, 32], strides = [1, 1]} : vector<1x128xf32> to vector<1x32xf32>
    %234 = vector.extract_strided_slice %231 {offsets = [0, 32], sizes = [1, 32], strides = [1, 1]} : vector<1x128xf32> to vector<1x32xf32>
    %235 = vector.extract_strided_slice %232 {offsets = [0, 64], sizes = [1, 32], strides = [1, 1]} : vector<1x128xf32> to vector<1x32xf32>
    %236 = vector.extract_strided_slice %231 {offsets = [0, 96], sizes = [1, 32], strides = [1, 1]} : vector<1x128xf32> to vector<1x32xf32>
    %237 = arith.mulf %234, %217 : vector<1x32xf32>
    %238 = arith.mulf %233, %235 : vector<1x32xf32>
    %239 = arith.addf %237, %238 : vector<1x32xf32>
    %240 = math.tanh %239 : vector<1x32xf32>
    %241 = arith.mulf %236, %240 : vector<1x32xf32>
    %242 = vector.broadcast %49 : vector<4x1xf32> to vector<4x32xf32>
    %243 = vector.broadcast %241 : vector<1x32xf32> to vector<4x32xf32>
    %244 = arith.mulf %242, %243 : vector<4x32xf32>
    %245 = arith.addf %223, %244 : vector<4x32xf32>
    %cst_68 = arith.constant dense<0.000000e+00> : vector<32xf32>
    %246 = vector.multi_reduction <add>, %245, %cst_68 [0] : vector<4x32xf32> to vector<32xf32>
    %247 = vector.shape_cast %246 : vector<32xf32> to vector<1x32xf32>
    %cst_69 = arith.constant 4.000000e+00 : f32
    %248 = vector.broadcast %cst_69 : f32 to vector<1x32xf32>
    %249 = arith.divf %247, %248 : vector<1x32xf32>
    %250 = vector.broadcast %249 : vector<1x32xf32> to vector<4x32xf32>
    %251 = arith.subf %245, %250 : vector<4x32xf32>
    %252 = arith.mulf %251, %251 : vector<4x32xf32>
    %cst_70 = arith.constant dense<0.000000e+00> : vector<32xf32>
    %253 = vector.multi_reduction <add>, %252, %cst_70 [0] : vector<4x32xf32> to vector<32xf32>
    %254 = vector.shape_cast %253 : vector<32xf32> to vector<1x32xf32>
    %cst_71 = arith.constant 4.000000e+00 : f32
    %255 = vector.broadcast %cst_71 : f32 to vector<1x32xf32>
    %256 = arith.divf %254, %255 : vector<1x32xf32>
    %cst_72 = arith.constant 9.99999974E-6 : f32
    %257 = vector.broadcast %cst_72 : f32 to vector<1x32xf32>
    %258 = arith.addf %256, %257 : vector<1x32xf32>
    %259 = math.rsqrt %258 : vector<1x32xf32>
    %260 = arith.mulf %29, %259 : vector<1x32xf32>
    %261 = vector.broadcast %249 : vector<1x32xf32> to vector<4x32xf32>
    %262 = arith.subf %245, %261 : vector<4x32xf32>
    %263 = vector.broadcast %260 : vector<1x32xf32> to vector<4x32xf32>
    %264 = arith.mulf %262, %263 : vector<4x32xf32>
    %265 = vector.broadcast %30 : vector<1x32xf32> to vector<4x32xf32>
    %266 = arith.addf %264, %265 : vector<4x32xf32>
    %267 = arith.mulf %266, %266 : vector<4x32xf32>
    %cst_73 = arith.constant 0.000000e+00 : f32
    %268 = vector.broadcast %cst_73 : f32 to vector<4x32xf32>
    %269 = arith.subf %268, %267 : vector<4x32xf32>
    %270 = math.exp %269 : vector<4x32xf32>
    %cst_74 = arith.constant dense<0.000000e+00> : vector<4x128xf32>
    %271 = tpu.matmul %270, %31, %cst_74 {dimension_numbers = #tpu.dot_dimension_numbers<[1], [0], [0], [1], [0, 0, 1, 1], [], []>} : vector<4x32xf32>, vector<32x128xf32>, vector<4x128xf32> -> vector<4x128xf32>
    %272 = vector.broadcast %32 : vector<1x128xf32> to vector<4x128xf32>
    %273 = arith.addf %271, %272 : vector<4x128xf32>
    %274 = vector.shape_cast %52 : vector<1x128xi1> to vector<1x128xi1>
    %275 = vector.broadcast %274 : vector<1x128xi1> to vector<4x128xi1>
    %276 = vector.broadcast %cst_45 : f32 to vector<4x128xf32>
    %277 = arith.select %275, %273, %276 : vector<4x128xi1>, vector<4x128xf32>
    %278 = vector.shape_cast %57 : vector<1x128xi1> to vector<1x128xi1>
    %279 = vector.broadcast %278 : vector<1x128xi1> to vector<4x128xi1>
    %280 = vector.broadcast %cst_45 : f32 to vector<4x128xf32>
    %281 = arith.select %279, %273, %280 : vector<4x128xi1>, vector<4x128xf32>
    %cst_75 = arith.constant dense<0xFF800000> : vector<4xf32>
    %282 = vector.multi_reduction <maximumf>, %277, %cst_75 [1] : vector<4x128xf32> to vector<4xf32>
    %283 = vector.shape_cast %282 : vector<4xf32> to vector<4x1xf32>
    %284 = vector.broadcast %283 : vector<4x1xf32> to vector<4x128xf32>
    %285 = arith.subf %277, %284 : vector<4x128xf32>
    %286 = math.exp %285 : vector<4x128xf32>
    %cst_76 = arith.constant dense<0xFF800000> : vector<4xf32>
    %287 = vector.multi_reduction <maximumf>, %281, %cst_76 [1] : vector<4x128xf32> to vector<4xf32>
    %288 = vector.shape_cast %287 : vector<4xf32> to vector<4x1xf32>
    %289 = vector.broadcast %288 : vector<4x1xf32> to vector<4x128xf32>
    %290 = arith.subf %281, %289 : vector<4x128xf32>
    %291 = math.exp %290 : vector<4x128xf32>
    %cst_77 = arith.constant dense<0.000000e+00> : vector<4xf32>
    %292 = vector.multi_reduction <add>, %286, %cst_77 [1] : vector<4x128xf32> to vector<4xf32>
    %293 = vector.shape_cast %292 : vector<4xf32> to vector<4x1xf32>
    %294 = vector.broadcast %293 : vector<4x1xf32> to vector<4x128xf32>
    %295 = arith.divf %286, %294 : vector<4x128xf32>
    %cst_78 = arith.constant dense<0.000000e+00> : vector<4xf32>
    %296 = vector.multi_reduction <add>, %291, %cst_78 [1] : vector<4x128xf32> to vector<4xf32>
    %297 = vector.shape_cast %296 : vector<4xf32> to vector<4x1xf32>
    %298 = vector.broadcast %297 : vector<4x1xf32> to vector<4x128xf32>
    %299 = arith.divf %291, %298 : vector<4x128xf32>
    %300 = arith.addf %295, %299 : vector<4x128xf32>
    %301 = arith.index_cast %c0_i32_46 : i32 to index
    %c0_79 = arith.constant 0 : index
    %c0_80 = arith.constant 0 : index
    %302 = vector.load %arg17[%301, %c0_79, %c0_80] : memref<3x4x128xf32, #tpu.memory_space<vmem>>, vector<1x4x128xf32>
    %303 = vector.shape_cast %302 : vector<1x4x128xf32> to vector<4x128xf32>
    %304 = vector.shape_cast %300 : vector<4x128xf32> to vector<1x4x128xf32>
    tpu.vector_store %arg17[%301, %c0_79, %c0_80], %304 {strides = array<i32>} : memref<3x4x128xf32, #tpu.memory_space<vmem>>, vector<1x4x128xf32>,
    %c1_i32_81 = arith.constant 1 : i32
    %305 = arith.index_cast %c1_i32_81 : i32 to index
    %c0_82 = arith.constant 0 : index
    %c0_83 = arith.constant 0 : index
    %306 = vector.load %arg20[%305, %c0_82, %c0_83] : memref<3x4x128xf32, #tpu.memory_space<vmem>>, vector<1x4x128xf32>
    %307 = vector.shape_cast %306 : vector<1x4x128xf32> to vector<4x128xf32>
    %cst_84 = arith.constant 0.000000e+00 : f32
    %308 = vector.broadcast %cst_84 : f32 to vector<4x32xf32>
    %309 = vector.extract_strided_slice %307 {offsets = [0, 0], sizes = [1, 128], strides = [1, 1]} : vector<4x128xf32> to vector<1x128xf32>
    %cst_85 = arith.constant dense<0.000000e+00> : vector<1x128xf32>
    %310 = tpu.matmul %149, %25, %cst_85 {dimension_numbers = #tpu.dot_dimension_numbers<[1], [0], [0], [1], [0, 0, 1, 1], [], []>} : vector<1x32xf32>, vector<32x128xf32>, vector<1x128xf32> -> vector<1x128xf32>
    %311 = arith.addf %309, %310 : vector<1x128xf32>
    %312 = arith.negf %311 : vector<1x128xf32>
    %313 = math.exp %312 : vector<1x128xf32>
    %cst_86 = arith.constant 1.000000e+00 : f32
    %314 = vector.broadcast %cst_86 : f32 to vector<1x128xf32>
    %315 = arith.addf %314, %313 : vector<1x128xf32>
    %316 = arith.divf %314, %315 : vector<1x128xf32>
    %317 = math.tanh %311 : vector<1x128xf32>
    %318 = vector.extract_strided_slice %316 {offsets = [0, 0], sizes = [1, 32], strides = [1, 1]} : vector<1x128xf32> to vector<1x32xf32>
    %319 = vector.extract_strided_slice %316 {offsets = [0, 32], sizes = [1, 32], strides = [1, 1]} : vector<1x128xf32> to vector<1x32xf32>
    %320 = vector.extract_strided_slice %317 {offsets = [0, 64], sizes = [1, 32], strides = [1, 1]} : vector<1x128xf32> to vector<1x32xf32>
    %321 = vector.extract_strided_slice %316 {offsets = [0, 96], sizes = [1, 32], strides = [1, 1]} : vector<1x128xf32> to vector<1x32xf32>
    %322 = arith.mulf %319, %147 : vector<1x32xf32>
    %323 = arith.mulf %318, %320 : vector<1x32xf32>
    %324 = arith.addf %322, %323 : vector<1x32xf32>
    %325 = math.tanh %324 : vector<1x32xf32>
    %326 = arith.mulf %321, %325 : vector<1x32xf32>
    %327 = vector.broadcast %37 : vector<4x1xf32> to vector<4x32xf32>
    %328 = vector.broadcast %326 : vector<1x32xf32> to vector<4x32xf32>
    %329 = arith.mulf %327, %328 : vector<4x32xf32>
    %330 = arith.addf %308, %329 : vector<4x32xf32>
    %331 = vector.extract_strided_slice %307 {offsets = [1, 0], sizes = [1, 128], strides = [1, 1]} : vector<4x128xf32> to vector<1x128xf32>
    %cst_87 = arith.constant dense<0.000000e+00> : vector<1x128xf32>
    %332 = tpu.matmul %326, %25, %cst_87 {dimension_numbers = #tpu.dot_dimension_numbers<[1], [0], [0], [1], [0, 0, 1, 1], [], []>} : vector<1x32xf32>, vector<32x128xf32>, vector<1x128xf32> -> vector<1x128xf32>
    %333 = arith.addf %331, %332 : vector<1x128xf32>
    %334 = arith.negf %333 : vector<1x128xf32>
    %335 = math.exp %334 : vector<1x128xf32>
    %cst_88 = arith.constant 1.000000e+00 : f32
    %336 = vector.broadcast %cst_88 : f32 to vector<1x128xf32>
    %337 = arith.addf %336, %335 : vector<1x128xf32>
    %338 = arith.divf %336, %337 : vector<1x128xf32>
    %339 = math.tanh %333 : vector<1x128xf32>
    %340 = vector.extract_strided_slice %338 {offsets = [0, 0], sizes = [1, 32], strides = [1, 1]} : vector<1x128xf32> to vector<1x32xf32>
    %341 = vector.extract_strided_slice %338 {offsets = [0, 32], sizes = [1, 32], strides = [1, 1]} : vector<1x128xf32> to vector<1x32xf32>
    %342 = vector.extract_strided_slice %339 {offsets = [0, 64], sizes = [1, 32], strides = [1, 1]} : vector<1x128xf32> to vector<1x32xf32>
    %343 = vector.extract_strided_slice %338 {offsets = [0, 96], sizes = [1, 32], strides = [1, 1]} : vector<1x128xf32> to vector<1x32xf32>
    %344 = arith.mulf %341, %324 : vector<1x32xf32>
    %345 = arith.mulf %340, %342 : vector<1x32xf32>
    %346 = arith.addf %344, %345 : vector<1x32xf32>
    %347 = math.tanh %346 : vector<1x32xf32>
    %348 = arith.mulf %343, %347 : vector<1x32xf32>
    %349 = vector.broadcast %41 : vector<4x1xf32> to vector<4x32xf32>
    %350 = vector.broadcast %348 : vector<1x32xf32> to vector<4x32xf32>
    %351 = arith.mulf %349, %350 : vector<4x32xf32>
    %352 = arith.addf %330, %351 : vector<4x32xf32>
    %353 = vector.extract_strided_slice %307 {offsets = [2, 0], sizes = [1, 128], strides = [1, 1]} : vector<4x128xf32> to vector<1x128xf32>
    %cst_89 = arith.constant dense<0.000000e+00> : vector<1x128xf32>
    %354 = tpu.matmul %348, %25, %cst_89 {dimension_numbers = #tpu.dot_dimension_numbers<[1], [0], [0], [1], [0, 0, 1, 1], [], []>} : vector<1x32xf32>, vector<32x128xf32>, vector<1x128xf32> -> vector<1x128xf32>
    %355 = arith.addf %353, %354 : vector<1x128xf32>
    %356 = arith.negf %355 : vector<1x128xf32>
    %357 = math.exp %356 : vector<1x128xf32>
    %cst_90 = arith.constant 1.000000e+00 : f32
    %358 = vector.broadcast %cst_90 : f32 to vector<1x128xf32>
    %359 = arith.addf %358, %357 : vector<1x128xf32>
    %360 = arith.divf %358, %359 : vector<1x128xf32>
    %361 = math.tanh %355 : vector<1x128xf32>
    %362 = vector.extract_strided_slice %360 {offsets = [0, 0], sizes = [1, 32], strides = [1, 1]} : vector<1x128xf32> to vector<1x32xf32>
    %363 = vector.extract_strided_slice %360 {offsets = [0, 32], sizes = [1, 32], strides = [1, 1]} : vector<1x128xf32> to vector<1x32xf32>
    %364 = vector.extract_strided_slice %361 {offsets = [0, 64], sizes = [1, 32], strides = [1, 1]} : vector<1x128xf32> to vector<1x32xf32>
    %365 = vector.extract_strided_slice %360 {offsets = [0, 96], sizes = [1, 32], strides = [1, 1]} : vector<1x128xf32> to vector<1x32xf32>
    %366 = arith.mulf %363, %346 : vector<1x32xf32>
    %367 = arith.mulf %362, %364 : vector<1x32xf32>
    %368 = arith.addf %366, %367 : vector<1x32xf32>
    %369 = math.tanh %368 : vector<1x32xf32>
    %370 = arith.mulf %365, %369 : vector<1x32xf32>
    %371 = vector.broadcast %45 : vector<4x1xf32> to vector<4x32xf32>
    %372 = vector.broadcast %370 : vector<1x32xf32> to vector<4x32xf32>
    %373 = arith.mulf %371, %372 : vector<4x32xf32>
    %374 = arith.addf %352, %373 : vector<4x32xf32>
    %375 = vector.extract_strided_slice %307 {offsets = [3, 0], sizes = [1, 128], strides = [1, 1]} : vector<4x128xf32> to vector<1x128xf32>
    %cst_91 = arith.constant dense<0.000000e+00> : vector<1x128xf32>
    %376 = tpu.matmul %370, %25, %cst_91 {dimension_numbers = #tpu.dot_dimension_numbers<[1], [0], [0], [1], [0, 0, 1, 1], [], []>} : vector<1x32xf32>, vector<32x128xf32>, vector<1x128xf32> -> vector<1x128xf32>
    %377 = arith.addf %375, %376 : vector<1x128xf32>
    %378 = arith.negf %377 : vector<1x128xf32>
    %379 = math.exp %378 : vector<1x128xf32>
    %cst_92 = arith.constant 1.000000e+00 : f32
    %380 = vector.broadcast %cst_92 : f32 to vector<1x128xf32>
    %381 = arith.addf %380, %379 : vector<1x128xf32>
    %382 = arith.divf %380, %381 : vector<1x128xf32>
    %383 = math.tanh %377 : vector<1x128xf32>
    %384 = vector.extract_strided_slice %382 {offsets = [0, 0], sizes = [1, 32], strides = [1, 1]} : vector<1x128xf32> to vector<1x32xf32>
    %385 = vector.extract_strided_slice %382 {offsets = [0, 32], sizes = [1, 32], strides = [1, 1]} : vector<1x128xf32> to vector<1x32xf32>
    %386 = vector.extract_strided_slice %383 {offsets = [0, 64], sizes = [1, 32], strides = [1, 1]} : vector<1x128xf32> to vector<1x32xf32>
    %387 = vector.extract_strided_slice %382 {offsets = [0, 96], sizes = [1, 32], strides = [1, 1]} : vector<1x128xf32> to vector<1x32xf32>
    %388 = arith.mulf %385, %368 : vector<1x32xf32>
    %389 = arith.mulf %384, %386 : vector<1x32xf32>
    %390 = arith.addf %388, %389 : vector<1x32xf32>
    %391 = math.tanh %390 : vector<1x32xf32>
    %392 = arith.mulf %387, %391 : vector<1x32xf32>
    %393 = vector.broadcast %49 : vector<4x1xf32> to vector<4x32xf32>
    %394 = vector.broadcast %392 : vector<1x32xf32> to vector<4x32xf32>
    %395 = arith.mulf %393, %394 : vector<4x32xf32>
    %396 = arith.addf %374, %395 : vector<4x32xf32>
    %cst_93 = arith.constant dense<0.000000e+00> : vector<4x128xf32>
    %397 = tpu.matmul %396, %27, %cst_93 {dimension_numbers = #tpu.dot_dimension_numbers<[1], [0], [0], [1], [0, 0, 1, 1], [], []>} : vector<4x32xf32>, vector<32x128xf32>, vector<4x128xf32> -> vector<4x128xf32>
    %398 = vector.broadcast %28 : vector<1x128xf32> to vector<4x128xf32>
    %399 = arith.addf %397, %398 : vector<4x128xf32>
    %cst_94 = arith.constant 0.000000e+00 : f32
    %400 = vector.broadcast %cst_94 : f32 to vector<4x32xf32>
    %401 = vector.extract_strided_slice %399 {offsets = [0, 0], sizes = [1, 128], strides = [1, 1]} : vector<4x128xf32> to vector<1x128xf32>
    %cst_95 = arith.constant dense<0.000000e+00> : vector<1x128xf32>
    %402 = tpu.matmul %241, %26, %cst_95 {dimension_numbers = #tpu.dot_dimension_numbers<[1], [0], [0], [1], [0, 0, 1, 1], [], []>} : vector<1x32xf32>, vector<32x128xf32>, vector<1x128xf32> -> vector<1x128xf32>
    %403 = arith.addf %401, %402 : vector<1x128xf32>
    %404 = arith.negf %403 : vector<1x128xf32>
    %405 = math.exp %404 : vector<1x128xf32>
    %cst_96 = arith.constant 1.000000e+00 : f32
    %406 = vector.broadcast %cst_96 : f32 to vector<1x128xf32>
    %407 = arith.addf %406, %405 : vector<1x128xf32>
    %408 = arith.divf %406, %407 : vector<1x128xf32>
    %409 = math.tanh %403 : vector<1x128xf32>
    %410 = vector.extract_strided_slice %408 {offsets = [0, 0], sizes = [1, 32], strides = [1, 1]} : vector<1x128xf32> to vector<1x32xf32>
    %411 = vector.extract_strided_slice %408 {offsets = [0, 32], sizes = [1, 32], strides = [1, 1]} : vector<1x128xf32> to vector<1x32xf32>
    %412 = vector.extract_strided_slice %409 {offsets = [0, 64], sizes = [1, 32], strides = [1, 1]} : vector<1x128xf32> to vector<1x32xf32>
    %413 = vector.extract_strided_slice %408 {offsets = [0, 96], sizes = [1, 32], strides = [1, 1]} : vector<1x128xf32> to vector<1x32xf32>
    %414 = arith.mulf %411, %239 : vector<1x32xf32>
    %415 = arith.mulf %410, %412 : vector<1x32xf32>
    %416 = arith.addf %414, %415 : vector<1x32xf32>
    %417 = math.tanh %416 : vector<1x32xf32>
    %418 = arith.mulf %413, %417 : vector<1x32xf32>
    %419 = vector.broadcast %37 : vector<4x1xf32> to vector<4x32xf32>
    %420 = vector.broadcast %418 : vector<1x32xf32> to vector<4x32xf32>
    %421 = arith.mulf %419, %420 : vector<4x32xf32>
    %422 = arith.addf %400, %421 : vector<4x32xf32>
    %423 = vector.extract_strided_slice %399 {offsets = [1, 0], sizes = [1, 128], strides = [1, 1]} : vector<4x128xf32> to vector<1x128xf32>
    %cst_97 = arith.constant dense<0.000000e+00> : vector<1x128xf32>
    %424 = tpu.matmul %418, %26, %cst_97 {dimension_numbers = #tpu.dot_dimension_numbers<[1], [0], [0], [1], [0, 0, 1, 1], [], []>} : vector<1x32xf32>, vector<32x128xf32>, vector<1x128xf32> -> vector<1x128xf32>
    %425 = arith.addf %423, %424 : vector<1x128xf32>
    %426 = arith.negf %425 : vector<1x128xf32>
    %427 = math.exp %426 : vector<1x128xf32>
    %cst_98 = arith.constant 1.000000e+00 : f32
    %428 = vector.broadcast %cst_98 : f32 to vector<1x128xf32>
    %429 = arith.addf %428, %427 : vector<1x128xf32>
    %430 = arith.divf %428, %429 : vector<1x128xf32>
    %431 = math.tanh %425 : vector<1x128xf32>
    %432 = vector.extract_strided_slice %430 {offsets = [0, 0], sizes = [1, 32], strides = [1, 1]} : vector<1x128xf32> to vector<1x32xf32>
    %433 = vector.extract_strided_slice %430 {offsets = [0, 32], sizes = [1, 32], strides = [1, 1]} : vector<1x128xf32> to vector<1x32xf32>
    %434 = vector.extract_strided_slice %431 {offsets = [0, 64], sizes = [1, 32], strides = [1, 1]} : vector<1x128xf32> to vector<1x32xf32>
    %435 = vector.extract_strided_slice %430 {offsets = [0, 96], sizes = [1, 32], strides = [1, 1]} : vector<1x128xf32> to vector<1x32xf32>
    %436 = arith.mulf %433, %416 : vector<1x32xf32>
    %437 = arith.mulf %432, %434 : vector<1x32xf32>
    %438 = arith.addf %436, %437 : vector<1x32xf32>
    %439 = math.tanh %438 : vector<1x32xf32>
    %440 = arith.mulf %435, %439 : vector<1x32xf32>
    %441 = vector.broadcast %41 : vector<4x1xf32> to vector<4x32xf32>
    %442 = vector.broadcast %440 : vector<1x32xf32> to vector<4x32xf32>
    %443 = arith.mulf %441, %442 : vector<4x32xf32>
    %444 = arith.addf %422, %443 : vector<4x32xf32>
    %445 = vector.extract_strided_slice %399 {offsets = [2, 0], sizes = [1, 128], strides = [1, 1]} : vector<4x128xf32> to vector<1x128xf32>
    %cst_99 = arith.constant dense<0.000000e+00> : vector<1x128xf32>
    %446 = tpu.matmul %440, %26, %cst_99 {dimension_numbers = #tpu.dot_dimension_numbers<[1], [0], [0], [1], [0, 0, 1, 1], [], []>} : vector<1x32xf32>, vector<32x128xf32>, vector<1x128xf32> -> vector<1x128xf32>
    %447 = arith.addf %445, %446 : vector<1x128xf32>
    %448 = arith.negf %447 : vector<1x128xf32>
    %449 = math.exp %448 : vector<1x128xf32>
    %cst_100 = arith.constant 1.000000e+00 : f32
    %450 = vector.broadcast %cst_100 : f32 to vector<1x128xf32>
    %451 = arith.addf %450, %449 : vector<1x128xf32>
    %452 = arith.divf %450, %451 : vector<1x128xf32>
    %453 = math.tanh %447 : vector<1x128xf32>
    %454 = vector.extract_strided_slice %452 {offsets = [0, 0], sizes = [1, 32], strides = [1, 1]} : vector<1x128xf32> to vector<1x32xf32>
    %455 = vector.extract_strided_slice %452 {offsets = [0, 32], sizes = [1, 32], strides = [1, 1]} : vector<1x128xf32> to vector<1x32xf32>
    %456 = vector.extract_strided_slice %453 {offsets = [0, 64], sizes = [1, 32], strides = [1, 1]} : vector<1x128xf32> to vector<1x32xf32>
    %457 = vector.extract_strided_slice %452 {offsets = [0, 96], sizes = [1, 32], strides = [1, 1]} : vector<1x128xf32> to vector<1x32xf32>
    %458 = arith.mulf %455, %438 : vector<1x32xf32>
    %459 = arith.mulf %454, %456 : vector<1x32xf32>
    %460 = arith.addf %458, %459 : vector<1x32xf32>
    %461 = math.tanh %460 : vector<1x32xf32>
    %462 = arith.mulf %457, %461 : vector<1x32xf32>
    %463 = vector.broadcast %45 : vector<4x1xf32> to vector<4x32xf32>
    %464 = vector.broadcast %462 : vector<1x32xf32> to vector<4x32xf32>
    %465 = arith.mulf %463, %464 : vector<4x32xf32>
    %466 = arith.addf %444, %465 : vector<4x32xf32>
    %467 = vector.extract_strided_slice %399 {offsets = [3, 0], sizes = [1, 128], strides = [1, 1]} : vector<4x128xf32> to vector<1x128xf32>
    %cst_101 = arith.constant dense<0.000000e+00> : vector<1x128xf32>
    %468 = tpu.matmul %462, %26, %cst_101 {dimension_numbers = #tpu.dot_dimension_numbers<[1], [0], [0], [1], [0, 0, 1, 1], [], []>} : vector<1x32xf32>, vector<32x128xf32>, vector<1x128xf32> -> vector<1x128xf32>
    %469 = arith.addf %467, %468 : vector<1x128xf32>
    %470 = arith.negf %469 : vector<1x128xf32>
    %471 = math.exp %470 : vector<1x128xf32>
    %cst_102 = arith.constant 1.000000e+00 : f32
    %472 = vector.broadcast %cst_102 : f32 to vector<1x128xf32>
    %473 = arith.addf %472, %471 : vector<1x128xf32>
    %474 = arith.divf %472, %473 : vector<1x128xf32>
    %475 = math.tanh %469 : vector<1x128xf32>
    %476 = vector.extract_strided_slice %474 {offsets = [0, 0], sizes = [1, 32], strides = [1, 1]} : vector<1x128xf32> to vector<1x32xf32>
    %477 = vector.extract_strided_slice %474 {offsets = [0, 32], sizes = [1, 32], strides = [1, 1]} : vector<1x128xf32> to vector<1x32xf32>
    %478 = vector.extract_strided_slice %475 {offsets = [0, 64], sizes = [1, 32], strides = [1, 1]} : vector<1x128xf32> to vector<1x32xf32>
    %479 = vector.extract_strided_slice %474 {offsets = [0, 96], sizes = [1, 32], strides = [1, 1]} : vector<1x128xf32> to vector<1x32xf32>
    %480 = arith.mulf %477, %460 : vector<1x32xf32>
    %481 = arith.mulf %476, %478 : vector<1x32xf32>
    %482 = arith.addf %480, %481 : vector<1x32xf32>
    %483 = math.tanh %482 : vector<1x32xf32>
    %484 = arith.mulf %479, %483 : vector<1x32xf32>
    %485 = vector.broadcast %49 : vector<4x1xf32> to vector<4x32xf32>
    %486 = vector.broadcast %484 : vector<1x32xf32> to vector<4x32xf32>
    %487 = arith.mulf %485, %486 : vector<4x32xf32>
    %488 = arith.addf %466, %487 : vector<4x32xf32>
    %cst_103 = arith.constant dense<0.000000e+00> : vector<32xf32>
    %489 = vector.multi_reduction <add>, %488, %cst_103 [0] : vector<4x32xf32> to vector<32xf32>
    %490 = vector.shape_cast %489 : vector<32xf32> to vector<1x32xf32>
    %cst_104 = arith.constant 4.000000e+00 : f32
    %491 = vector.broadcast %cst_104 : f32 to vector<1x32xf32>
    %492 = arith.divf %490, %491 : vector<1x32xf32>
    %493 = vector.broadcast %492 : vector<1x32xf32> to vector<4x32xf32>
    %494 = arith.subf %488, %493 : vector<4x32xf32>
    %495 = arith.mulf %494, %494 : vector<4x32xf32>
    %cst_105 = arith.constant dense<0.000000e+00> : vector<32xf32>
    %496 = vector.multi_reduction <add>, %495, %cst_105 [0] : vector<4x32xf32> to vector<32xf32>
    %497 = vector.shape_cast %496 : vector<32xf32> to vector<1x32xf32>
    %cst_106 = arith.constant 4.000000e+00 : f32
    %498 = vector.broadcast %cst_106 : f32 to vector<1x32xf32>
    %499 = arith.divf %497, %498 : vector<1x32xf32>
    %cst_107 = arith.constant 9.99999974E-6 : f32
    %500 = vector.broadcast %cst_107 : f32 to vector<1x32xf32>
    %501 = arith.addf %499, %500 : vector<1x32xf32>
    %502 = math.rsqrt %501 : vector<1x32xf32>
    %503 = arith.mulf %29, %502 : vector<1x32xf32>
    %504 = vector.broadcast %492 : vector<1x32xf32> to vector<4x32xf32>
    %505 = arith.subf %488, %504 : vector<4x32xf32>
    %506 = vector.broadcast %503 : vector<1x32xf32> to vector<4x32xf32>
    %507 = arith.mulf %505, %506 : vector<4x32xf32>
    %508 = vector.broadcast %30 : vector<1x32xf32> to vector<4x32xf32>
    %509 = arith.addf %507, %508 : vector<4x32xf32>
    %510 = arith.mulf %509, %509 : vector<4x32xf32>
    %cst_108 = arith.constant 0.000000e+00 : f32
    %511 = vector.broadcast %cst_108 : f32 to vector<4x32xf32>
    %512 = arith.subf %511, %510 : vector<4x32xf32>
    %513 = math.exp %512 : vector<4x32xf32>
    %cst_109 = arith.constant dense<0.000000e+00> : vector<4x128xf32>
    %514 = tpu.matmul %513, %31, %cst_109 {dimension_numbers = #tpu.dot_dimension_numbers<[1], [0], [0], [1], [0, 0, 1, 1], [], []>} : vector<4x32xf32>, vector<32x128xf32>, vector<4x128xf32> -> vector<4x128xf32>
    %515 = vector.broadcast %32 : vector<1x128xf32> to vector<4x128xf32>
    %516 = arith.addf %514, %515 : vector<4x128xf32>
    %517 = vector.shape_cast %52 : vector<1x128xi1> to vector<1x128xi1>
    %518 = vector.broadcast %517 : vector<1x128xi1> to vector<4x128xi1>
    %519 = vector.broadcast %cst_45 : f32 to vector<4x128xf32>
    %520 = arith.select %518, %516, %519 : vector<4x128xi1>, vector<4x128xf32>
    %521 = vector.shape_cast %57 : vector<1x128xi1> to vector<1x128xi1>
    %522 = vector.broadcast %521 : vector<1x128xi1> to vector<4x128xi1>
    %523 = vector.broadcast %cst_45 : f32 to vector<4x128xf32>
    %524 = arith.select %522, %516, %523 : vector<4x128xi1>, vector<4x128xf32>
    %cst_110 = arith.constant dense<0xFF800000> : vector<4xf32>
    %525 = vector.multi_reduction <maximumf>, %520, %cst_110 [1] : vector<4x128xf32> to vector<4xf32>
    %526 = vector.shape_cast %525 : vector<4xf32> to vector<4x1xf32>
    %527 = vector.broadcast %526 : vector<4x1xf32> to vector<4x128xf32>
    %528 = arith.subf %520, %527 : vector<4x128xf32>
    %529 = math.exp %528 : vector<4x128xf32>
    %cst_111 = arith.constant dense<0xFF800000> : vector<4xf32>
    %530 = vector.multi_reduction <maximumf>, %524, %cst_111 [1] : vector<4x128xf32> to vector<4xf32>
    %531 = vector.shape_cast %530 : vector<4xf32> to vector<4x1xf32>
    %532 = vector.broadcast %531 : vector<4x1xf32> to vector<4x128xf32>
    %533 = arith.subf %524, %532 : vector<4x128xf32>
    %534 = math.exp %533 : vector<4x128xf32>
    %cst_112 = arith.constant dense<0.000000e+00> : vector<4xf32>
    %535 = vector.multi_reduction <add>, %529, %cst_112 [1] : vector<4x128xf32> to vector<4xf32>
    %536 = vector.shape_cast %535 : vector<4xf32> to vector<4x1xf32>
    %537 = vector.broadcast %536 : vector<4x1xf32> to vector<4x128xf32>
    %538 = arith.divf %529, %537 : vector<4x128xf32>
    %cst_113 = arith.constant dense<0.000000e+00> : vector<4xf32>
    %539 = vector.multi_reduction <add>, %534, %cst_113 [1] : vector<4x128xf32> to vector<4xf32>
    %540 = vector.shape_cast %539 : vector<4xf32> to vector<4x1xf32>
    %541 = vector.broadcast %540 : vector<4x1xf32> to vector<4x128xf32>
    %542 = arith.divf %534, %541 : vector<4x128xf32>
    %543 = arith.addf %538, %542 : vector<4x128xf32>
    %544 = arith.index_cast %c1_i32_81 : i32 to index
    %c0_114 = arith.constant 0 : index
    %c0_115 = arith.constant 0 : index
    %545 = vector.load %arg17[%544, %c0_114, %c0_115] : memref<3x4x128xf32, #tpu.memory_space<vmem>>, vector<1x4x128xf32>
    %546 = vector.shape_cast %545 : vector<1x4x128xf32> to vector<4x128xf32>
    %547 = vector.shape_cast %543 : vector<4x128xf32> to vector<1x4x128xf32>
    tpu.vector_store %arg17[%544, %c0_114, %c0_115], %547 {strides = array<i32>} : memref<3x4x128xf32, #tpu.memory_space<vmem>>, vector<1x4x128xf32>,
    %c2_i32_116 = arith.constant 2 : i32
    %548 = arith.index_cast %c2_i32_116 : i32 to index
    %c0_117 = arith.constant 0 : index
    %c0_118 = arith.constant 0 : index
    %549 = vector.load %arg20[%548, %c0_117, %c0_118] : memref<3x4x128xf32, #tpu.memory_space<vmem>>, vector<1x4x128xf32>
    %550 = vector.shape_cast %549 : vector<1x4x128xf32> to vector<4x128xf32>
    %cst_119 = arith.constant 0.000000e+00 : f32
    %551 = vector.broadcast %cst_119 : f32 to vector<4x32xf32>
    %552 = vector.extract_strided_slice %550 {offsets = [0, 0], sizes = [1, 128], strides = [1, 1]} : vector<4x128xf32> to vector<1x128xf32>
    %cst_120 = arith.constant dense<0.000000e+00> : vector<1x128xf32>
    %553 = tpu.matmul %392, %25, %cst_120 {dimension_numbers = #tpu.dot_dimension_numbers<[1], [0], [0], [1], [0, 0, 1, 1], [], []>} : vector<1x32xf32>, vector<32x128xf32>, vector<1x128xf32> -> vector<1x128xf32>
    %554 = arith.addf %552, %553 : vector<1x128xf32>
    %555 = arith.negf %554 : vector<1x128xf32>
    %556 = math.exp %555 : vector<1x128xf32>
    %cst_121 = arith.constant 1.000000e+00 : f32
    %557 = vector.broadcast %cst_121 : f32 to vector<1x128xf32>
    %558 = arith.addf %557, %556 : vector<1x128xf32>
    %559 = arith.divf %557, %558 : vector<1x128xf32>
    %560 = math.tanh %554 : vector<1x128xf32>
    %561 = vector.extract_strided_slice %559 {offsets = [0, 0], sizes = [1, 32], strides = [1, 1]} : vector<1x128xf32> to vector<1x32xf32>
    %562 = vector.extract_strided_slice %559 {offsets = [0, 32], sizes = [1, 32], strides = [1, 1]} : vector<1x128xf32> to vector<1x32xf32>
    %563 = vector.extract_strided_slice %560 {offsets = [0, 64], sizes = [1, 32], strides = [1, 1]} : vector<1x128xf32> to vector<1x32xf32>
    %564 = vector.extract_strided_slice %559 {offsets = [0, 96], sizes = [1, 32], strides = [1, 1]} : vector<1x128xf32> to vector<1x32xf32>
    %565 = arith.mulf %562, %390 : vector<1x32xf32>
    %566 = arith.mulf %561, %563 : vector<1x32xf32>
    %567 = arith.addf %565, %566 : vector<1x32xf32>
    %568 = math.tanh %567 : vector<1x32xf32>
    %569 = arith.mulf %564, %568 : vector<1x32xf32>
    %570 = vector.broadcast %37 : vector<4x1xf32> to vector<4x32xf32>
    %571 = vector.broadcast %569 : vector<1x32xf32> to vector<4x32xf32>
    %572 = arith.mulf %570, %571 : vector<4x32xf32>
    %573 = arith.addf %551, %572 : vector<4x32xf32>
    %574 = vector.extract_strided_slice %550 {offsets = [1, 0], sizes = [1, 128], strides = [1, 1]} : vector<4x128xf32> to vector<1x128xf32>
    %cst_122 = arith.constant dense<0.000000e+00> : vector<1x128xf32>
    %575 = tpu.matmul %569, %25, %cst_122 {dimension_numbers = #tpu.dot_dimension_numbers<[1], [0], [0], [1], [0, 0, 1, 1], [], []>} : vector<1x32xf32>, vector<32x128xf32>, vector<1x128xf32> -> vector<1x128xf32>
    %576 = arith.addf %574, %575 : vector<1x128xf32>
    %577 = arith.negf %576 : vector<1x128xf32>
    %578 = math.exp %577 : vector<1x128xf32>
    %cst_123 = arith.constant 1.000000e+00 : f32
    %579 = vector.broadcast %cst_123 : f32 to vector<1x128xf32>
    %580 = arith.addf %579, %578 : vector<1x128xf32>
    %581 = arith.divf %579, %580 : vector<1x128xf32>
    %582 = math.tanh %576 : vector<1x128xf32>
    %583 = vector.extract_strided_slice %581 {offsets = [0, 0], sizes = [1, 32], strides = [1, 1]} : vector<1x128xf32> to vector<1x32xf32>
    %584 = vector.extract_strided_slice %581 {offsets = [0, 32], sizes = [1, 32], strides = [1, 1]} : vector<1x128xf32> to vector<1x32xf32>
    %585 = vector.extract_strided_slice %582 {offsets = [0, 64], sizes = [1, 32], strides = [1, 1]} : vector<1x128xf32> to vector<1x32xf32>
    %586 = vector.extract_strided_slice %581 {offsets = [0, 96], sizes = [1, 32], strides = [1, 1]} : vector<1x128xf32> to vector<1x32xf32>
    %587 = arith.mulf %584, %567 : vector<1x32xf32>
    %588 = arith.mulf %583, %585 : vector<1x32xf32>
    %589 = arith.addf %587, %588 : vector<1x32xf32>
    %590 = math.tanh %589 : vector<1x32xf32>
    %591 = arith.mulf %586, %590 : vector<1x32xf32>
    %592 = vector.broadcast %41 : vector<4x1xf32> to vector<4x32xf32>
    %593 = vector.broadcast %591 : vector<1x32xf32> to vector<4x32xf32>
    %594 = arith.mulf %592, %593 : vector<4x32xf32>
    %595 = arith.addf %573, %594 : vector<4x32xf32>
    %596 = vector.extract_strided_slice %550 {offsets = [2, 0], sizes = [1, 128], strides = [1, 1]} : vector<4x128xf32> to vector<1x128xf32>
    %cst_124 = arith.constant dense<0.000000e+00> : vector<1x128xf32>
    %597 = tpu.matmul %591, %25, %cst_124 {dimension_numbers = #tpu.dot_dimension_numbers<[1], [0], [0], [1], [0, 0, 1, 1], [], []>} : vector<1x32xf32>, vector<32x128xf32>, vector<1x128xf32> -> vector<1x128xf32>
    %598 = arith.addf %596, %597 : vector<1x128xf32>
    %599 = arith.negf %598 : vector<1x128xf32>
    %600 = math.exp %599 : vector<1x128xf32>
    %cst_125 = arith.constant 1.000000e+00 : f32
    %601 = vector.broadcast %cst_125 : f32 to vector<1x128xf32>
    %602 = arith.addf %601, %600 : vector<1x128xf32>
    %603 = arith.divf %601, %602 : vector<1x128xf32>
    %604 = math.tanh %598 : vector<1x128xf32>
    %605 = vector.extract_strided_slice %603 {offsets = [0, 0], sizes = [1, 32], strides = [1, 1]} : vector<1x128xf32> to vector<1x32xf32>
    %606 = vector.extract_strided_slice %603 {offsets = [0, 32], sizes = [1, 32], strides = [1, 1]} : vector<1x128xf32> to vector<1x32xf32>
    %607 = vector.extract_strided_slice %604 {offsets = [0, 64], sizes = [1, 32], strides = [1, 1]} : vector<1x128xf32> to vector<1x32xf32>
    %608 = vector.extract_strided_slice %603 {offsets = [0, 96], sizes = [1, 32], strides = [1, 1]} : vector<1x128xf32> to vector<1x32xf32>
    %609 = arith.mulf %606, %589 : vector<1x32xf32>
    %610 = arith.mulf %605, %607 : vector<1x32xf32>
    %611 = arith.addf %609, %610 : vector<1x32xf32>
    %612 = math.tanh %611 : vector<1x32xf32>
    %613 = arith.mulf %608, %612 : vector<1x32xf32>
    %614 = vector.broadcast %45 : vector<4x1xf32> to vector<4x32xf32>
    %615 = vector.broadcast %613 : vector<1x32xf32> to vector<4x32xf32>
    %616 = arith.mulf %614, %615 : vector<4x32xf32>
    %617 = arith.addf %595, %616 : vector<4x32xf32>
    %618 = vector.extract_strided_slice %550 {offsets = [3, 0], sizes = [1, 128], strides = [1, 1]} : vector<4x128xf32> to vector<1x128xf32>
    %cst_126 = arith.constant dense<0.000000e+00> : vector<1x128xf32>
    %619 = tpu.matmul %613, %25, %cst_126 {dimension_numbers = #tpu.dot_dimension_numbers<[1], [0], [0], [1], [0, 0, 1, 1], [], []>} : vector<1x32xf32>, vector<32x128xf32>, vector<1x128xf32> -> vector<1x128xf32>
    %620 = arith.addf %618, %619 : vector<1x128xf32>
    %621 = arith.negf %620 : vector<1x128xf32>
    %622 = math.exp %621 : vector<1x128xf32>
    %cst_127 = arith.constant 1.000000e+00 : f32
    %623 = vector.broadcast %cst_127 : f32 to vector<1x128xf32>
    %624 = arith.addf %623, %622 : vector<1x128xf32>
    %625 = arith.divf %623, %624 : vector<1x128xf32>
    %626 = math.tanh %620 : vector<1x128xf32>
    %627 = vector.extract_strided_slice %625 {offsets = [0, 0], sizes = [1, 32], strides = [1, 1]} : vector<1x128xf32> to vector<1x32xf32>
    %628 = vector.extract_strided_slice %625 {offsets = [0, 32], sizes = [1, 32], strides = [1, 1]} : vector<1x128xf32> to vector<1x32xf32>
    %629 = vector.extract_strided_slice %626 {offsets = [0, 64], sizes = [1, 32], strides = [1, 1]} : vector<1x128xf32> to vector<1x32xf32>
    %630 = vector.extract_strided_slice %625 {offsets = [0, 96], sizes = [1, 32], strides = [1, 1]} : vector<1x128xf32> to vector<1x32xf32>
    %631 = arith.mulf %628, %611 : vector<1x32xf32>
    %632 = arith.mulf %627, %629 : vector<1x32xf32>
    %633 = arith.addf %631, %632 : vector<1x32xf32>
    %634 = math.tanh %633 : vector<1x32xf32>
    %635 = arith.mulf %630, %634 : vector<1x32xf32>
    %636 = vector.broadcast %49 : vector<4x1xf32> to vector<4x32xf32>
    %637 = vector.broadcast %635 : vector<1x32xf32> to vector<4x32xf32>
    %638 = arith.mulf %636, %637 : vector<4x32xf32>
    %639 = arith.addf %617, %638 : vector<4x32xf32>
    %cst_128 = arith.constant dense<0.000000e+00> : vector<4x128xf32>
    %640 = tpu.matmul %639, %27, %cst_128 {dimension_numbers = #tpu.dot_dimension_numbers<[1], [0], [0], [1], [0, 0, 1, 1], [], []>} : vector<4x32xf32>, vector<32x128xf32>, vector<4x128xf32> -> vector<4x128xf32>
    %641 = vector.broadcast %28 : vector<1x128xf32> to vector<4x128xf32>
    %642 = arith.addf %640, %641 : vector<4x128xf32>
    %cst_129 = arith.constant 0.000000e+00 : f32
    %643 = vector.broadcast %cst_129 : f32 to vector<4x32xf32>
    %644 = vector.extract_strided_slice %642 {offsets = [0, 0], sizes = [1, 128], strides = [1, 1]} : vector<4x128xf32> to vector<1x128xf32>
    %cst_130 = arith.constant dense<0.000000e+00> : vector<1x128xf32>
    %645 = tpu.matmul %484, %26, %cst_130 {dimension_numbers = #tpu.dot_dimension_numbers<[1], [0], [0], [1], [0, 0, 1, 1], [], []>} : vector<1x32xf32>, vector<32x128xf32>, vector<1x128xf32> -> vector<1x128xf32>
    %646 = arith.addf %644, %645 : vector<1x128xf32>
    %647 = arith.negf %646 : vector<1x128xf32>
    %648 = math.exp %647 : vector<1x128xf32>
    %cst_131 = arith.constant 1.000000e+00 : f32
    %649 = vector.broadcast %cst_131 : f32 to vector<1x128xf32>
    %650 = arith.addf %649, %648 : vector<1x128xf32>
    %651 = arith.divf %649, %650 : vector<1x128xf32>
    %652 = math.tanh %646 : vector<1x128xf32>
    %653 = vector.extract_strided_slice %651 {offsets = [0, 0], sizes = [1, 32], strides = [1, 1]} : vector<1x128xf32> to vector<1x32xf32>
    %654 = vector.extract_strided_slice %651 {offsets = [0, 32], sizes = [1, 32], strides = [1, 1]} : vector<1x128xf32> to vector<1x32xf32>
    %655 = vector.extract_strided_slice %652 {offsets = [0, 64], sizes = [1, 32], strides = [1, 1]} : vector<1x128xf32> to vector<1x32xf32>
    %656 = vector.extract_strided_slice %651 {offsets = [0, 96], sizes = [1, 32], strides = [1, 1]} : vector<1x128xf32> to vector<1x32xf32>
    %657 = arith.mulf %654, %482 : vector<1x32xf32>
    %658 = arith.mulf %653, %655 : vector<1x32xf32>
    %659 = arith.addf %657, %658 : vector<1x32xf32>
    %660 = math.tanh %659 : vector<1x32xf32>
    %661 = arith.mulf %656, %660 : vector<1x32xf32>
    %662 = vector.broadcast %37 : vector<4x1xf32> to vector<4x32xf32>
    %663 = vector.broadcast %661 : vector<1x32xf32> to vector<4x32xf32>
    %664 = arith.mulf %662, %663 : vector<4x32xf32>
    %665 = arith.addf %643, %664 : vector<4x32xf32>
    %666 = vector.extract_strided_slice %642 {offsets = [1, 0], sizes = [1, 128], strides = [1, 1]} : vector<4x128xf32> to vector<1x128xf32>
    %cst_132 = arith.constant dense<0.000000e+00> : vector<1x128xf32>
    %667 = tpu.matmul %661, %26, %cst_132 {dimension_numbers = #tpu.dot_dimension_numbers<[1], [0], [0], [1], [0, 0, 1, 1], [], []>} : vector<1x32xf32>, vector<32x128xf32>, vector<1x128xf32> -> vector<1x128xf32>
    %668 = arith.addf %666, %667 : vector<1x128xf32>
    %669 = arith.negf %668 : vector<1x128xf32>
    %670 = math.exp %669 : vector<1x128xf32>
    %cst_133 = arith.constant 1.000000e+00 : f32
    %671 = vector.broadcast %cst_133 : f32 to vector<1x128xf32>
    %672 = arith.addf %671, %670 : vector<1x128xf32>
    %673 = arith.divf %671, %672 : vector<1x128xf32>
    %674 = math.tanh %668 : vector<1x128xf32>
    %675 = vector.extract_strided_slice %673 {offsets = [0, 0], sizes = [1, 32], strides = [1, 1]} : vector<1x128xf32> to vector<1x32xf32>
    %676 = vector.extract_strided_slice %673 {offsets = [0, 32], sizes = [1, 32], strides = [1, 1]} : vector<1x128xf32> to vector<1x32xf32>
    %677 = vector.extract_strided_slice %674 {offsets = [0, 64], sizes = [1, 32], strides = [1, 1]} : vector<1x128xf32> to vector<1x32xf32>
    %678 = vector.extract_strided_slice %673 {offsets = [0, 96], sizes = [1, 32], strides = [1, 1]} : vector<1x128xf32> to vector<1x32xf32>
    %679 = arith.mulf %676, %659 : vector<1x32xf32>
    %680 = arith.mulf %675, %677 : vector<1x32xf32>
    %681 = arith.addf %679, %680 : vector<1x32xf32>
    %682 = math.tanh %681 : vector<1x32xf32>
    %683 = arith.mulf %678, %682 : vector<1x32xf32>
    %684 = vector.broadcast %41 : vector<4x1xf32> to vector<4x32xf32>
    %685 = vector.broadcast %683 : vector<1x32xf32> to vector<4x32xf32>
    %686 = arith.mulf %684, %685 : vector<4x32xf32>
    %687 = arith.addf %665, %686 : vector<4x32xf32>
    %688 = vector.extract_strided_slice %642 {offsets = [2, 0], sizes = [1, 128], strides = [1, 1]} : vector<4x128xf32> to vector<1x128xf32>
    %cst_134 = arith.constant dense<0.000000e+00> : vector<1x128xf32>
    %689 = tpu.matmul %683, %26, %cst_134 {dimension_numbers = #tpu.dot_dimension_numbers<[1], [0], [0], [1], [0, 0, 1, 1], [], []>} : vector<1x32xf32>, vector<32x128xf32>, vector<1x128xf32> -> vector<1x128xf32>
    %690 = arith.addf %688, %689 : vector<1x128xf32>
    %691 = arith.negf %690 : vector<1x128xf32>
    %692 = math.exp %691 : vector<1x128xf32>
    %cst_135 = arith.constant 1.000000e+00 : f32
    %693 = vector.broadcast %cst_135 : f32 to vector<1x128xf32>
    %694 = arith.addf %693, %692 : vector<1x128xf32>
    %695 = arith.divf %693, %694 : vector<1x128xf32>
    %696 = math.tanh %690 : vector<1x128xf32>
    %697 = vector.extract_strided_slice %695 {offsets = [0, 0], sizes = [1, 32], strides = [1, 1]} : vector<1x128xf32> to vector<1x32xf32>
    %698 = vector.extract_strided_slice %695 {offsets = [0, 32], sizes = [1, 32], strides = [1, 1]} : vector<1x128xf32> to vector<1x32xf32>
    %699 = vector.extract_strided_slice %696 {offsets = [0, 64], sizes = [1, 32], strides = [1, 1]} : vector<1x128xf32> to vector<1x32xf32>
    %700 = vector.extract_strided_slice %695 {offsets = [0, 96], sizes = [1, 32], strides = [1, 1]} : vector<1x128xf32> to vector<1x32xf32>
    %701 = arith.mulf %698, %681 : vector<1x32xf32>
    %702 = arith.mulf %697, %699 : vector<1x32xf32>
    %703 = arith.addf %701, %702 : vector<1x32xf32>
    %704 = math.tanh %703 : vector<1x32xf32>
    %705 = arith.mulf %700, %704 : vector<1x32xf32>
    %706 = vector.broadcast %45 : vector<4x1xf32> to vector<4x32xf32>
    %707 = vector.broadcast %705 : vector<1x32xf32> to vector<4x32xf32>
    %708 = arith.mulf %706, %707 : vector<4x32xf32>
    %709 = arith.addf %687, %708 : vector<4x32xf32>
    %710 = vector.extract_strided_slice %642 {offsets = [3, 0], sizes = [1, 128], strides = [1, 1]} : vector<4x128xf32> to vector<1x128xf32>
    %cst_136 = arith.constant dense<0.000000e+00> : vector<1x128xf32>
    %711 = tpu.matmul %705, %26, %cst_136 {dimension_numbers = #tpu.dot_dimension_numbers<[1], [0], [0], [1], [0, 0, 1, 1], [], []>} : vector<1x32xf32>, vector<32x128xf32>, vector<1x128xf32> -> vector<1x128xf32>
    %712 = arith.addf %710, %711 : vector<1x128xf32>
    %713 = arith.negf %712 : vector<1x128xf32>
    %714 = math.exp %713 : vector<1x128xf32>
    %cst_137 = arith.constant 1.000000e+00 : f32
    %715 = vector.broadcast %cst_137 : f32 to vector<1x128xf32>
    %716 = arith.addf %715, %714 : vector<1x128xf32>
    %717 = arith.divf %715, %716 : vector<1x128xf32>
    %718 = math.tanh %712 : vector<1x128xf32>
    %719 = vector.extract_strided_slice %717 {offsets = [0, 0], sizes = [1, 32], strides = [1, 1]} : vector<1x128xf32> to vector<1x32xf32>
    %720 = vector.extract_strided_slice %717 {offsets = [0, 32], sizes = [1, 32], strides = [1, 1]} : vector<1x128xf32> to vector<1x32xf32>
    %721 = vector.extract_strided_slice %718 {offsets = [0, 64], sizes = [1, 32], strides = [1, 1]} : vector<1x128xf32> to vector<1x32xf32>
    %722 = vector.extract_strided_slice %717 {offsets = [0, 96], sizes = [1, 32], strides = [1, 1]} : vector<1x128xf32> to vector<1x32xf32>
    %723 = arith.mulf %720, %703 : vector<1x32xf32>
    %724 = arith.mulf %719, %721 : vector<1x32xf32>
    %725 = arith.addf %723, %724 : vector<1x32xf32>
    %726 = math.tanh %725 : vector<1x32xf32>
    %727 = arith.mulf %722, %726 : vector<1x32xf32>
    %728 = vector.broadcast %49 : vector<4x1xf32> to vector<4x32xf32>
    %729 = vector.broadcast %727 : vector<1x32xf32> to vector<4x32xf32>
    %730 = arith.mulf %728, %729 : vector<4x32xf32>
    %731 = arith.addf %709, %730 : vector<4x32xf32>
    %cst_138 = arith.constant dense<0.000000e+00> : vector<32xf32>
    %732 = vector.multi_reduction <add>, %731, %cst_138 [0] : vector<4x32xf32> to vector<32xf32>
    %733 = vector.shape_cast %732 : vector<32xf32> to vector<1x32xf32>
    %cst_139 = arith.constant 4.000000e+00 : f32
    %734 = vector.broadcast %cst_139 : f32 to vector<1x32xf32>
    %735 = arith.divf %733, %734 : vector<1x32xf32>
    %736 = vector.broadcast %735 : vector<1x32xf32> to vector<4x32xf32>
    %737 = arith.subf %731, %736 : vector<4x32xf32>
    %738 = arith.mulf %737, %737 : vector<4x32xf32>
    %cst_140 = arith.constant dense<0.000000e+00> : vector<32xf32>
    %739 = vector.multi_reduction <add>, %738, %cst_140 [0] : vector<4x32xf32> to vector<32xf32>
    %740 = vector.shape_cast %739 : vector<32xf32> to vector<1x32xf32>
    %cst_141 = arith.constant 4.000000e+00 : f32
    %741 = vector.broadcast %cst_141 : f32 to vector<1x32xf32>
    %742 = arith.divf %740, %741 : vector<1x32xf32>
    %cst_142 = arith.constant 9.99999974E-6 : f32
    %743 = vector.broadcast %cst_142 : f32 to vector<1x32xf32>
    %744 = arith.addf %742, %743 : vector<1x32xf32>
    %745 = math.rsqrt %744 : vector<1x32xf32>
    %746 = arith.mulf %29, %745 : vector<1x32xf32>
    %747 = vector.broadcast %735 : vector<1x32xf32> to vector<4x32xf32>
    %748 = arith.subf %731, %747 : vector<4x32xf32>
    %749 = vector.broadcast %746 : vector<1x32xf32> to vector<4x32xf32>
    %750 = arith.mulf %748, %749 : vector<4x32xf32>
    %751 = vector.broadcast %30 : vector<1x32xf32> to vector<4x32xf32>
    %752 = arith.addf %750, %751 : vector<4x32xf32>
    %753 = arith.mulf %752, %752 : vector<4x32xf32>
    %cst_143 = arith.constant 0.000000e+00 : f32
    %754 = vector.broadcast %cst_143 : f32 to vector<4x32xf32>
    %755 = arith.subf %754, %753 : vector<4x32xf32>
    %756 = math.exp %755 : vector<4x32xf32>
    %cst_144 = arith.constant dense<0.000000e+00> : vector<4x128xf32>
    %757 = tpu.matmul %756, %31, %cst_144 {dimension_numbers = #tpu.dot_dimension_numbers<[1], [0], [0], [1], [0, 0, 1, 1], [], []>} : vector<4x32xf32>, vector<32x128xf32>, vector<4x128xf32> -> vector<4x128xf32>
    %758 = vector.broadcast %32 : vector<1x128xf32> to vector<4x128xf32>
    %759 = arith.addf %757, %758 : vector<4x128xf32>
    %760 = vector.shape_cast %52 : vector<1x128xi1> to vector<1x128xi1>
    %761 = vector.broadcast %760 : vector<1x128xi1> to vector<4x128xi1>
    %762 = vector.broadcast %cst_45 : f32 to vector<4x128xf32>
    %763 = arith.select %761, %759, %762 : vector<4x128xi1>, vector<4x128xf32>
    %764 = vector.shape_cast %57 : vector<1x128xi1> to vector<1x128xi1>
    %765 = vector.broadcast %764 : vector<1x128xi1> to vector<4x128xi1>
    %766 = vector.broadcast %cst_45 : f32 to vector<4x128xf32>
    %767 = arith.select %765, %759, %766 : vector<4x128xi1>, vector<4x128xf32>
    %cst_145 = arith.constant dense<0xFF800000> : vector<4xf32>
    %768 = vector.multi_reduction <maximumf>, %763, %cst_145 [1] : vector<4x128xf32> to vector<4xf32>
    %769 = vector.shape_cast %768 : vector<4xf32> to vector<4x1xf32>
    %770 = vector.broadcast %769 : vector<4x1xf32> to vector<4x128xf32>
    %771 = arith.subf %763, %770 : vector<4x128xf32>
    %772 = math.exp %771 : vector<4x128xf32>
    %cst_146 = arith.constant dense<0xFF800000> : vector<4xf32>
    %773 = vector.multi_reduction <maximumf>, %767, %cst_146 [1] : vector<4x128xf32> to vector<4xf32>
    %774 = vector.shape_cast %773 : vector<4xf32> to vector<4x1xf32>
    %775 = vector.broadcast %774 : vector<4x1xf32> to vector<4x128xf32>
    %776 = arith.subf %767, %775 : vector<4x128xf32>
    %777 = math.exp %776 : vector<4x128xf32>
    %cst_147 = arith.constant dense<0.000000e+00> : vector<4xf32>
    %778 = vector.multi_reduction <add>, %772, %cst_147 [1] : vector<4x128xf32> to vector<4xf32>
    %779 = vector.shape_cast %778 : vector<4xf32> to vector<4x1xf32>
    %780 = vector.broadcast %779 : vector<4x1xf32> to vector<4x128xf32>
    %781 = arith.divf %772, %780 : vector<4x128xf32>
    %cst_148 = arith.constant dense<0.000000e+00> : vector<4xf32>
    %782 = vector.multi_reduction <add>, %777, %cst_148 [1] : vector<4x128xf32> to vector<4xf32>
    %783 = vector.shape_cast %782 : vector<4xf32> to vector<4x1xf32>
    %784 = vector.broadcast %783 : vector<4x1xf32> to vector<4x128xf32>
    %785 = arith.divf %777, %784 : vector<4x128xf32>
    %786 = arith.addf %781, %785 : vector<4x128xf32>
    %787 = arith.index_cast %c2_i32_116 : i32 to index
    %c0_149 = arith.constant 0 : index
    %c0_150 = arith.constant 0 : index
    %788 = vector.load %arg17[%787, %c0_149, %c0_150] : memref<3x4x128xf32, #tpu.memory_space<vmem>>, vector<1x4x128xf32>
    %789 = vector.shape_cast %788 : vector<1x4x128xf32> to vector<4x128xf32>
    %790 = vector.shape_cast %786 : vector<4x128xf32> to vector<1x4x128xf32>
    tpu.vector_store %arg17[%787, %c0_149, %c0_150], %790 {strides = array<i32>} : memref<3x4x128xf32, #tpu.memory_space<vmem>>, vector<1x4x128xf32>,
    %c3_i32_151 = arith.constant 3 : i32
    %c0_152 = arith.constant 0 : index
    %c0_153 = arith.constant 0 : index
    %791 = vector.load %arg18[%c0_152, %c0_153] : memref<2x32xf32, #tpu.memory_space<vmem>>, vector<1x32xf32>
    tpu.vector_store %arg18[%c0_152, %c0_153], %635 {strides = array<i32>} : memref<2x32xf32, #tpu.memory_space<vmem>>, vector<1x32xf32>,
    %c0_154 = arith.constant 0 : index
    %c0_155 = arith.constant 0 : index
    %792 = vector.load %arg19[%c0_154, %c0_155] : memref<2x32xf32, #tpu.memory_space<vmem>>, vector<1x32xf32>
    tpu.vector_store %arg19[%c0_154, %c0_155], %633 {strides = array<i32>} : memref<2x32xf32, #tpu.memory_space<vmem>>, vector<1x32xf32>,
    %c1_156 = arith.constant 1 : index
    %c0_157 = arith.constant 0 : index
    %793 = vector.load %arg18[%c1_156, %c0_157] : memref<2x32xf32, #tpu.memory_space<vmem>>, vector<1x32xf32>
    tpu.vector_store %arg18[%c1_156, %c0_157], %727 {strides = array<i32>} : memref<2x32xf32, #tpu.memory_space<vmem>>, vector<1x32xf32>,
    %c1_158 = arith.constant 1 : index
    %c0_159 = arith.constant 0 : index
    %794 = vector.load %arg19[%c1_158, %c0_159] : memref<2x32xf32, #tpu.memory_space<vmem>>, vector<1x32xf32>
    tpu.vector_store %arg19[%c1_158, %c0_159], %725 {strides = array<i32>} : memref<2x32xf32, #tpu.memory_space<vmem>>, vector<1x32xf32>,
    return
  }
  func.func @transform_0(%arg0: i32) -> (i32, i32) {
    %c0_i32 = arith.constant 0 : i32
    %c0_i32_0 = arith.constant 0 : i32
    %c0_i32_1 = arith.constant 0 : i32
    return %c0_i32, %c0_i32_0 : i32, i32
  }
  func.func @transform_1(%arg0: i32) -> (i32, i32) {
    %c0_i32 = arith.constant 0 : i32
    %c0_i32_0 = arith.constant 0 : i32
    %c0_i32_1 = arith.constant 0 : i32
    return %c0_i32, %c0_i32_0 : i32, i32
  }
  func.func @transform_2(%arg0: i32) -> (i32, i32) {
    %c0_i32 = arith.constant 0 : i32
    %c0_i32_0 = arith.constant 0 : i32
    %c0_i32_1 = arith.constant 0 : i32
    return %c0_i32, %c0_i32_0 : i32, i32
  }
  func.func @transform_3(%arg0: i32) -> (i32, i32) {
    %c0_i32 = arith.constant 0 : i32
    %c0_i32_0 = arith.constant 0 : i32
    %c0_i32_1 = arith.constant 0 : i32
    return %c0_i32, %c0_i32_0 : i32, i32
  }
  func.func @transform_4(%arg0: i32) -> (i32, i32) {
    %c0_i32 = arith.constant 0 : i32
    %c0_i32_0 = arith.constant 0 : i32
    %c0_i32_1 = arith.constant 0 : i32
    return %c0_i32, %c0_i32_0 : i32, i32
  }
  func.func @transform_5(%arg0: i32) -> (i32, i32) {
    %c0_i32 = arith.constant 0 : i32
    %c0_i32_0 = arith.constant 0 : i32
    %c0_i32_1 = arith.constant 0 : i32
    return %c0_i32, %c0_i32_0 : i32, i32
  }
  func.func @transform_6(%arg0: i32) -> (i32, i32) {
    %c0_i32 = arith.constant 0 : i32
    %c0_i32_0 = arith.constant 0 : i32
    %c0_i32_1 = arith.constant 0 : i32
    return %c0_i32, %c0_i32_0 : i32, i32
  }
  func.func @transform_7(%arg0: i32) -> (i32, i32) {
    %c0_i32 = arith.constant 0 : i32
    %c0_i32_0 = arith.constant 0 : i32
    %c0_i32_1 = arith.constant 0 : i32
    return %c0_i32, %c0_i32_0 : i32, i32
  }
  func.func @transform_8(%arg0: i32) -> (i32, i32) {
    %c0_i32 = arith.constant 0 : i32
    %c0_i32_0 = arith.constant 0 : i32
    %c0_i32_1 = arith.constant 0 : i32
    return %c0_i32, %c0_i32_0 : i32, i32
  }
  func.func @transform_9(%arg0: i32) -> (i32, i32) {
    %c0_i32 = arith.constant 0 : i32
    %c0_i32_0 = arith.constant 0 : i32
    %c0_i32_1 = arith.constant 0 : i32
    return %c0_i32, %c0_i32_0 : i32, i32
  }
  func.func @transform_10(%arg0: i32) -> (i32, i32) {
    %c0_i32 = arith.constant 0 : i32
    %c0_i32_0 = arith.constant 0 : i32
    %c0_i32_1 = arith.constant 0 : i32
    return %c0_i32, %c0_i32_0 : i32, i32
  }
  func.func @transform_11(%arg0: i32) -> (i32, i32) {
    %c0_i32 = arith.constant 0 : i32
    %c0_i32_0 = arith.constant 0 : i32
    %c0_i32_1 = arith.constant 0 : i32
    return %c0_i32, %c0_i32_0 : i32, i32
  }
  func.func @transform_12(%arg0: i32) -> (i32, i32) {
    %c0_i32 = arith.constant 0 : i32
    %c0_i32_0 = arith.constant 0 : i32
    %c0_i32_1 = arith.constant 0 : i32
    return %c0_i32, %c0_i32_0 : i32, i32
  }
  func.func @transform_13(%arg0: i32) -> (i32, i32) {
    %c0_i32 = arith.constant 0 : i32
    %c0_i32_0 = arith.constant 0 : i32
    %c0_i32_1 = arith.constant 0 : i32
    return %c0_i32, %c0_i32_0 : i32, i32
  }
  func.func @transform_14(%arg0: i32) -> (i32, i32) {
    %c0_i32 = arith.constant 0 : i32
    %c0_i32_0 = arith.constant 0 : i32
    %c0_i32_1 = arith.constant 0 : i32
    return %c0_i32, %c0_i32_0 : i32, i32
  }
  func.func @transform_15(%arg0: i32) -> (i32, i32) {
    %c0_i32 = arith.constant 0 : i32
    %c0_i32_0 = arith.constant 0 : i32
    %c0_i32_1 = arith.constant 0 : i32
    return %c0_i32, %c0_i32_0 : i32, i32
  }
  func.func @transform_16(%arg0: i32) -> (i32, i32, i32) {
    %c0_i32 = arith.constant 0 : i32
    %c0_i32_0 = arith.constant 0 : i32
    %c0_i32_1 = arith.constant 0 : i32
    %c0_i32_2 = arith.constant 0 : i32
    return %c0_i32, %c0_i32_0, %c0_i32_1 : i32, i32, i32
  }
  func.func @transform_17(%arg0: i32) -> (i32, i32) {
    %c0_i32 = arith.constant 0 : i32
    %c0_i32_0 = arith.constant 0 : i32
    %c0_i32_1 = arith.constant 0 : i32
    return %c0_i32, %c0_i32_0 : i32, i32
  }
  func.func @transform_18(%arg0: i32) -> (i32, i32) {
    %c0_i32 = arith.constant 0 : i32
    %c0_i32_0 = arith.constant 0 : i32
    %c0_i32_1 = arith.constant 0 : i32
    return %c0_i32, %c0_i32_0 : i32, i32
  }
}

</mosaic_0001>

<llo_original>
// kernel: run.1
$region0: #{run.1}
  #allocation0 [shape = 'u32[]', space=smem, size = 0x4, offset = 0x4, fixed_abs, tag = 'smem constant byte address 0x4 - core index']
  #allocation1 [shape = 'u32[72,128]{1,0:T(1,128)}', space=vmem, size = 0x9000, scoped, tag = 'internal scratch']
  #allocation2 [shape = 'f32[3,4,128]{2,1,0:T(4,128)}', space=vmem, size = 0x1800, scoped, tag = 'scratch operand']
  %s0 = inlined_call_operand.vmem [shape: f32[12,128], index: 0, kind: input, shape index: {}]
  %s1 = inlined_call_operand.vmem [shape: f32[128,32], index: 1, kind: input, shape index: {}]
  %s2 = inlined_call_operand.vmem [shape: f32[32,32], index: 2, kind: input, shape index: {}]
  %s3 = inlined_call_operand.vmem [shape: f32[1,32], index: 3, kind: input, shape index: {}]
  %s4 = inlined_call_operand.vmem [shape: f32[32,128], index: 4, kind: input, shape index: {}]
  %s5 = inlined_call_operand.vmem [shape: f32[32,128], index: 5, kind: input, shape index: {}]
  %s6 = inlined_call_operand.vmem [shape: f32[1,128], index: 6, kind: input, shape index: {}]
  %s7 = inlined_call_operand.vmem [shape: f32[32,128], index: 7, kind: input, shape index: {}]
  %s8 = inlined_call_operand.vmem [shape: f32[32,128], index: 8, kind: input, shape index: {}]
  %s9 = inlined_call_operand.vmem [shape: f32[1,128], index: 9, kind: input, shape index: {}]
  %s10 = inlined_call_operand.vmem [shape: f32[1,32], index: 10, kind: input, shape index: {}]
  %s11 = inlined_call_operand.vmem [shape: f32[1,32], index: 11, kind: input, shape index: {}]
  %s12 = inlined_call_operand.vmem [shape: f32[32,128], index: 12, kind: input, shape index: {}]
  %s13 = inlined_call_operand.vmem [shape: f32[1,128], index: 13, kind: input, shape index: {}]
  %s14 = inlined_call_operand.vmem [shape: f32[2,32], index: 14, kind: input, shape index: {}]
  %s15 = inlined_call_operand.vmem [shape: f32[2,32], index: 15, kind: input, shape index: {}]
  %s16 = inlined_call_operand.vmem [shape: f32[3,4,128], index: 16, kind: output, shape index: {0}]
  %s17 = inlined_call_operand.hbm [shape: f32[2,32], index: 17, kind: output, shape index: {1}]
  %s18 = inlined_call_operand.hbm [shape: f32[2,32], index: 18, kind: output, shape index: {2}]
  %19 = xla_tuple %s16, %s17, %s18
  %s20 = sld [smem:[#allocation0]]
  $region90: #{run.1} parent=0
    _
  %s22 = ssub.s32 1, %s20
  %s23 = scalar_select 0, %s22, %s20
  $region1: #{run.1} parent=0
    #allocation3 [shape = 'u8[1024]{0}', space=vmem, size = 0x400, scoped, tag = 'output window, operand 1, single buffered']
    #allocation4 [shape = 's32[1]{0}', space=sflag, size = 0x4, scoped, tag = 'scoped memory for run.1']
    #allocation5 [shape = 'u8[1024]{0}', space=vmem, size = 0x400, scoped, tag = 'output window, operand 2, single buffered']
    #allocation6 [shape = 's32[1]{0}', space=sflag, size = 0x4, scoped, tag = 'scoped memory for run.1']
    %24 = vsyncpa [#allocation4], 0
    %25 = vsyncpa [#allocation6], 0
    // Predicated region
    $region2: #{run.1} parent=1 // pred_check
      _
    $region3: #{run.1} parent=1 // pred_check_branch
      %27 = sbr.rel (0) target = $region5
    $region4: #{run.1} parent=1 // pred_region
      _
    $region5: #{run.1} parent=1 // pred_fallthru
      _
    // Predicated region
    $region6: #{run.1} parent=1 // pred_check
      _
    $region7: #{run.1} parent=1 // pred_check_branch
      %29 = sbr.rel (0) target = $region9
    $region8: #{run.1} parent=1 // pred_region
      _
    $region9: #{run.1} parent=1 // pred_fallthru
      _
    // Predicated region
    $region10: #{run.1} parent=1 // pred_check
      _
    $region11: #{run.1} parent=1 // pred_check_branch
      %31 = sbr.rel (0) target = $region13
    $region12: #{run.1} parent=1 // pred_region
      _
    $region13: #{run.1} parent=1 // pred_fallthru
      _
    // Predicated region
    $region14: #{run.1} parent=1 // pred_check
      _
    $region15: #{run.1} parent=1 // pred_check_branch
      %33 = sbr.rel (0) target = $region17
    $region16: #{run.1} parent=1 // pred_region
      _
    $region17: #{run.1} parent=1 // pred_fallthru
      _
    // Predicated region
    $region18: #{run.1} parent=1 // pred_check
      _
    $region19: #{run.1} parent=1 // pred_check_branch
      %35 = sbr.rel (0) target = $region21
    $region20: #{run.1} parent=1 // pred_region
      _
    $region21: #{run.1} parent=1 // pred_fallthru
      _
    // Predicated region
    $region22: #{run.1} parent=1 // pred_check
      _
    $region23: #{run.1} parent=1 // pred_check_branch
      %37 = sbr.rel (0) target = $region25
    $region24: #{run.1} parent=1 // pred_region
      _
    $region25: #{run.1} parent=1 // pred_fallthru
      _
    // Predicated region
    $region26: #{run.1} parent=1 // pred_check
      _
    $region27: #{run.1} parent=1 // pred_check_branch
      %39 = sbr.rel (0) target = $region29
    $region28: #{run.1} parent=1 // pred_region
      _
    $region29: #{run.1} parent=1 // pred_fallthru
      _
    // Predicated region
    $region30: #{run.1} parent=1 // pred_check
      _
    $region31: #{run.1} parent=1 // pred_check_branch
      %41 = sbr.rel (0) target = $region33
    $region32: #{run.1} parent=1 // pred_region
      _
    $region33: #{run.1} parent=1 // pred_fallthru
      _
    // Predicated region
    $region34: #{run.1} parent=1 // pred_check
      _
    $region35: #{run.1} parent=1 // pred_check_branch
      %43 = sbr.rel (0) target = $region37
    $region36: #{run.1} parent=1 // pred_region
      _
    $region37: #{run.1} parent=1 // pred_fallthru
      _
    // Predicated region
    $region38: #{run.1} parent=1 // pred_check
      _
    $region39: #{run.1} parent=1 // pred_check_branch
      %45 = sbr.rel (0) target = $region41
    $region40: #{run.1} parent=1 // pred_region
      _
    $region41: #{run.1} parent=1 // pred_fallthru
      _
    // Predicated region
    $region42: #{run.1} parent=1 // pred_check
      _
    $region43: #{run.1} parent=1 // pred_check_branch
      %47 = sbr.rel (0) target = $region45
    $region44: #{run.1} parent=1 // pred_region
      _
    $region45: #{run.1} parent=1 // pred_fallthru
      _
    // Predicated region
    $region46: #{run.1} parent=1 // pred_check
      _
    $region47: #{run.1} parent=1 // pred_check_branch
      %49 = sbr.rel (0) target = $region49
    $region48: #{run.1} parent=1 // pred_region
      _
    $region49: #{run.1} parent=1 // pred_fallthru
      _
    // Predicated region
    $region50: #{run.1} parent=1 // pred_check
      _
    $region51: #{run.1} parent=1 // pred_check_branch
      %51 = sbr.rel (0) target = $region53
    $region52: #{run.1} parent=1 // pred_region
      _
    $region53: #{run.1} parent=1 // pred_fallthru
      _
    // Predicated region
    $region54: #{run.1} parent=1 // pred_check
      _
    $region55: #{run.1} parent=1 // pred_check_branch
      %53 = sbr.rel (0) target = $region57
    $region56: #{run.1} parent=1 // pred_region
      _
    $region57: #{run.1} parent=1 // pred_fallthru
      _
    // Predicated region
    $region58: #{run.1} parent=1 // pred_check
      _
    $region59: #{run.1} parent=1 // pred_check_branch
      %55 = sbr.rel (0) target = $region61
    $region60: #{run.1} parent=1 // pred_region
      _
    $region61: #{run.1} parent=1 // pred_fallthru
      _
    // Predicated region
    $region62: #{run.1} parent=1 // pred_check
      _
    $region63: #{run.1} parent=1 // pred_check_branch
      %57 = sbr.rel (0) target = $region65
    $region64: #{run.1} parent=1 // pred_region
      _
    $region65: #{run.1} parent=1 // pred_fallthru
      _
    %v58 = vld [vmem:[%s0] sm:$0xff]
    %v59 = vld [vmem:[%s0 + $0x8] sm:$0xf]
    %v60 = vld [vmem:[%s1] sm:$0xff]
    %v61 = vld [vmem:[%s1 + $0x8] sm:$0xff]
    %v62 = vld [vmem:[%s1 + $0x10] sm:$0xff]
    %v63 = vld [vmem:[%s1 + $0x18] sm:$0xff]
    %v64 = vld [vmem:[%s1 + $0x20] sm:$0xff]
    %v65 = vld [vmem:[%s1 + $0x28] sm:$0xff]
    %v66 = vld [vmem:[%s1 + $0x30] sm:$0xff]
    %v67 = vld [vmem:[%s1 + $0x38] sm:$0xff]
    %v68 = vld [vmem:[%s1 + $0x40] sm:$0xff]
    %v69 = vld [vmem:[%s1 + $0x48] sm:$0xff]
    %v70 = vld [vmem:[%s1 + $0x50] sm:$0xff]
    %v71 = vld [vmem:[%s1 + $0x58] sm:$0xff]
    %v72 = vld [vmem:[%s1 + $0x60] sm:$0xff]
    %v73 = vld [vmem:[%s1 + $0x68] sm:$0xff]
    %v74 = vld [vmem:[%s1 + $0x70] sm:$0xff]
    %v75 = vld [vmem:[%s1 + $0x78] sm:$0xff]
    %76 = vmatpush.msra.mxu0 %v75
    %77 = vmatpush.msra.mxu0 %v74
    %78 = vmatpush.msra.mxu0 %v73
    %79 = vmatpush.msra.mxu0 %v72
    %80 = vmatpush.msra.mxu0 %v71
    %81 = vmatpush.msra.mxu0 %v70
    %82 = vmatpush.msra.mxu0 %v69
    %83 = vmatpush.msra.mxu0 %v68
    %84 = vmatpush.msra.mxu0 %v67
    %85 = vmatpush.msra.mxu0 %v66
    %86 = vmatpush.msra.mxu0 %v65
    %87 = vmatpush.msra.mxu0 %v64
    %88 = vmatpush.msra.mxu0 %v63
    %89 = vmatpush.msra.mxu0 %v62
    %90 = vmatpush.msra.mxu0 %v61
    %91 = vmatpush.msra.mxu0 %v60
    %92 = vmatmul.f32.gmra.mxu0 %v58
    %v93 = vpop.f32.mrf.mxu0
    %v94 = vadd.f32 0.0, %v93
    %95 = vmatmul.f32.gmra.mxu0 %v59
    %v96 = vpop.f32.mrf.mxu0
    %v97 = vadd.f32 0.0, %v96
    %98 = vdwg.mxu0
    %v99 = vld [vmem:[%s2] sm:$0xff]
    %v100 = vld [vmem:[%s2 + $0x8] sm:$0xff]
    %v101 = vld [vmem:[%s2 + $0x10] sm:$0xff]
    %v102 = vld [vmem:[%s2 + $0x18] sm:$0xff]
    %v103 = vld [vmem:[%s3] sm:$0x1]
    %v105 = vperm.slane %v103, 0
    %vm107 = vcmask 261120
    %v109 = vsel %vm107, %v94, 0
    %v112 = vsel %vm107, %v97, 0
    %114 = vmatpush.msra.mxu0 0.0
    %115 = vmatpush.msra.mxu0 0.0
    %116 = vmatpush.msra.mxu0 0.0
    %117 = vmatpush.msra.mxu0 0.0
    %118 = vmatpush.msra.mxu0 0.0
    %119 = vmatpush.msra.mxu0 0.0
    %120 = vmatpush.msra.mxu0 0.0
    %121 = vmatpush.msra.mxu0 0.0
    %122 = vmatpush.msra.mxu0 0.0
    %123 = vmatpush.msra.mxu0 0.0
    %124 = vmatpush.msra.mxu0 0.0
    %125 = vmatpush.msra.mxu0 0.0
    %126 = vmatpush.msra.mxu0 %v102
    %127 = vmatpush.msra.mxu0 %v101
    %128 = vmatpush.msra.mxu0 %v100
    %129 = vmatpush.msra.mxu0 %v99
    %130 = vmatmul.f32.gmra.mxu0 %v109
    %v131 = vpop.f32.mrf.mxu0
    %v132 = vadd.f32 %v105, %v131
    %133 = vmatmul.f32.gmra.mxu0 %v112
    %v134 = vpop.f32.mrf.mxu0
    %v135 = vadd.f32 %v105, %v134
    %136 = vdwg.mxu0
    %v137 = vld [vmem:[%s4] sm:$0xff]
    %v138 = vld [vmem:[%s4 + $0x8] sm:$0xff]
    %v139 = vld [vmem:[%s4 + $0x10] sm:$0xff]
    %v140 = vld [vmem:[%s4 + $0x18] sm:$0xff]
    %v141 = vld [vmem:[%s6] sm:$0x1]
    %v143 = vperm.slane %v141, 0
    %v146 = vsel %vm107, %v132, 0
    %v149 = vsel %vm107, %v135, 0
    %151 = vmatpush.msra.mxu0 0.0
    %152 = vmatpush.msra.mxu0 0.0
    %153 = vmatpush.msra.mxu0 0.0
    %154 = vmatpush.msra.mxu0 0.0
    %155 = vmatpush.msra.mxu0 0.0
    %156 = vmatpush.msra.mxu0 0.0
    %157 = vmatpush.msra.mxu0 0.0
    %158 = vmatpush.msra.mxu0 0.0
    %159 = vmatpush.msra.mxu0 0.0
    %160 = vmatpush.msra.mxu0 0.0
    %161 = vmatpush.msra.mxu0 0.0
    %162 = vmatpush.msra.mxu0 0.0
    %163 = vmatpush.msra.mxu0 %v140
    %164 = vmatpush.msra.mxu0 %v139
    %165 = vmatpush.msra.mxu0 %v138
    %166 = vmatpush.msra.mxu0 %v137
    %167 = vmatmul.f32.gmra.mxu0 %v146
    %v168 = vpop.f32.mrf.mxu0
    %v169 = vadd.f32 %v143, %v168
    %170 = vmatmul.f32.gmra.mxu0 %v149
    %v171 = vpop.f32.mrf.mxu0
    %v172 = vadd.f32 %v143, %v171
    %173 = vdwg.mxu0
    %174 = vst [vmem:[#allocation2] sm:$0xf] %v169
    %s175 = scalar_lea.vmem [#allocation2], 4
    %176 = vst [vmem:[%s175 - $0x4] sm:$0xf0] %v169
    %s177 = scalar_lea.vmem [#allocation2], 8
    %178 = vst [vmem:[%s177] sm:$0xf] %v172
    %v179 = vld [vmem:[%s5] sm:$0xff]
    %v180 = vld [vmem:[%s5 + $0x8] sm:$0xff]
    %v181 = vld [vmem:[%s5 + $0x10] sm:$0xff]
    %v182 = vld [vmem:[%s5 + $0x18] sm:$0xff]
    %v183 = vld [vmem:[%s8] sm:$0xff]
    %v184 = vld [vmem:[%s8 + $0x8] sm:$0xff]
    %v185 = vld [vmem:[%s8 + $0x10] sm:$0xff]
    %v186 = vld [vmem:[%s8 + $0x18] sm:$0xff]
    %v187 = vld [vmem:[%s7] sm:$0xff]
    %v188 = vld [vmem:[%s7 + $0x8] sm:$0xff]
    %v189 = vld [vmem:[%s7 + $0x10] sm:$0xff]
    %v190 = vld [vmem:[%s7 + $0x18] sm:$0xff]
    %v191 = vld [vmem:[%s9] sm:$0x1]
    %v192 = vld [vmem:[%s10] sm:$0x1]
    %v193 = vld [vmem:[%s11] sm:$0x1]
    %v194 = vld [vmem:[%s12] sm:$0xff]
    %v195 = vld [vmem:[%s12 + $0x8] sm:$0xff]
    %v196 = vld [vmem:[%s12 + $0x10] sm:$0xff]
    %v197 = vld [vmem:[%s12 + $0x18] sm:$0xff]
    %v198 = vld [vmem:[%s13] sm:$0x1]
    %v199 = vlaneseq
    %v200 = vshrl.u32 %v199, 7
    %vm201 = vcmp.eq.s32.totalorder %v200, 0
    %v202 = vsel %vm201, 1, 0
    %v203 = vcvt.s32.f32 %v202
    %vm204 = vcmp.eq.s32.totalorder %v200, 1
    %v205 = vsel %vm204, 1, 0
    %v206 = vcvt.s32.f32 %v205
    %vm207 = vcmp.eq.s32.totalorder %v200, 2
    %v208 = vsel %vm207, 1, 0
    %v209 = vcvt.s32.f32 %v208
    %vm210 = vcmp.eq.s32.totalorder %v200, 3
    %v211 = vsel %vm210, 1, 0
    %v212 = vcvt.s32.f32 %v211
    %v213 = vlaneseq
    %v214 = vand.u32 %v213, 127
    %vm215 = vcmp.lt.s32.totalorder %v214, 5
    %vm216 = vcmp.ge.s32.totalorder %v214, 5
    %vm217 = vcmp.lt.s32.totalorder %v214, 8
    %vm218 = vmand %vm216, %vm217
    %v219 = vld [vmem:[%s14] sm:$0x1]
    %v220 = vld [vmem:[%s14 + $0x1] sm:$0x1]
    %v221 = vld [vmem:[%s15] sm:$0x1]
    %v222 = vld [vmem:[%s15 + $0x1] sm:$0x1]
    %v223 = vld [vmem:[#allocation2] sm:$0xf]
    %v225 = vsel %vm107, %v219, 0
    %227 = vmatpush.msra.mxu0 0.0
    %228 = vmatpush.msra.mxu0 0.0
    %229 = vmatpush.msra.mxu0 0.0
    %230 = vmatpush.msra.mxu0 0.0
    %231 = vmatpush.msra.mxu0 0.0
    %232 = vmatpush.msra.mxu0 0.0
    %233 = vmatpush.msra.mxu0 0.0
    %234 = vmatpush.msra.mxu0 0.0
    %235 = vmatpush.msra.mxu0 0.0
    %236 = vmatpush.msra.mxu0 0.0
    %237 = vmatpush.msra.mxu0 0.0
    %238 = vmatpush.msra.mxu0 0.0
    %239 = vmatpush.msra.mxu0 %v182
    %240 = vmatpush.msra.mxu0 %v181
    %241 = vmatpush.msra.mxu0 %v180
    %242 = vmatpush.msra.mxu0 %v179
    %243 = vmatmul.f32.gmra.mxu0 %v225
    %v244 = vpop.f32.mrf.mxu0
    %v245 = vadd.f32 0.0, %v244
    %246 = vdwg.mxu0
    %v247 = vadd.f32 %v223, %v245
    %v248 = vxor.u32 %v247, 2147483648
    %v249 = vmul.f32 %v248, 1.442695
    %v250 = vpow.pop %v249
    %v251 = vadd.f32 %v250, 1.0
    %v252 = vrcp.pop %v251
    %v253 = vmul.f32 %v251, %v252
    %v254 = vsub.f32 1.0, %v253
    %v255 = vmul.f32 %v252, %v254
    %v256 = vadd.f32 %v252, %v255
    %vm257 = vweird.f32 %v251
    %vm258 = vweird.f32 %v252
    %vm259 = vmor %vm257, %vm258
    %v260 = vsel %vm259, %v252, %v256
    %v261 = vand.u32 2147483647, %v251
    %vm262 = vcmp.eq.f32.partialorder %v261, 8.507059e+37
    %v263 = vand.u32 %v251, 2147483648
    %v264 = vor.u32 1.1754944e-38, %v263
    %v265 = vsel %vm262, %v264, %v260
    %v266 = vmul.f32 1.0, %v265
    %v267 = vtanh.pop %v247
    %269 = vrot.lane.b32.xlu0 %v221, 32
    %v270 = vpop.permute.xlu0 %269
    %v272 = vmul.f32 %v266, %v270
    %274 = vrot.lane.b32.xlu0 %v267, 64
    %v275 = vpop.permute.xlu0 %274
    %v277 = vmul.f32 %v266, %v275
    %279 = vrot.lane.b32.xlu0 %v277, 32
    %v280 = vpop.permute.xlu0 %279
    %v282 = vadd.f32 %v272, %v280
    %v283 = vtanh.pop %v282
    %285 = vrot.lane.b32.xlu0 %v283, 64
    %v286 = vpop.permute.xlu0 %285
    %v288 = vmul.f32 %v266, %v286
    %v289 = vperm.slane %v288, 0
    %v290 = vmul.f32 %v203, %v289
    %v291 = vadd.f32 %v290, 0.0
    %293 = vrot.lane.b32.xlu0 %v288, 32
    %v294 = vpop.permute.xlu0 %293
    %v295 = vsel %vm107, %v294, 0
    %297 = vmatpush.msra.mxu0 0.0
    %298 = vmatpush.msra.mxu0 0.0
    %299 = vmatpush.msra.mxu0 0.0
    %300 = vmatpush.msra.mxu0 0.0
    %301 = vmatpush.msra.mxu0 0.0
    %302 = vmatpush.msra.mxu0 0.0
    %303 = vmatpush.msra.mxu0 0.0
    %304 = vmatpush.msra.mxu0 0.0
    %305 = vmatpush.msra.mxu0 0.0
    %306 = vmatpush.msra.mxu0 0.0
    %307 = vmatpush.msra.mxu0 0.0
    %308 = vmatpush.msra.mxu0 0.0
    %309 = vmatpush.msra.mxu0 %v182
    %310 = vmatpush.msra.mxu0 %v181
    %311 = vmatpush.msra.mxu0 %v180
    %312 = vmatpush.msra.mxu0 %v179
    %313 = vmatmul.f32.gmra.mxu0 %v295
    %v314 = vpop.f32.mrf.mxu0
    %v315 = vadd.f32 0.0, %v314
    %316 = vdwg.mxu0
    %v318 = vrot.slane %v315, 7
    %v320 = vadd.f32 %v223, %v318
    %v321 = vxor.u32 %v320, 2147483648
    %v322 = vmul.f32 %v321, 1.442695
    %v323 = vpow.pop %v322
    %v324 = vadd.f32 %v323, 1.0
    %v325 = vrcp.pop %v324
    %v326 = vmul.f32 %v324, %v325
    %v327 = vsub.f32 1.0, %v326
    %v328 = vmul.f32 %v325, %v327
    %v329 = vadd.f32 %v325, %v328
    %vm330 = vweird.f32 %v324
    %vm331 = vweird.f32 %v325
    %vm332 = vmor %vm330, %vm331
    %v333 = vsel %vm332, %v325, %v329
    %v334 = vand.u32 2147483647, %v324
    %vm335 = vcmp.eq.f32.partialorder %v334, 8.507059e+37
    %v336 = vand.u32 %v324, 2147483648
    %v337 = vor.u32 1.1754944e-38, %v336
    %v338 = vsel %vm335, %v337, %v333
    %v339 = vmul.f32 1.0, %v338
    %v340 = vtanh.pop %v320
    %v342 = vrot.slane %v282, 7
    %v344 = vmul.f32 %v339, %v342
    %346 = vrot.lane.b32.xlu0 %v340, 64
    %v347 = vpop.permute.xlu0 %346
    %v349 = vmul.f32 %v339, %v347
    %351 = vrot.lane.b32.xlu0 %v349, 32
    %v352 = vpop.permute.xlu0 %351
    %v354 = vadd.f32 %v344, %v352
    %v355 = vtanh.pop %v354
    %357 = vrot.lane.b32.xlu0 %v355, 64
    %v358 = vpop.permute.xlu0 %357
    %v360 = vmul.f32 %v339, %v358
    %v361 = vperm.slane %v360, 1
    %v362 = vmul.f32 %v206, %v361
    %v363 = vadd.f32 %v291, %v362
    %v365 = vrot.slane %v360, 1
    %366 = vrot.lane.b32.xlu0 %v365, 32
    %v367 = vpop.permute.xlu0 %366
    %v368 = vsel %vm107, %v367, 0
    %370 = vmatpush.msra.mxu0 0.0
    %371 = vmatpush.msra.mxu0 0.0
    %372 = vmatpush.msra.mxu0 0.0
    %373 = vmatpush.msra.mxu0 0.0
    %374 = vmatpush.msra.mxu0 0.0
    %375 = vmatpush.msra.mxu0 0.0
    %376 = vmatpush.msra.mxu0 0.0
    %377 = vmatpush.msra.mxu0 0.0
    %378 = vmatpush.msra.mxu0 0.0
    %379 = vmatpush.msra.mxu0 0.0
    %380 = vmatpush.msra.mxu0 0.0
    %381 = vmatpush.msra.mxu0 0.0
    %382 = vmatpush.msra.mxu0 %v182
    %383 = vmatpush.msra.mxu0 %v181
    %384 = vmatpush.msra.mxu0 %v180
    %385 = vmatpush.msra.mxu0 %v179
    %386 = vmatmul.f32.gmra.mxu0 %v368
    %v387 = vpop.f32.mrf.mxu0
    %v388 = vadd.f32 0.0, %v387
    %389 = vdwg.mxu0
    %v391 = vrot.slane %v388, 6
    %v393 = vadd.f32 %v223, %v391
    %v394 = vxor.u32 %v393, 2147483648
    %v395 = vmul.f32 %v394, 1.442695
    %v396 = vpow.pop %v395
    %v397 = vadd.f32 %v396, 1.0
    %v398 = vrcp.pop %v397
    %v399 = vmul.f32 %v397, %v398
    %v400 = vsub.f32 1.0, %v399
    %v401 = vmul.f32 %v398, %v400
    %v402 = vadd.f32 %v398, %v401
    %vm403 = vweird.f32 %v397
    %vm404 = vweird.f32 %v398
    %vm405 = vmor %vm403, %vm404
    %v406 = vsel %vm405, %v398, %v402
    %v407 = vand.u32 2147483647, %v397
    %vm408 = vcmp.eq.f32.partialorder %v407, 8.507059e+37
    %v409 = vand.u32 %v397, 2147483648
    %v410 = vor.u32 1.1754944e-38, %v409
    %v411 = vsel %vm408, %v410, %v406
    %v412 = vmul.f32 1.0, %v411
    %v413 = vtanh.pop %v393
    %v415 = vrot.slane %v354, 7
    %v417 = vmul.f32 %v412, %v415
    %419 = vrot.lane.b32.xlu0 %v413, 64
    %v420 = vpop.permute.xlu0 %419
    %v422 = vmul.f32 %v412, %v420
    %424 = vrot.lane.b32.xlu0 %v422, 32
    %v425 = vpop.permute.xlu0 %424
    %v427 = vadd.f32 %v417, %v425
    %v428 = vtanh.pop %v427
    %430 = vrot.lane.b32.xlu0 %v428, 64
    %v431 = vpop.permute.xlu0 %430
    %v433 = vmul.f32 %v412, %v431
    %v434 = vperm.slane %v433, 2
    %v435 = vmul.f32 %v209, %v434
    %v436 = vadd.f32 %v363, %v435
    %v438 = vrot.slane %v433, 2
    %439 = vrot.lane.b32.xlu0 %v438, 32
    %v440 = vpop.permute.xlu0 %439
    %v441 = vsel %vm107, %v440, 0
    %443 = vmatpush.msra.mxu0 0.0
    %444 = vmatpush.msra.mxu0 0.0
    %445 = vmatpush.msra.mxu0 0.0
    %446 = vmatpush.msra.mxu0 0.0
    %447 = vmatpush.msra.mxu0 0.0
    %448 = vmatpush.msra.mxu0 0.0
    %449 = vmatpush.msra.mxu0 0.0
    %450 = vmatpush.msra.mxu0 0.0
    %451 = vmatpush.msra.mxu0 0.0
    %452 = vmatpush.msra.mxu0 0.0
    %453 = vmatpush.msra.mxu0 0.0
    %454 = vmatpush.msra.mxu0 0.0
    %455 = vmatpush.msra.mxu0 %v182
    %456 = vmatpush.msra.mxu0 %v181
    %457 = vmatpush.msra.mxu0 %v180
    %458 = vmatpush.msra.mxu0 %v179
    %459 = vmatmul.f32.gmra.mxu0 %v441
    %v460 = vpop.f32.mrf.mxu0
    %v461 = vadd.f32 0.0, %v460
    %462 = vdwg.mxu0
    %v464 = vrot.slane %v461, 5
    %v466 = vadd.f32 %v223, %v464
    %v467 = vxor.u32 %v466, 2147483648
    %v468 = vmul.f32 %v467, 1.442695
    %v469 = vpow.pop %v468
    %v470 = vadd.f32 %v469, 1.0
    %v471 = vrcp.pop %v470
    %v472 = vmul.f32 %v470, %v471
    %v473 = vsub.f32 1.0, %v472
    %v474 = vmul.f32 %v471, %v473
    %v475 = vadd.f32 %v471, %v474
    %vm476 = vweird.f32 %v470
    %vm477 = vweird.f32 %v471
    %vm478 = vmor %vm476, %vm477
    %v479 = vsel %vm478, %v471, %v475
    %v480 = vand.u32 2147483647, %v470
    %vm481 = vcmp.eq.f32.partialorder %v480, 8.507059e+37
    %v482 = vand.u32 %v470, 2147483648
    %v483 = vor.u32 1.1754944e-38, %v482
    %v484 = vsel %vm481, %v483, %v479
    %v485 = vmul.f32 1.0, %v484
    %v486 = vtanh.pop %v466
    %v488 = vrot.slane %v427, 7
    %v490 = vmul.f32 %v485, %v488
    %492 = vrot.lane.b32.xlu0 %v486, 64
    %v493 = vpop.permute.xlu0 %492
    %v495 = vmul.f32 %v485, %v493
    %497 = vrot.lane.b32.xlu0 %v495, 32
    %v498 = vpop.permute.xlu0 %497
    %v500 = vadd.f32 %v490, %v498
    %v501 = vtanh.pop %v500
    %503 = vrot.lane.b32.xlu0 %v501, 64
    %v504 = vpop.permute.xlu0 %503
    %v506 = vmul.f32 %v485, %v504
    %v507 = vperm.slane %v506, 3
    %v508 = vmul.f32 %v212, %v507
    %v509 = vadd.f32 %v436, %v508
    %v511 = vperm.slane %v191, 0
    %514 = vrot.lane.b32.xlu0 %v509, 32
    %v515 = vpop.permute.xlu0 %514
    %v516 = vsel %vm107, %v515, 0
    %518 = vmatpush.msra.mxu0 0.0
    %519 = vmatpush.msra.mxu0 0.0
    %520 = vmatpush.msra.mxu0 0.0
    %521 = vmatpush.msra.mxu0 0.0
    %522 = vmatpush.msra.mxu0 0.0
    %523 = vmatpush.msra.mxu0 0.0
    %524 = vmatpush.msra.mxu0 0.0
    %525 = vmatpush.msra.mxu0 0.0
    %526 = vmatpush.msra.mxu0 0.0
    %527 = vmatpush.msra.mxu0 0.0
    %528 = vmatpush.msra.mxu0 0.0
    %529 = vmatpush.msra.mxu0 0.0
    %530 = vmatpush.msra.mxu0 %v190
    %531 = vmatpush.msra.mxu0 %v189
    %532 = vmatpush.msra.mxu0 %v188
    %533 = vmatpush.msra.mxu0 %v187
    %534 = vmatmul.f32.gmra.mxu0 %v516
    %v535 = vpop.f32.mrf.mxu0
    %v536 = vadd.f32 %v511, %v535
    %537 = vdwg.mxu0
    %v539 = vsel %vm107, %v220, 0
    %541 = vmatpush.msra.mxu0 0.0
    %542 = vmatpush.msra.mxu0 0.0
    %543 = vmatpush.msra.mxu0 0.0
    %544 = vmatpush.msra.mxu0 0.0
    %545 = vmatpush.msra.mxu0 0.0
    %546 = vmatpush.msra.mxu0 0.0
    %547 = vmatpush.msra.mxu0 0.0
    %548 = vmatpush.msra.mxu0 0.0
    %549 = vmatpush.msra.mxu0 0.0
    %550 = vmatpush.msra.mxu0 0.0
    %551 = vmatpush.msra.mxu0 0.0
    %552 = vmatpush.msra.mxu0 0.0
    %553 = vmatpush.msra.mxu0 %v186
    %554 = vmatpush.msra.mxu0 %v185
    %555 = vmatpush.msra.mxu0 %v184
    %556 = vmatpush.msra.mxu0 %v183
    %557 = vmatmul.f32.gmra.mxu0 %v539
    %v558 = vpop.f32.mrf.mxu0
    %v559 = vadd.f32 0.0, %v558
    %560 = vdwg.mxu0
    %v561 = vadd.f32 %v536, %v559
    %v562 = vxor.u32 %v561, 2147483648
    %v563 = vmul.f32 %v562, 1.442695
    %v564 = vpow.pop %v563
    %v565 = vadd.f32 %v564, 1.0
    %v566 = vrcp.pop %v565
    %v567 = vmul.f32 %v565, %v566
    %v568 = vsub.f32 1.0, %v567
    %v569 = vmul.f32 %v566, %v568
    %v570 = vadd.f32 %v566, %v569
    %vm571 = vweird.f32 %v565
    %vm572 = vweird.f32 %v566
    %vm573 = vmor %vm571, %vm572
    %v574 = vsel %vm573, %v566, %v570
    %v575 = vand.u32 2147483647, %v565
    %vm576 = vcmp.eq.f32.partialorder %v575, 8.507059e+37
    %v577 = vand.u32 %v565, 2147483648
    %v578 = vor.u32 1.1754944e-38, %v577
    %v579 = vsel %vm576, %v578, %v574
    %v580 = vmul.f32 1.0, %v579
    %v581 = vtanh.pop %v561
    %583 = vrot.lane.b32.xlu0 %v222, 32
    %v584 = vpop.permute.xlu0 %583
    %v586 = vmul.f32 %v580, %v584
    %588 = vrot.lane.b32.xlu0 %v581, 64
    %v589 = vpop.permute.xlu0 %588
    %v591 = vmul.f32 %v580, %v589
    %593 = vrot.lane.b32.xlu0 %v591, 32
    %v594 = vpop.permute.xlu0 %593
    %v596 = vadd.f32 %v586, %v594
    %v597 = vtanh.pop %v596
    %599 = vrot.lane.b32.xlu0 %v597, 64
    %v600 = vpop.permute.xlu0 %599
    %v602 = vmul.f32 %v580, %v600
    %v603 = vperm.slane %v602, 0
    %v604 = vmul.f32 %v203, %v603
    %v605 = vadd.f32 %v604, 0.0
    %607 = vrot.lane.b32.xlu0 %v602, 32
    %v608 = vpop.permute.xlu0 %607
    %v609 = vsel %vm107, %v608, 0
    %611 = vmatpush.msra.mxu0 0.0
    %612 = vmatpush.msra.mxu0 0.0
    %613 = vmatpush.msra.mxu0 0.0
    %614 = vmatpush.msra.mxu0 0.0
    %615 = vmatpush.msra.mxu0 0.0
    %616 = vmatpush.msra.mxu0 0.0
    %617 = vmatpush.msra.mxu0 0.0
    %618 = vmatpush.msra.mxu0 0.0
    %619 = vmatpush.msra.mxu0 0.0
    %620 = vmatpush.msra.mxu0 0.0
    %621 = vmatpush.msra.mxu0 0.0
    %622 = vmatpush.msra.mxu0 0.0
    %623 = vmatpush.msra.mxu0 %v186
    %624 = vmatpush.msra.mxu0 %v185
    %625 = vmatpush.msra.mxu0 %v184
    %626 = vmatpush.msra.mxu0 %v183
    %627 = vmatmul.f32.gmra.mxu0 %v609
    %v628 = vpop.f32.mrf.mxu0
    %v629 = vadd.f32 0.0, %v628
    %630 = vdwg.mxu0
    %v632 = vrot.slane %v629, 7
    %v634 = vadd.f32 %v536, %v632
    %v635 = vxor.u32 %v634, 2147483648
    %v636 = vmul.f32 %v635, 1.442695
    %v637 = vpow.pop %v636
    %v638 = vadd.f32 %v637, 1.0
    %v639 = vrcp.pop %v638
    %v640 = vmul.f32 %v638, %v639
    %v641 = vsub.f32 1.0, %v640
    %v642 = vmul.f32 %v639, %v641
    %v643 = vadd.f32 %v639, %v642
    %vm644 = vweird.f32 %v638
    %vm645 = vweird.f32 %v639
    %vm646 = vmor %vm644, %vm645
    %v647 = vsel %vm646, %v639, %v643
    %v648 = vand.u32 2147483647, %v638
    %vm649 = vcmp.eq.f32.partialorder %v648, 8.507059e+37
    %v650 = vand.u32 %v638, 2147483648
    %v651 = vor.u32 1.1754944e-38, %v650
    %v652 = vsel %vm649, %v651, %v647
    %v653 = vmul.f32 1.0, %v652
    %v654 = vtanh.pop %v634
    %v656 = vrot.slane %v596, 7
    %v658 = vmul.f32 %v653, %v656
    %660 = vrot.lane.b32.xlu0 %v654, 64
    %v661 = vpop.permute.xlu0 %660
    %v663 = vmul.f32 %v653, %v661
    %665 = vrot.lane.b32.xlu0 %v663, 32
    %v666 = vpop.permute.xlu0 %665
    %v668 = vadd.f32 %v658, %v666
    %v669 = vtanh.pop %v668
    %671 = vrot.lane.b32.xlu0 %v669, 64
    %v672 = vpop.permute.xlu0 %671
    %v674 = vmul.f32 %v653, %v672
    %v675 = vperm.slane %v674, 1
    %v676 = vmul.f32 %v206, %v675
    %v677 = vadd.f32 %v605, %v676
    %v679 = vrot.slane %v674, 1
    %680 = vrot.lane.b32.xlu0 %v679, 32
    %v681 = vpop.permute.xlu0 %680
    %v682 = vsel %vm107, %v681, 0
    %684 = vmatpush.msra.mxu0 0.0
    %685 = vmatpush.msra.mxu0 0.0
    %686 = vmatpush.msra.mxu0 0.0
    %687 = vmatpush.msra.mxu0 0.0
    %688 = vmatpush.msra.mxu0 0.0
    %689 = vmatpush.msra.mxu0 0.0
    %690 = vmatpush.msra.mxu0 0.0
    %691 = vmatpush.msra.mxu0 0.0
    %692 = vmatpush.msra.mxu0 0.0
    %693 = vmatpush.msra.mxu0 0.0
    %694 = vmatpush.msra.mxu0 0.0
    %695 = vmatpush.msra.mxu0 0.0
    %696 = vmatpush.msra.mxu0 %v186
    %697 = vmatpush.msra.mxu0 %v185
    %698 = vmatpush.msra.mxu0 %v184
    %699 = vmatpush.msra.mxu0 %v183
    %700 = vmatmul.f32.gmra.mxu0 %v682
    %v701 = vpop.f32.mrf.mxu0
    %v702 = vadd.f32 0.0, %v701
    %703 = vdwg.mxu0
    %v705 = vrot.slane %v702, 6
    %v707 = vadd.f32 %v536, %v705
    %v708 = vxor.u32 %v707, 2147483648
    %v709 = vmul.f32 %v708, 1.442695
    %v710 = vpow.pop %v709
    %v711 = vadd.f32 %v710, 1.0
    %v712 = vrcp.pop %v711
    %v713 = vmul.f32 %v711, %v712
    %v714 = vsub.f32 1.0, %v713
    %v715 = vmul.f32 %v712, %v714
    %v716 = vadd.f32 %v712, %v715
    %vm717 = vweird.f32 %v711
    %vm718 = vweird.f32 %v712
    %vm719 = vmor %vm717, %vm718
    %v720 = vsel %vm719, %v712, %v716
    %v721 = vand.u32 2147483647, %v711
    %vm722 = vcmp.eq.f32.partialorder %v721, 8.507059e+37
    %v723 = vand.u32 %v711, 2147483648
    %v724 = vor.u32 1.1754944e-38, %v723
    %v725 = vsel %vm722, %v724, %v720
    %v726 = vmul.f32 1.0, %v725
    %v727 = vtanh.pop %v707
    %v729 = vrot.slane %v668, 7
    %v731 = vmul.f32 %v726, %v729
    %733 = vrot.lane.b32.xlu0 %v727, 64
    %v734 = vpop.permute.xlu0 %733
    %v736 = vmul.f32 %v726, %v734
    %738 = vrot.lane.b32.xlu0 %v736, 32
    %v739 = vpop.permute.xlu0 %738
    %v741 = vadd.f32 %v731, %v739
    %v742 = vtanh.pop %v741
    %744 = vrot.lane.b32.xlu0 %v742, 64
    %v745 = vpop.permute.xlu0 %744
    %v747 = vmul.f32 %v726, %v745
    %v748 = vperm.slane %v747, 2
    %v749 = vmul.f32 %v209, %v748
    %v750 = vadd.f32 %v677, %v749
    %v752 = vrot.slane %v747, 2
    %753 = vrot.lane.b32.xlu0 %v752, 32
    %v754 = vpop.permute.xlu0 %753
    %v755 = vsel %vm107, %v754, 0
    %757 = vmatpush.msra.mxu0 0.0
    %758 = vmatpush.msra.mxu0 0.0
    %759 = vmatpush.msra.mxu0 0.0
    %760 = vmatpush.msra.mxu0 0.0
    %761 = vmatpush.msra.mxu0 0.0
    %762 = vmatpush.msra.mxu0 0.0
    %763 = vmatpush.msra.mxu0 0.0
    %764 = vmatpush.msra.mxu0 0.0
    %765 = vmatpush.msra.mxu0 0.0
    %766 = vmatpush.msra.mxu0 0.0
    %767 = vmatpush.msra.mxu0 0.0
    %768 = vmatpush.msra.mxu0 0.0
    %769 = vmatpush.msra.mxu0 %v186
    %770 = vmatpush.msra.mxu0 %v185
    %771 = vmatpush.msra.mxu0 %v184
    %772 = vmatpush.msra.mxu0 %v183
    %773 = vmatmul.f32.gmra.mxu0 %v755
    %v774 = vpop.f32.mrf.mxu0
    %v775 = vadd.f32 0.0, %v774
    %776 = vdwg.mxu0
    %v778 = vrot.slane %v775, 5
    %v780 = vadd.f32 %v536, %v778
    %v781 = vxor.u32 %v780, 2147483648
    %v782 = vmul.f32 %v781, 1.442695
    %v783 = vpow.pop %v782
    %v784 = vadd.f32 %v783, 1.0
    %v785 = vrcp.pop %v784
    %v786 = vmul.f32 %v784, %v785
    %v787 = vsub.f32 1.0, %v786
    %v788 = vmul.f32 %v785, %v787
    %v789 = vadd.f32 %v785, %v788
    %vm790 = vweird.f32 %v784
    %vm791 = vweird.f32 %v785
    %vm792 = vmor %vm790, %vm791
    %v793 = vsel %vm792, %v785, %v789
    %v794 = vand.u32 2147483647, %v784
    %vm795 = vcmp.eq.f32.partialorder %v794, 8.507059e+37
    %v796 = vand.u32 %v784, 2147483648
    %v797 = vor.u32 1.1754944e-38, %v796
    %v798 = vsel %vm795, %v797, %v793
    %v799 = vmul.f32 1.0, %v798
    %v800 = vtanh.pop %v780
    %v802 = vrot.slane %v741, 7
    %v804 = vmul.f32 %v799, %v802
    %806 = vrot.lane.b32.xlu0 %v800, 64
    %v807 = vpop.permute.xlu0 %806
    %v809 = vmul.f32 %v799, %v807
    %811 = vrot.lane.b32.xlu0 %v809, 32
    %v812 = vpop.permute.xlu0 %811
    %v814 = vadd.f32 %v804, %v812
    %v815 = vtanh.pop %v814
    %817 = vrot.lane.b32.xlu0 %v815, 64
    %v818 = vpop.permute.xlu0 %817
    %v820 = vmul.f32 %v799, %v818
    %v821 = vperm.slane %v820, 3
    %v822 = vmul.f32 %v212, %v821
    %v823 = vadd.f32 %v750, %v822
    %vm824 = vcmask 1044224
    %v825 = vsel %vm824, %v823, 0.0
    %v826 = vrot.slane %v825, 4
    %v827 = vadd.f32 %v825, %v826
    %v828 = vrot.slane %v827, 2
    %v829 = vadd.f32 %v827, %v828
    %v830 = vrot.slane %v829, 1
    %v831 = vadd.f32 %v829, %v830
    %v832 = vrcp.pop 4.0
    %v833 = vmul.f32 4.0, %v832
    %v834 = vsub.f32 1.0, %v833
    %v835 = vmul.f32 %v832, %v834
    %v836 = vadd.f32 %v832, %v835
    %vm837 = vweird.f32 %v832
    %v838 = vsel %vm837, %v832, %v836
    %v839 = vmul.f32 %v831, %v838
    %v840 = vsub.f32 %v823, %v839
    %v841 = vmul.f32 %v840, %v840
    %v842 = vsel %vm824, %v841, 0.0
    %v843 = vrot.slane %v842, 4
    %v844 = vadd.f32 %v842, %v843
    %v845 = vrot.slane %v844, 2
    %v846 = vadd.f32 %v844, %v845
    %v847 = vrot.slane %v846, 1
    %v848 = vadd.f32 %v846, %v847
    %v849 = vmul.f32 %v848, %v838
    %v850 = vadd.f32 %v849, 1e-05
    %v851 = vrsqrt.pop %v850
    %v852 = vmul.f32 %v851, %v850
    %v853 = vmul.f32 %v852, %v851
    %v854 = vmul.f32 0.5, %v853
    %v855 = vsub.f32 1.5, %v854
    %v856 = vmul.f32 %v851, %v855
    %vm857 = vweird.f32 %v850
    %vm858 = vweird.f32 %v851
    %vm859 = vmor %vm857, %vm858
    %v860 = vsel %vm859, %v851, %v856
    %862 = vrot.lane.b32.xlu0 %v860, 32
    %v863 = vpop.permute.xlu0 %862
    %v865 = vmul.f32 %v192, %v863
    %v867 = vperm.slane %v865, 0
    %868 = vrot.lane.b32.xlu0 %v867, 96
    %v869 = vpop.permute.xlu0 %868
    %v871 = vmul.f32 %v840, %v869
    %v873 = vperm.slane %v193, 0
    %874 = vrot.lane.b32.xlu0 %v873, 96
    %v875 = vpop.permute.xlu0 %874
    %v877 = vadd.f32 %v871, %v875
    %v878 = vmul.f32 %v877, %v877
    %v879 = vsub.f32 0.0, %v878
    %v880 = vmul.f32 %v879, 1.442695
    %v881 = vpow.pop %v880
    %v883 = vperm.slane %v198, 0
    %886 = vrot.lane.b32.xlu0 %v881, 32
    %v887 = vpop.permute.xlu0 %886
    %v888 = vsel %vm107, %v887, 0
    %890 = vmatpush.msra.mxu0 0.0
    %891 = vmatpush.msra.mxu0 0.0
    %892 = vmatpush.msra.mxu0 0.0
    %893 = vmatpush.msra.mxu0 0.0
    %894 = vmatpush.msra.mxu0 0.0
    %895 = vmatpush.msra.mxu0 0.0
    %896 = vmatpush.msra.mxu0 0.0
    %897 = vmatpush.msra.mxu0 0.0
    %898 = vmatpush.msra.mxu0 0.0
    %899 = vmatpush.msra.mxu0 0.0
    %900 = vmatpush.msra.mxu0 0.0
    %901 = vmatpush.msra.mxu0 0.0
    %902 = vmatpush.msra.mxu0 %v197
    %903 = vmatpush.msra.mxu0 %v196
    %904 = vmatpush.msra.mxu0 %v195
    %905 = vmatpush.msra.mxu0 %v194
    %906 = vmatmul.f32.gmra.mxu0 %v888
    %v907 = vpop.f32.mrf.mxu0
    %v908 = vadd.f32 %v883, %v907
    %909 = vdwg.mxu0
    %v910 = vsel %vm215, 1, 0
    %vm911 = vcmp.eq.s32.totalorder %v910, 1
    %v912 = vsel %vm911, %v908, -1e+30
    %v913 = vsel %vm218, 1, 0
    %vm914 = vcmp.eq.s32.totalorder %v913, 1
    %v915 = vsel %vm914, %v908, -1e+30
    %vm916 = vcmask 1043456
    %v917 = vsel %vm916, %v912, -inf
    %918 = vmax.xlane.f32.xlu0 %v917
    %v919 = vpop.xlane.xlu0 %918
    %v920 = vsub.f32 %v912, %v919
    %v921 = vmul.f32 %v920, 1.442695
    %v922 = vpow.pop %v921
    %v923 = vsel %vm916, %v915, -inf
    %924 = vmax.xlane.f32.xlu0 %v923
    %v925 = vpop.xlane.xlu0 %924
    %v926 = vsub.f32 %v915, %v925
    %v927 = vmul.f32 %v926, 1.442695
    %v928 = vpow.pop %v927
    %v929 = vsel %vm916, %v922, 0.0
    %930 = vadd.xlane.f32.xlu0 %v929
    %v931 = vpop.xlane.xlu0 %930
    %v932 = vrcp.pop %v931
    %v933 = vmul.f32 %v931, %v932
    %v934 = vsub.f32 1.0, %v933
    %v935 = vmul.f32 %v932, %v934
    %v936 = vadd.f32 %v932, %v935
    %vm937 = vweird.f32 %v931
    %vm938 = vweird.f32 %v932
    %vm939 = vmor %vm937, %vm938
    %v940 = vsel %vm939, %v932, %v936
    %v941 = vand.u32 2147483647, %v931
    %vm942 = vcmp.eq.f32.partialorder %v941, 8.507059e+37
    %v943 = vand.u32 %v931, 2147483648
    %v944 = vor.u32 1.1754944e-38, %v943
    %v945 = vsel %vm942, %v944, %v940
    %v946 = vmul.f32 %v922, %v945
    %v947 = vsel %vm916, %v928, 0.0
    %948 = vadd.xlane.f32.xlu0 %v947
    %v949 = vpop.xlane.xlu0 %948
    %v950 = vrcp.pop %v949
    %v951 = vmul.f32 %v949, %v950
    %v952 = vsub.f32 1.0, %v951
    %v953 = vmul.f32 %v950, %v952
    %v954 = vadd.f32 %v950, %v953
    %vm955 = vweird.f32 %v949
    %vm956 = vweird.f32 %v950
    %vm957 = vmor %vm955, %vm956
    %v958 = vsel %vm957, %v950, %v954
    %v959 = vand.u32 2147483647, %v949
    %vm960 = vcmp.eq.f32.partialorder %v959, 8.507059e+37
    %v961 = vand.u32 %v949, 2147483648
    %v962 = vor.u32 1.1754944e-38, %v961
    %v963 = vsel %vm960, %v962, %v958
    %v964 = vmul.f32 %v928, %v963
    %v965 = vadd.f32 %v946, %v964
    %966 = vst [vmem:[%s16] sm:$0xf] %v965
    %v967 = vld [vmem:[%s175] sm:$0xf]
    %v969 = vrot.slane %v506, 3
    %970 = vrot.lane.b32.xlu0 %v969, 32
    %v971 = vpop.permute.xlu0 %970
    %v972 = vsel %vm107, %v971, 0
    %974 = vmatpush.msra.mxu0 0.0
    %975 = vmatpush.msra.mxu0 0.0
    %976 = vmatpush.msra.mxu0 0.0
    %977 = vmatpush.msra.mxu0 0.0
    %978 = vmatpush.msra.mxu0 0.0
    %979 = vmatpush.msra.mxu0 0.0
    %980 = vmatpush.msra.mxu0 0.0
    %981 = vmatpush.msra.mxu0 0.0
    %982 = vmatpush.msra.mxu0 0.0
    %983 = vmatpush.msra.mxu0 0.0
    %984 = vmatpush.msra.mxu0 0.0
    %985 = vmatpush.msra.mxu0 0.0
    %986 = vmatpush.msra.mxu0 %v182
    %987 = vmatpush.msra.mxu0 %v181
    %988 = vmatpush.msra.mxu0 %v180
    %989 = vmatpush.msra.mxu0 %v179
    %990 = vmatmul.f32.gmra.mxu0 %v972
    %v991 = vpop.f32.mrf.mxu0
    %v992 = vadd.f32 0.0, %v991
    %993 = vdwg.mxu0
    %v994 = vadd.f32 %v967, %v992
    %v995 = vxor.u32 %v994, 2147483648
    %v996 = vmul.f32 %v995, 1.442695
    %v997 = vpow.pop %v996
    %v998 = vadd.f32 %v997, 1.0
    %v999 = vrcp.pop %v998
    %v1000 = vmul.f32 %v998, %v999
    %v1001 = vsub.f32 1.0, %v1000
    %v1002 = vmul.f32 %v999, %v1001
    %v1003 = vadd.f32 %v999, %v1002
    %vm1004 = vweird.f32 %v998
    %vm1005 = vweird.f32 %v999
    %vm1006 = vmor %vm1004, %vm1005
    %v1007 = vsel %vm1006, %v999, %v1003
    %v1008 = vand.u32 2147483647, %v998
    %vm1009 = vcmp.eq.f32.partialorder %v1008, 8.507059e+37
    %v1010 = vand.u32 %v998, 2147483648
    %v1011 = vor.u32 1.1754944e-38, %v1010
    %v1012 = vsel %vm1009, %v1011, %v1007
    %v1013 = vmul.f32 1.0, %v1012
    %v1014 = vtanh.pop %v994
    %v1016 = vrot.slane %v500, 3
    %v1018 = vmul.f32 %v1013, %v1016
    %1020 = vrot.lane.b32.xlu0 %v1014, 64
    %v1021 = vpop.permute.xlu0 %1020
    %v1023 = vmul.f32 %v1013, %v1021
    %1025 = vrot.lane.b32.xlu0 %v1023, 32
    %v1026 = vpop.permute.xlu0 %1025
    %v1028 = vadd.f32 %v1018, %v1026
    %v1029 = vtanh.pop %v1028
    %1031 = vrot.lane.b32.xlu0 %v1029, 64
    %v1032 = vpop.permute.xlu0 %1031
    %v1034 = vmul.f32 %v1013, %v1032
    %v1035 = vperm.slane %v1034, 0
    %v1036 = vmul.f32 %v203, %v1035
    %v1037 = vadd.f32 %v1036, 0.0
    %1039 = vrot.lane.b32.xlu0 %v1034, 32
    %v1040 = vpop.permute.xlu0 %1039
    %v1041 = vsel %vm107, %v1040, 0
    %1043 = vmatpush.msra.mxu0 0.0
    %1044 = vmatpush.msra.mxu0 0.0
    %1045 = vmatpush.msra.mxu0 0.0
    %1046 = vmatpush.msra.mxu0 0.0
    %1047 = vmatpush.msra.mxu0 0.0
    %1048 = vmatpush.msra.mxu0 0.0
    %1049 = vmatpush.msra.mxu0 0.0
    %1050 = vmatpush.msra.mxu0 0.0
    %1051 = vmatpush.msra.mxu0 0.0
    %1052 = vmatpush.msra.mxu0 0.0
    %1053 = vmatpush.msra.mxu0 0.0
    %1054 = vmatpush.msra.mxu0 0.0
    %1055 = vmatpush.msra.mxu0 %v182
    %1056 = vmatpush.msra.mxu0 %v181
    %1057 = vmatpush.msra.mxu0 %v180
    %1058 = vmatpush.msra.mxu0 %v179
    %1059 = vmatmul.f32.gmra.mxu0 %v1041
    %v1060 = vpop.f32.mrf.mxu0
    %v1061 = vadd.f32 0.0, %v1060
    %1062 = vdwg.mxu0
    %v1064 = vrot.slane %v1061, 7
    %v1066 = vadd.f32 %v967, %v1064
    %v1067 = vxor.u32 %v1066, 2147483648
    %v1068 = vmul.f32 %v1067, 1.442695
    %v1069 = vpow.pop %v1068
    %v1070 = vadd.f32 %v1069, 1.0
    %v1071 = vrcp.pop %v1070
    %v1072 = vmul.f32 %v1070, %v1071
    %v1073 = vsub.f32 1.0, %v1072
    %v1074 = vmul.f32 %v1071, %v1073
    %v1075 = vadd.f32 %v1071, %v1074
    %vm1076 = vweird.f32 %v1070
    %vm1077 = vweird.f32 %v1071
    %vm1078 = vmor %vm1076, %vm1077
    %v1079 = vsel %vm1078, %v1071, %v1075
    %v1080 = vand.u32 2147483647, %v1070
    %vm1081 = vcmp.eq.f32.partialorder %v1080, 8.507059e+37
    %v1082 = vand.u32 %v1070, 2147483648
    %v1083 = vor.u32 1.1754944e-38, %v1082
    %v1084 = vsel %vm1081, %v1083, %v1079
    %v1085 = vmul.f32 1.0, %v1084
    %v1086 = vtanh.pop %v1066
    %v1088 = vrot.slane %v1028, 7
    %v1090 = vmul.f32 %v1085, %v1088
    %1092 = vrot.lane.b32.xlu0 %v1086, 64
    %v1093 = vpop.permute.xlu0 %1092
    %v1095 = vmul.f32 %v1085, %v1093
    %1097 = vrot.lane.b32.xlu0 %v1095, 32
    %v1098 = vpop.permute.xlu0 %1097
    %v1100 = vadd.f32 %v1090, %v1098
    %v1101 = vtanh.pop %v1100
    %1103 = vrot.lane.b32.xlu0 %v1101, 64
    %v1104 = vpop.permute.xlu0 %1103
    %v1106 = vmul.f32 %v1085, %v1104
    %v1107 = vperm.slane %v1106, 1
    %v1108 = vmul.f32 %v206, %v1107
    %v1109 = vadd.f32 %v1037, %v1108
    %v1111 = vrot.slane %v1106, 1
    %1112 = vrot.lane.b32.xlu0 %v1111, 32
    %v1113 = vpop.permute.xlu0 %1112
    %v1114 = vsel %vm107, %v1113, 0
    %1116 = vmatpush.msra.mxu0 0.0
    %1117 = vmatpush.msra.mxu0 0.0
    %1118 = vmatpush.msra.mxu0 0.0
    %1119 = vmatpush.msra.mxu0 0.0
    %1120 = vmatpush.msra.mxu0 0.0
    %1121 = vmatpush.msra.mxu0 0.0
    %1122 = vmatpush.msra.mxu0 0.0
    %1123 = vmatpush.msra.mxu0 0.0
    %1124 = vmatpush.msra.mxu0 0.0
    %1125 = vmatpush.msra.mxu0 0.0
    %1126 = vmatpush.msra.mxu0 0.0
    %1127 = vmatpush.msra.mxu0 0.0
    %1128 = vmatpush.msra.mxu0 %v182
    %1129 = vmatpush.msra.mxu0 %v181
    %1130 = vmatpush.msra.mxu0 %v180
    %1131 = vmatpush.msra.mxu0 %v179
    %1132 = vmatmul.f32.gmra.mxu0 %v1114
    %v1133 = vpop.f32.mrf.mxu0
    %v1134 = vadd.f32 0.0, %v1133
    %1135 = vdwg.mxu0
    %v1137 = vrot.slane %v1134, 6
    %v1139 = vadd.f32 %v967, %v1137
    %v1140 = vxor.u32 %v1139, 2147483648
    %v1141 = vmul.f32 %v1140, 1.442695
    %v1142 = vpow.pop %v1141
    %v1143 = vadd.f32 %v1142, 1.0
    %v1144 = vrcp.pop %v1143
    %v1145 = vmul.f32 %v1143, %v1144
    %v1146 = vsub.f32 1.0, %v1145
    %v1147 = vmul.f32 %v1144, %v1146
    %v1148 = vadd.f32 %v1144, %v1147
    %vm1149 = vweird.f32 %v1143
    %vm1150 = vweird.f32 %v1144
    %vm1151 = vmor %vm1149, %vm1150
    %v1152 = vsel %vm1151, %v1144, %v1148
    %v1153 = vand.u32 2147483647, %v1143
    %vm1154 = vcmp.eq.f32.partialorder %v1153, 8.507059e+37
    %v1155 = vand.u32 %v1143, 2147483648
    %v1156 = vor.u32 1.1754944e-38, %v1155
    %v1157 = vsel %vm1154, %v1156, %v1152
    %v1158 = vmul.f32 1.0, %v1157
    %v1159 = vtanh.pop %v1139
    %v1161 = vrot.slane %v1100, 7
    %v1163 = vmul.f32 %v1158, %v1161
    %1165 = vrot.lane.b32.xlu0 %v1159, 64
    %v1166 = vpop.permute.xlu0 %1165
    %v1168 = vmul.f32 %v1158, %v1166
    %1170 = vrot.lane.b32.xlu0 %v1168, 32
    %v1171 = vpop.permute.xlu0 %1170
    %v1173 = vadd.f32 %v1163, %v1171
    %v1174 = vtanh.pop %v1173
    %1176 = vrot.lane.b32.xlu0 %v1174, 64
    %v1177 = vpop.permute.xlu0 %1176
    %v1179 = vmul.f32 %v1158, %v1177
    %v1180 = vperm.slane %v1179, 2
    %v1181 = vmul.f32 %v209, %v1180
    %v1182 = vadd.f32 %v1109, %v1181
    %v1184 = vrot.slane %v1179, 2
    %1185 = vrot.lane.b32.xlu0 %v1184, 32
    %v1186 = vpop.permute.xlu0 %1185
    %v1187 = vsel %vm107, %v1186, 0
    %1189 = vmatpush.msra.mxu0 0.0
    %1190 = vmatpush.msra.mxu0 0.0
    %1191 = vmatpush.msra.mxu0 0.0
    %1192 = vmatpush.msra.mxu0 0.0
    %1193 = vmatpush.msra.mxu0 0.0
    %1194 = vmatpush.msra.mxu0 0.0
    %1195 = vmatpush.msra.mxu0 0.0
    %1196 = vmatpush.msra.mxu0 0.0
    %1197 = vmatpush.msra.mxu0 0.0
    %1198 = vmatpush.msra.mxu0 0.0
    %1199 = vmatpush.msra.mxu0 0.0
    %1200 = vmatpush.msra.mxu0 0.0
    %1201 = vmatpush.msra.mxu0 %v182
    %1202 = vmatpush.msra.mxu0 %v181
    %1203 = vmatpush.msra.mxu0 %v180
    %1204 = vmatpush.msra.mxu0 %v179
    %1205 = vmatmul.f32.gmra.mxu0 %v1187
    %v1206 = vpop.f32.mrf.mxu0
    %v1207 = vadd.f32 0.0, %v1206
    %1208 = vdwg.mxu0
    %v1210 = vrot.slane %v1207, 5
    %v1212 = vadd.f32 %v967, %v1210
    %v1213 = vxor.u32 %v1212, 2147483648
    %v1214 = vmul.f32 %v1213, 1.442695
    %v1215 = vpow.pop %v1214
    %v1216 = vadd.f32 %v1215, 1.0
    %v1217 = vrcp.pop %v1216
    %v1218 = vmul.f32 %v1216, %v1217
    %v1219 = vsub.f32 1.0, %v1218
    %v1220 = vmul.f32 %v1217, %v1219
    %v1221 = vadd.f32 %v1217, %v1220
    %vm1222 = vweird.f32 %v1216
    %vm1223 = vweird.f32 %v1217
    %vm1224 = vmor %vm1222, %vm1223
    %v1225 = vsel %vm1224, %v1217, %v1221
    %v1226 = vand.u32 2147483647, %v1216
    %vm1227 = vcmp.eq.f32.partialorder %v1226, 8.507059e+37
    %v1228 = vand.u32 %v1216, 2147483648
    %v1229 = vor.u32 1.1754944e-38, %v1228
    %v1230 = vsel %vm1227, %v1229, %v1225
    %v1231 = vmul.f32 1.0, %v1230
    %v1232 = vtanh.pop %v1212
    %v1234 = vrot.slane %v1173, 7
    %v1236 = vmul.f32 %v1231, %v1234
    %1238 = vrot.lane.b32.xlu0 %v1232, 64
    %v1239 = vpop.permute.xlu0 %1238
    %v1241 = vmul.f32 %v1231, %v1239
    %1243 = vrot.lane.b32.xlu0 %v1241, 32
    %v1244 = vpop.permute.xlu0 %1243
    %v1246 = vadd.f32 %v1236, %v1244
    %v1247 = vtanh.pop %v1246
    %1249 = vrot.lane.b32.xlu0 %v1247, 64
    %v1250 = vpop.permute.xlu0 %1249
    %v1252 = vmul.f32 %v1231, %v1250
    %v1253 = vperm.slane %v1252, 3
    %v1254 = vmul.f32 %v212, %v1253
    %v1255 = vadd.f32 %v1182, %v1254
    %1257 = vrot.lane.b32.xlu0 %v1255, 32
    %v1258 = vpop.permute.xlu0 %1257
    %v1259 = vsel %vm107, %v1258, 0
    %1261 = vmatpush.msra.mxu0 0.0
    %1262 = vmatpush.msra.mxu0 0.0
    %1263 = vmatpush.msra.mxu0 0.0
    %1264 = vmatpush.msra.mxu0 0.0
    %1265 = vmatpush.msra.mxu0 0.0
    %1266 = vmatpush.msra.mxu0 0.0
    %1267 = vmatpush.msra.mxu0 0.0
    %1268 = vmatpush.msra.mxu0 0.0
    %1269 = vmatpush.msra.mxu0 0.0
    %1270 = vmatpush.msra.mxu0 0.0
    %1271 = vmatpush.msra.mxu0 0.0
    %1272 = vmatpush.msra.mxu0 0.0
    %1273 = vmatpush.msra.mxu0 %v190
    %1274 = vmatpush.msra.mxu0 %v189
    %1275 = vmatpush.msra.mxu0 %v188
    %1276 = vmatpush.msra.mxu0 %v187
    %1277 = vmatmul.f32.gmra.mxu0 %v1259
    %v1278 = vpop.f32.mrf.mxu0
    %v1279 = vadd.f32 %v511, %v1278
    %1280 = vdwg.mxu0
    %v1282 = vrot.slane %v820, 3
    %1283 = vrot.lane.b32.xlu0 %v1282, 32
    %v1284 = vpop.permute.xlu0 %1283
    %v1285 = vsel %vm107, %v1284, 0
    %1287 = vmatpush.msra.mxu0 0.0
    %1288 = vmatpush.msra.mxu0 0.0
    %1289 = vmatpush.msra.mxu0 0.0
    %1290 = vmatpush.msra.mxu0 0.0
    %1291 = vmatpush.msra.mxu0 0.0
    %1292 = vmatpush.msra.mxu0 0.0
    %1293 = vmatpush.msra.mxu0 0.0
    %1294 = vmatpush.msra.mxu0 0.0
    %1295 = vmatpush.msra.mxu0 0.0
    %1296 = vmatpush.msra.mxu0 0.0
    %1297 = vmatpush.msra.mxu0 0.0
    %1298 = vmatpush.msra.mxu0 0.0
    %1299 = vmatpush.msra.mxu0 %v186
    %1300 = vmatpush.msra.mxu0 %v185
    %1301 = vmatpush.msra.mxu0 %v184
    %1302 = vmatpush.msra.mxu0 %v183
    %1303 = vmatmul.f32.gmra.mxu0 %v1285
    %v1304 = vpop.f32.mrf.mxu0
    %v1305 = vadd.f32 0.0, %v1304
    %1306 = vdwg.mxu0
    %v1307 = vadd.f32 %v1279, %v1305
    %v1308 = vxor.u32 %v1307, 2147483648
    %v1309 = vmul.f32 %v1308, 1.442695
    %v1310 = vpow.pop %v1309
    %v1311 = vadd.f32 %v1310, 1.0
    %v1312 = vrcp.pop %v1311
    %v1313 = vmul.f32 %v1311, %v1312
    %v1314 = vsub.f32 1.0, %v1313
    %v1315 = vmul.f32 %v1312, %v1314
    %v1316 = vadd.f32 %v1312, %v1315
    %vm1317 = vweird.f32 %v1311
    %vm1318 = vweird.f32 %v1312
    %vm1319 = vmor %vm1317, %vm1318
    %v1320 = vsel %vm1319, %v1312, %v1316
    %v1321 = vand.u32 2147483647, %v1311
    %vm1322 = vcmp.eq.f32.partialorder %v1321, 8.507059e+37
    %v1323 = vand.u32 %v1311, 2147483648
    %v1324 = vor.u32 1.1754944e-38, %v1323
    %v1325 = vsel %vm1322, %v1324, %v1320
    %v1326 = vmul.f32 1.0, %v1325
    %v1327 = vtanh.pop %v1307
    %v1329 = vrot.slane %v814, 3
    %v1331 = vmul.f32 %v1326, %v1329
    %1333 = vrot.lane.b32.xlu0 %v1327, 64
    %v1334 = vpop.permute.xlu0 %1333
    %v1336 = vmul.f32 %v1326, %v1334
    %1338 = vrot.lane.b32.xlu0 %v1336, 32
    %v1339 = vpop.permute.xlu0 %1338
    %v1341 = vadd.f32 %v1331, %v1339
    %v1342 = vtanh.pop %v1341
    %1344 = vrot.lane.b32.xlu0 %v1342, 64
    %v1345 = vpop.permute.xlu0 %1344
    %v1347 = vmul.f32 %v1326, %v1345
    %v1348 = vperm.slane %v1347, 0
    %v1349 = vmul.f32 %v203, %v1348
    %v1350 = vadd.f32 %v1349, 0.0
    %1352 = vrot.lane.b32.xlu0 %v1347, 32
    %v1353 = vpop.permute.xlu0 %1352
    %v1354 = vsel %vm107, %v1353, 0
    %1356 = vmatpush.msra.mxu0 0.0
    %1357 = vmatpush.msra.mxu0 0.0
    %1358 = vmatpush.msra.mxu0 0.0
    %1359 = vmatpush.msra.mxu0 0.0
    %1360 = vmatpush.msra.mxu0 0.0
    %1361 = vmatpush.msra.mxu0 0.0
    %1362 = vmatpush.msra.mxu0 0.0
    %1363 = vmatpush.msra.mxu0 0.0
    %1364 = vmatpush.msra.mxu0 0.0
    %1365 = vmatpush.msra.mxu0 0.0
    %1366 = vmatpush.msra.mxu0 0.0
    %1367 = vmatpush.msra.mxu0 0.0
    %1368 = vmatpush.msra.mxu0 %v186
    %1369 = vmatpush.msra.mxu0 %v185
    %1370 = vmatpush.msra.mxu0 %v184
    %1371 = vmatpush.msra.mxu0 %v183
    %1372 = vmatmul.f32.gmra.mxu0 %v1354
    %v1373 = vpop.f32.mrf.mxu0
    %v1374 = vadd.f32 0.0, %v1373
    %1375 = vdwg.mxu0
    %v1377 = vrot.slane %v1374, 7
    %v1379 = vadd.f32 %v1279, %v1377
    %v1380 = vxor.u32 %v1379, 2147483648
    %v1381 = vmul.f32 %v1380, 1.442695
    %v1382 = vpow.pop %v1381
    %v1383 = vadd.f32 %v1382, 1.0
    %v1384 = vrcp.pop %v1383
    %v1385 = vmul.f32 %v1383, %v1384
    %v1386 = vsub.f32 1.0, %v1385
    %v1387 = vmul.f32 %v1384, %v1386
    %v1388 = vadd.f32 %v1384, %v1387
    %vm1389 = vweird.f32 %v1383
    %vm1390 = vweird.f32 %v1384
    %vm1391 = vmor %vm1389, %vm1390
    %v1392 = vsel %vm1391, %v1384, %v1388
    %v1393 = vand.u32 2147483647, %v1383
    %vm1394 = vcmp.eq.f32.partialorder %v1393, 8.507059e+37
    %v1395 = vand.u32 %v1383, 2147483648
    %v1396 = vor.u32 1.1754944e-38, %v1395
    %v1397 = vsel %vm1394, %v1396, %v1392
    %v1398 = vmul.f32 1.0, %v1397
    %v1399 = vtanh.pop %v1379
    %v1401 = vrot.slane %v1341, 7
    %v1403 = vmul.f32 %v1398, %v1401
    %1405 = vrot.lane.b32.xlu0 %v1399, 64
    %v1406 = vpop.permute.xlu0 %1405
    %v1408 = vmul.f32 %v1398, %v1406
    %1410 = vrot.lane.b32.xlu0 %v1408, 32
    %v1411 = vpop.permute.xlu0 %1410
    %v1413 = vadd.f32 %v1403, %v1411
    %v1414 = vtanh.pop %v1413
    %1416 = vrot.lane.b32.xlu0 %v1414, 64
    %v1417 = vpop.permute.xlu0 %1416
    %v1419 = vmul.f32 %v1398, %v1417
    %v1420 = vperm.slane %v1419, 1
    %v1421 = vmul.f32 %v206, %v1420
    %v1422 = vadd.f32 %v1350, %v1421
    %v1424 = vrot.slane %v1419, 1
    %1425 = vrot.lane.b32.xlu0 %v1424, 32
    %v1426 = vpop.permute.xlu0 %1425
    %v1427 = vsel %vm107, %v1426, 0
    %1429 = vmatpush.msra.mxu0 0.0
    %1430 = vmatpush.msra.mxu0 0.0
    %1431 = vmatpush.msra.mxu0 0.0
    %1432 = vmatpush.msra.mxu0 0.0
    %1433 = vmatpush.msra.mxu0 0.0
    %1434 = vmatpush.msra.mxu0 0.0
    %1435 = vmatpush.msra.mxu0 0.0
    %1436 = vmatpush.msra.mxu0 0.0
    %1437 = vmatpush.msra.mxu0 0.0
    %1438 = vmatpush.msra.mxu0 0.0
    %1439 = vmatpush.msra.mxu0 0.0
    %1440 = vmatpush.msra.mxu0 0.0
    %1441 = vmatpush.msra.mxu0 %v186
    %1442 = vmatpush.msra.mxu0 %v185
    %1443 = vmatpush.msra.mxu0 %v184
    %1444 = vmatpush.msra.mxu0 %v183
    %1445 = vmatmul.f32.gmra.mxu0 %v1427
    %v1446 = vpop.f32.mrf.mxu0
    %v1447 = vadd.f32 0.0, %v1446
    %1448 = vdwg.mxu0
    %v1450 = vrot.slane %v1447, 6
    %v1452 = vadd.f32 %v1279, %v1450
    %v1453 = vxor.u32 %v1452, 2147483648
    %v1454 = vmul.f32 %v1453, 1.442695
    %v1455 = vpow.pop %v1454
    %v1456 = vadd.f32 %v1455, 1.0
    %v1457 = vrcp.pop %v1456
    %v1458 = vmul.f32 %v1456, %v1457
    %v1459 = vsub.f32 1.0, %v1458
    %v1460 = vmul.f32 %v1457, %v1459
    %v1461 = vadd.f32 %v1457, %v1460
    %vm1462 = vweird.f32 %v1456
    %vm1463 = vweird.f32 %v1457
    %vm1464 = vmor %vm1462, %vm1463
    %v1465 = vsel %vm1464, %v1457, %v1461
    %v1466 = vand.u32 2147483647, %v1456
    %vm1467 = vcmp.eq.f32.partialorder %v1466, 8.507059e+37
    %v1468 = vand.u32 %v1456, 2147483648
    %v1469 = vor.u32 1.1754944e-38, %v1468
    %v1470 = vsel %vm1467, %v1469, %v1465
    %v1471 = vmul.f32 1.0, %v1470
    %v1472 = vtanh.pop %v1452
    %v1474 = vrot.slane %v1413, 7
    %v1476 = vmul.f32 %v1471, %v1474
    %1478 = vrot.lane.b32.xlu0 %v1472, 64
    %v1479 = vpop.permute.xlu0 %1478
    %v1481 = vmul.f32 %v1471, %v1479
    %1483 = vrot.lane.b32.xlu0 %v1481, 32
    %v1484 = vpop.permute.xlu0 %1483
    %v1486 = vadd.f32 %v1476, %v1484
    %v1487 = vtanh.pop %v1486
    %1489 = vrot.lane.b32.xlu0 %v1487, 64
    %v1490 = vpop.permute.xlu0 %1489
    %v1492 = vmul.f32 %v1471, %v1490
    %v1493 = vperm.slane %v1492, 2
    %v1494 = vmul.f32 %v209, %v1493
    %v1495 = vadd.f32 %v1422, %v1494
    %v1497 = vrot.slane %v1492, 2
    %1498 = vrot.lane.b32.xlu0 %v1497, 32
    %v1499 = vpop.permute.xlu0 %1498
    %v1500 = vsel %vm107, %v1499, 0
    %1502 = vmatpush.msra.mxu0 0.0
    %1503 = vmatpush.msra.mxu0 0.0
    %1504 = vmatpush.msra.mxu0 0.0
    %1505 = vmatpush.msra.mxu0 0.0
    %1506 = vmatpush.msra.mxu0 0.0
    %1507 = vmatpush.msra.mxu0 0.0
    %1508 = vmatpush.msra.mxu0 0.0
    %1509 = vmatpush.msra.mxu0 0.0
    %1510 = vmatpush.msra.mxu0 0.0
    %1511 = vmatpush.msra.mxu0 0.0
    %1512 = vmatpush.msra.mxu0 0.0
    %1513 = vmatpush.msra.mxu0 0.0
    %1514 = vmatpush.msra.mxu0 %v186
    %1515 = vmatpush.msra.mxu0 %v185
    %1516 = vmatpush.msra.mxu0 %v184
    %1517 = vmatpush.msra.mxu0 %v183
    %1518 = vmatmul.f32.gmra.mxu0 %v1500
    %v1519 = vpop.f32.mrf.mxu0
    %v1520 = vadd.f32 0.0, %v1519
    %1521 = vdwg.mxu0
    %v1523 = vrot.slane %v1520, 5
    %v1525 = vadd.f32 %v1279, %v1523
    %v1526 = vxor.u32 %v1525, 2147483648
    %v1527 = vmul.f32 %v1526, 1.442695
    %v1528 = vpow.pop %v1527
    %v1529 = vadd.f32 %v1528, 1.0
    %v1530 = vrcp.pop %v1529
    %v1531 = vmul.f32 %v1529, %v1530
    %v1532 = vsub.f32 1.0, %v1531
    %v1533 = vmul.f32 %v1530, %v1532
    %v1534 = vadd.f32 %v1530, %v1533
    %vm1535 = vweird.f32 %v1529
    %vm1536 = vweird.f32 %v1530
    %vm1537 = vmor %vm1535, %vm1536
    %v1538 = vsel %vm1537, %v1530, %v1534
    %v1539 = vand.u32 2147483647, %v1529
    %vm1540 = vcmp.eq.f32.partialorder %v1539, 8.507059e+37
    %v1541 = vand.u32 %v1529, 2147483648
    %v1542 = vor.u32 1.1754944e-38, %v1541
    %v1543 = vsel %vm1540, %v1542, %v1538
    %v1544 = vmul.f32 1.0, %v1543
    %v1545 = vtanh.pop %v1525
    %v1547 = vrot.slane %v1486, 7
    %v1549 = vmul.f32 %v1544, %v1547
    %1551 = vrot.lane.b32.xlu0 %v1545, 64
    %v1552 = vpop.permute.xlu0 %1551
    %v1554 = vmul.f32 %v1544, %v1552
    %1556 = vrot.lane.b32.xlu0 %v1554, 32
    %v1557 = vpop.permute.xlu0 %1556
    %v1559 = vadd.f32 %v1549, %v1557
    %v1560 = vtanh.pop %v1559
    %1562 = vrot.lane.b32.xlu0 %v1560, 64
    %v1563 = vpop.permute.xlu0 %1562
    %v1565 = vmul.f32 %v1544, %v1563
    %v1566 = vperm.slane %v1565, 3
    %v1567 = vmul.f32 %v212, %v1566
    %v1568 = vadd.f32 %v1495, %v1567
    %v1569 = vsel %vm824, %v1568, 0.0
    %v1570 = vrot.slane %v1569, 4
    %v1571 = vadd.f32 %v1569, %v1570
    %v1572 = vrot.slane %v1571, 2
    %v1573 = vadd.f32 %v1571, %v1572
    %v1574 = vrot.slane %v1573, 1
    %v1575 = vadd.f32 %v1573, %v1574
    %v1576 = vmul.f32 %v1575, %v838
    %v1577 = vsub.f32 %v1568, %v1576
    %v1578 = vmul.f32 %v1577, %v1577
    %v1579 = vsel %vm824, %v1578, 0.0
    %v1580 = vrot.slane %v1579, 4
    %v1581 = vadd.f32 %v1579, %v1580
    %v1582 = vrot.slane %v1581, 2
    %v1583 = vadd.f32 %v1581, %v1582
    %v1584 = vrot.slane %v1583, 1
    %v1585 = vadd.f32 %v1583, %v1584
    %v1586 = vmul.f32 %v1585, %v838
    %v1587 = vadd.f32 %v1586, 1e-05
    %v1588 = vrsqrt.pop %v1587
    %v1589 = vmul.f32 %v1588, %v1587
    %v1590 = vmul.f32 %v1589, %v1588
    %v1591 = vmul.f32 0.5, %v1590
    %v1592 = vsub.f32 1.5, %v1591
    %v1593 = vmul.f32 %v1588, %v1592
    %vm1594 = vweird.f32 %v1587
    %vm1595 = vweird.f32 %v1588
    %vm1596 = vmor %vm1594, %vm1595
    %v1597 = vsel %vm1596, %v1588, %v1593
    %1599 = vrot.lane.b32.xlu0 %v1597, 32
    %v1600 = vpop.permute.xlu0 %1599
    %v1602 = vmul.f32 %v192, %v1600
    %v1604 = vperm.slane %v1602, 0
    %1605 = vrot.lane.b32.xlu0 %v1604, 96
    %v1606 = vpop.permute.xlu0 %1605
    %v1608 = vmul.f32 %v1577, %v1606
    %v1609 = vadd.f32 %v1608, %v875
    %v1610 = vmul.f32 %v1609, %v1609
    %v1611 = vsub.f32 0.0, %v1610
    %v1612 = vmul.f32 %v1611, 1.442695
    %v1613 = vpow.pop %v1612
    %1615 = vrot.lane.b32.xlu0 %v1613, 32
    %v1616 = vpop.permute.xlu0 %1615
    %v1617 = vsel %vm107, %v1616, 0
    %1619 = vmatpush.msra.mxu0 0.0
    %1620 = vmatpush.msra.mxu0 0.0
    %1621 = vmatpush.msra.mxu0 0.0
    %1622 = vmatpush.msra.mxu0 0.0
    %1623 = vmatpush.msra.mxu0 0.0
    %1624 = vmatpush.msra.mxu0 0.0
    %1625 = vmatpush.msra.mxu0 0.0
    %1626 = vmatpush.msra.mxu0 0.0
    %1627 = vmatpush.msra.mxu0 0.0
    %1628 = vmatpush.msra.mxu0 0.0
    %1629 = vmatpush.msra.mxu0 0.0
    %1630 = vmatpush.msra.mxu0 0.0
    %1631 = vmatpush.msra.mxu0 %v197
    %1632 = vmatpush.msra.mxu0 %v196
    %1633 = vmatpush.msra.mxu0 %v195
    %1634 = vmatpush.msra.mxu0 %v194
    %1635 = vmatmul.f32.gmra.mxu0 %v1617
    %v1636 = vpop.f32.mrf.mxu0
    %v1637 = vadd.f32 %v883, %v1636
    %1638 = vdwg.mxu0
    %v1639 = vsel %vm911, %v1637, -1e+30
    %v1640 = vsel %vm914, %v1637, -1e+30
    %v1641 = vsel %vm916, %v1639, -inf
    %1642 = vmax.xlane.f32.xlu0 %v1641
    %v1643 = vpop.xlane.xlu0 %1642
    %v1644 = vsub.f32 %v1639, %v1643
    %v1645 = vmul.f32 %v1644, 1.442695
    %v1646 = vpow.pop %v1645
    %v1647 = vsel %vm916, %v1640, -inf
    %1648 = vmax.xlane.f32.xlu0 %v1647
    %v1649 = vpop.xlane.xlu0 %1648
    %v1650 = vsub.f32 %v1640, %v1649
    %v1651 = vmul.f32 %v1650, 1.442695
    %v1652 = vpow.pop %v1651
    %v1653 = vsel %vm916, %v1646, 0.0
    %1654 = vadd.xlane.f32.xlu0 %v1653
    %v1655 = vpop.xlane.xlu0 %1654
    %v1656 = vrcp.pop %v1655
    %v1657 = vmul.f32 %v1655, %v1656
    %v1658 = vsub.f32 1.0, %v1657
    %v1659 = vmul.f32 %v1656, %v1658
    %v1660 = vadd.f32 %v1656, %v1659
    %vm1661 = vweird.f32 %v1655
    %vm1662 = vweird.f32 %v1656
    %vm1663 = vmor %vm1661, %vm1662
    %v1664 = vsel %vm1663, %v1656, %v1660
    %v1665 = vand.u32 2147483647, %v1655
    %vm1666 = vcmp.eq.f32.partialorder %v1665, 8.507059e+37
    %v1667 = vand.u32 %v1655, 2147483648
    %v1668 = vor.u32 1.1754944e-38, %v1667
    %v1669 = vsel %vm1666, %v1668, %v1664
    %v1670 = vmul.f32 %v1646, %v1669
    %v1671 = vsel %vm916, %v1652, 0.0
    %1672 = vadd.xlane.f32.xlu0 %v1671
    %v1673 = vpop.xlane.xlu0 %1672
    %v1674 = vrcp.pop %v1673
    %v1675 = vmul.f32 %v1673, %v1674
    %v1676 = vsub.f32 1.0, %v1675
    %v1677 = vmul.f32 %v1674, %v1676
    %v1678 = vadd.f32 %v1674, %v1677
    %vm1679 = vweird.f32 %v1673
    %vm1680 = vweird.f32 %v1674
    %vm1681 = vmor %vm1679, %vm1680
    %v1682 = vsel %vm1681, %v1674, %v1678
    %v1683 = vand.u32 2147483647, %v1673
    %vm1684 = vcmp.eq.f32.partialorder %v1683, 8.507059e+37
    %v1685 = vand.u32 %v1673, 2147483648
    %v1686 = vor.u32 1.1754944e-38, %v1685
    %v1687 = vsel %vm1684, %v1686, %v1682
    %v1688 = vmul.f32 %v1652, %v1687
    %v1689 = vadd.f32 %v1670, %v1688
    %s1690 = scalar_lea.vmem %s16, 4
    %1691 = vst [vmem:[%s1690] sm:$0xf] %v1689
    %v1692 = vld [vmem:[%s177] sm:$0xf]
    %v1694 = vrot.slane %v1252, 3
    %1695 = vrot.lane.b32.xlu0 %v1694, 32
    %v1696 = vpop.permute.xlu0 %1695
    %v1697 = vsel %vm107, %v1696, 0
    %1699 = vmatpush.msra.mxu0 0.0
    %1700 = vmatpush.msra.mxu0 0.0
    %1701 = vmatpush.msra.mxu0 0.0
    %1702 = vmatpush.msra.mxu0 0.0
    %1703 = vmatpush.msra.mxu0 0.0
    %1704 = vmatpush.msra.mxu0 0.0
    %1705 = vmatpush.msra.mxu0 0.0
    %1706 = vmatpush.msra.mxu0 0.0
    %1707 = vmatpush.msra.mxu0 0.0
    %1708 = vmatpush.msra.mxu0 0.0
    %1709 = vmatpush.msra.mxu0 0.0
    %1710 = vmatpush.msra.mxu0 0.0
    %1711 = vmatpush.msra.mxu0 %v182
    %1712 = vmatpush.msra.mxu0 %v181
    %1713 = vmatpush.msra.mxu0 %v180
    %1714 = vmatpush.msra.mxu0 %v179
    %1715 = vmatmul.f32.gmra.mxu0 %v1697
    %v1716 = vpop.f32.mrf.mxu0
    %v1717 = vadd.f32 0.0, %v1716
    %1718 = vdwg.mxu0
    %v1719 = vadd.f32 %v1692, %v1717
    %v1720 = vxor.u32 %v1719, 2147483648
    %v1721 = vmul.f32 %v1720, 1.442695
    %v1722 = vpow.pop %v1721
    %v1723 = vadd.f32 %v1722, 1.0
    %v1724 = vrcp.pop %v1723
    %v1725 = vmul.f32 %v1723, %v1724
    %v1726 = vsub.f32 1.0, %v1725
    %v1727 = vmul.f32 %v1724, %v1726
    %v1728 = vadd.f32 %v1724, %v1727
    %vm1729 = vweird.f32 %v1723
    %vm1730 = vweird.f32 %v1724
    %vm1731 = vmor %vm1729, %vm1730
    %v1732 = vsel %vm1731, %v1724, %v1728
    %v1733 = vand.u32 2147483647, %v1723
    %vm1734 = vcmp.eq.f32.partialorder %v1733, 8.507059e+37
    %v1735 = vand.u32 %v1723, 2147483648
    %v1736 = vor.u32 1.1754944e-38, %v1735
    %v1737 = vsel %vm1734, %v1736, %v1732
    %v1738 = vmul.f32 1.0, %v1737
    %v1739 = vtanh.pop %v1719
    %v1741 = vrot.slane %v1246, 3
    %v1743 = vmul.f32 %v1738, %v1741
    %1745 = vrot.lane.b32.xlu0 %v1739, 64
    %v1746 = vpop.permute.xlu0 %1745
    %v1748 = vmul.f32 %v1738, %v1746
    %1750 = vrot.lane.b32.xlu0 %v1748, 32
    %v1751 = vpop.permute.xlu0 %1750
    %v1753 = vadd.f32 %v1743, %v1751
    %v1754 = vtanh.pop %v1753
    %1756 = vrot.lane.b32.xlu0 %v1754, 64
    %v1757 = vpop.permute.xlu0 %1756
    %v1759 = vmul.f32 %v1738, %v1757
    %v1760 = vperm.slane %v1759, 0
    %v1761 = vmul.f32 %v203, %v1760
    %v1762 = vadd.f32 %v1761, 0.0
    %1764 = vrot.lane.b32.xlu0 %v1759, 32
    %v1765 = vpop.permute.xlu0 %1764
    %v1766 = vsel %vm107, %v1765, 0
    %1768 = vmatpush.msra.mxu0 0.0
    %1769 = vmatpush.msra.mxu0 0.0
    %1770 = vmatpush.msra.mxu0 0.0
    %1771 = vmatpush.msra.mxu0 0.0
    %1772 = vmatpush.msra.mxu0 0.0
    %1773 = vmatpush.msra.mxu0 0.0
    %1774 = vmatpush.msra.mxu0 0.0
    %1775 = vmatpush.msra.mxu0 0.0
    %1776 = vmatpush.msra.mxu0 0.0
    %1777 = vmatpush.msra.mxu0 0.0
    %1778 = vmatpush.msra.mxu0 0.0
    %1779 = vmatpush.msra.mxu0 0.0
    %1780 = vmatpush.msra.mxu0 %v182
    %1781 = vmatpush.msra.mxu0 %v181
    %1782 = vmatpush.msra.mxu0 %v180
    %1783 = vmatpush.msra.mxu0 %v179
    %1784 = vmatmul.f32.gmra.mxu0 %v1766
    %v1785 = vpop.f32.mrf.mxu0
    %v1786 = vadd.f32 0.0, %v1785
    %1787 = vdwg.mxu0
    %v1789 = vrot.slane %v1786, 7
    %v1791 = vadd.f32 %v1692, %v1789
    %v1792 = vxor.u32 %v1791, 2147483648
    %v1793 = vmul.f32 %v1792, 1.442695
    %v1794 = vpow.pop %v1793
    %v1795 = vadd.f32 %v1794, 1.0
    %v1796 = vrcp.pop %v1795
    %v1797 = vmul.f32 %v1795, %v1796
    %v1798 = vsub.f32 1.0, %v1797
    %v1799 = vmul.f32 %v1796, %v1798
    %v1800 = vadd.f32 %v1796, %v1799
    %vm1801 = vweird.f32 %v1795
    %vm1802 = vweird.f32 %v1796
    %vm1803 = vmor %vm1801, %vm1802
    %v1804 = vsel %vm1803, %v1796, %v1800
    %v1805 = vand.u32 2147483647, %v1795
    %vm1806 = vcmp.eq.f32.partialorder %v1805, 8.507059e+37
    %v1807 = vand.u32 %v1795, 2147483648
    %v1808 = vor.u32 1.1754944e-38, %v1807
    %v1809 = vsel %vm1806, %v1808, %v1804
    %v1810 = vmul.f32 1.0, %v1809
    %v1811 = vtanh.pop %v1791
    %v1813 = vrot.slane %v1753, 7
    %v1815 = vmul.f32 %v1810, %v1813
    %1817 = vrot.lane.b32.xlu0 %v1811, 64
    %v1818 = vpop.permute.xlu0 %1817
    %v1820 = vmul.f32 %v1810, %v1818
    %1822 = vrot.lane.b32.xlu0 %v1820, 32
    %v1823 = vpop.permute.xlu0 %1822
    %v1825 = vadd.f32 %v1815, %v1823
    %v1826 = vtanh.pop %v1825
    %1828 = vrot.lane.b32.xlu0 %v1826, 64
    %v1829 = vpop.permute.xlu0 %1828
    %v1831 = vmul.f32 %v1810, %v1829
    %v1832 = vperm.slane %v1831, 1
    %v1833 = vmul.f32 %v206, %v1832
    %v1834 = vadd.f32 %v1762, %v1833
    %v1836 = vrot.slane %v1831, 1
    %1837 = vrot.lane.b32.xlu0 %v1836, 32
    %v1838 = vpop.permute.xlu0 %1837
    %v1839 = vsel %vm107, %v1838, 0
    %1841 = vmatpush.msra.mxu0 0.0
    %1842 = vmatpush.msra.mxu0 0.0
    %1843 = vmatpush.msra.mxu0 0.0
    %1844 = vmatpush.msra.mxu0 0.0
    %1845 = vmatpush.msra.mxu0 0.0
    %1846 = vmatpush.msra.mxu0 0.0
    %1847 = vmatpush.msra.mxu0 0.0
    %1848 = vmatpush.msra.mxu0 0.0
    %1849 = vmatpush.msra.mxu0 0.0
    %1850 = vmatpush.msra.mxu0 0.0
    %1851 = vmatpush.msra.mxu0 0.0
    %1852 = vmatpush.msra.mxu0 0.0
    %1853 = vmatpush.msra.mxu0 %v182
    %1854 = vmatpush.msra.mxu0 %v181
    %1855 = vmatpush.msra.mxu0 %v180
    %1856 = vmatpush.msra.mxu0 %v179
    %1857 = vmatmul.f32.gmra.mxu0 %v1839
    %v1858 = vpop.f32.mrf.mxu0
    %v1859 = vadd.f32 0.0, %v1858
    %1860 = vdwg.mxu0
    %v1862 = vrot.slane %v1859, 6
    %v1864 = vadd.f32 %v1692, %v1862
    %v1865 = vxor.u32 %v1864, 2147483648
    %v1866 = vmul.f32 %v1865, 1.442695
    %v1867 = vpow.pop %v1866
    %v1868 = vadd.f32 %v1867, 1.0
    %v1869 = vrcp.pop %v1868
    %v1870 = vmul.f32 %v1868, %v1869
    %v1871 = vsub.f32 1.0, %v1870
    %v1872 = vmul.f32 %v1869, %v1871
    %v1873 = vadd.f32 %v1869, %v1872
    %vm1874 = vweird.f32 %v1868
    %vm1875 = vweird.f32 %v1869
    %vm1876 = vmor %vm1874, %vm1875
    %v1877 = vsel %vm1876, %v1869, %v1873
    %v1878 = vand.u32 2147483647, %v1868
    %vm1879 = vcmp.eq.f32.partialorder %v1878, 8.507059e+37
    %v1880 = vand.u32 %v1868, 2147483648
    %v1881 = vor.u32 1.1754944e-38, %v1880
    %v1882 = vsel %vm1879, %v1881, %v1877
    %v1883 = vmul.f32 1.0, %v1882
    %v1884 = vtanh.pop %v1864
    %v1886 = vrot.slane %v1825, 7
    %v1888 = vmul.f32 %v1883, %v1886
    %1890 = vrot.lane.b32.xlu0 %v1884, 64
    %v1891 = vpop.permute.xlu0 %1890
    %v1893 = vmul.f32 %v1883, %v1891
    %1895 = vrot.lane.b32.xlu0 %v1893, 32
    %v1896 = vpop.permute.xlu0 %1895
    %v1898 = vadd.f32 %v1888, %v1896
    %v1899 = vtanh.pop %v1898
    %1901 = vrot.lane.b32.xlu0 %v1899, 64
    %v1902 = vpop.permute.xlu0 %1901
    %v1904 = vmul.f32 %v1883, %v1902
    %v1905 = vperm.slane %v1904, 2
    %v1906 = vmul.f32 %v209, %v1905
    %v1907 = vadd.f32 %v1834, %v1906
    %v1909 = vrot.slane %v1904, 2
    %1910 = vrot.lane.b32.xlu0 %v1909, 32
    %v1911 = vpop.permute.xlu0 %1910
    %v1912 = vsel %vm107, %v1911, 0
    %1914 = vmatpush.msra.mxu0 0.0
    %1915 = vmatpush.msra.mxu0 0.0
    %1916 = vmatpush.msra.mxu0 0.0
    %1917 = vmatpush.msra.mxu0 0.0
    %1918 = vmatpush.msra.mxu0 0.0
    %1919 = vmatpush.msra.mxu0 0.0
    %1920 = vmatpush.msra.mxu0 0.0
    %1921 = vmatpush.msra.mxu0 0.0
    %1922 = vmatpush.msra.mxu0 0.0
    %1923 = vmatpush.msra.mxu0 0.0
    %1924 = vmatpush.msra.mxu0 0.0
    %1925 = vmatpush.msra.mxu0 0.0
    %1926 = vmatpush.msra.mxu0 %v182
    %1927 = vmatpush.msra.mxu0 %v181
    %1928 = vmatpush.msra.mxu0 %v180
    %1929 = vmatpush.msra.mxu0 %v179
    %1930 = vmatmul.f32.gmra.mxu0 %v1912
    %v1931 = vpop.f32.mrf.mxu0
    %v1932 = vadd.f32 0.0, %v1931
    %1933 = vdwg.mxu0
    %v1935 = vrot.slane %v1932, 5
    %v1937 = vadd.f32 %v1692, %v1935
    %v1938 = vxor.u32 %v1937, 2147483648
    %v1939 = vmul.f32 %v1938, 1.442695
    %v1940 = vpow.pop %v1939
    %v1941 = vadd.f32 %v1940, 1.0
    %v1942 = vrcp.pop %v1941
    %v1943 = vmul.f32 %v1941, %v1942
    %v1944 = vsub.f32 1.0, %v1943
    %v1945 = vmul.f32 %v1942, %v1944
    %v1946 = vadd.f32 %v1942, %v1945
    %vm1947 = vweird.f32 %v1941
    %vm1948 = vweird.f32 %v1942
    %vm1949 = vmor %vm1947, %vm1948
    %v1950 = vsel %vm1949, %v1942, %v1946
    %v1951 = vand.u32 2147483647, %v1941
    %vm1952 = vcmp.eq.f32.partialorder %v1951, 8.507059e+37
    %v1953 = vand.u32 %v1941, 2147483648
    %v1954 = vor.u32 1.1754944e-38, %v1953
    %v1955 = vsel %vm1952, %v1954, %v1950
    %v1956 = vmul.f32 1.0, %v1955
    %v1957 = vtanh.pop %v1937
    %v1959 = vrot.slane %v1898, 7
    %v1961 = vmul.f32 %v1956, %v1959
    %1963 = vrot.lane.b32.xlu0 %v1957, 64
    %v1964 = vpop.permute.xlu0 %1963
    %v1966 = vmul.f32 %v1956, %v1964
    %1968 = vrot.lane.b32.xlu0 %v1966, 32
    %v1969 = vpop.permute.xlu0 %1968
    %v1971 = vadd.f32 %v1961, %v1969
    %v1972 = vtanh.pop %v1971
    %1974 = vrot.lane.b32.xlu0 %v1972, 64
    %v1975 = vpop.permute.xlu0 %1974
    %v1977 = vmul.f32 %v1956, %v1975
    %v1978 = vperm.slane %v1977, 3
    %v1979 = vmul.f32 %v212, %v1978
    %v1980 = vadd.f32 %v1907, %v1979
    %1982 = vrot.lane.b32.xlu0 %v1980, 32
    %v1983 = vpop.permute.xlu0 %1982
    %v1984 = vsel %vm107, %v1983, 0
    %1986 = vmatpush.msra.mxu0 0.0
    %1987 = vmatpush.msra.mxu0 0.0
    %1988 = vmatpush.msra.mxu0 0.0
    %1989 = vmatpush.msra.mxu0 0.0
    %1990 = vmatpush.msra.mxu0 0.0
    %1991 = vmatpush.msra.mxu0 0.0
    %1992 = vmatpush.msra.mxu0 0.0
    %1993 = vmatpush.msra.mxu0 0.0
    %1994 = vmatpush.msra.mxu0 0.0
    %1995 = vmatpush.msra.mxu0 0.0
    %1996 = vmatpush.msra.mxu0 0.0
    %1997 = vmatpush.msra.mxu0 0.0
    %1998 = vmatpush.msra.mxu0 %v190
    %1999 = vmatpush.msra.mxu0 %v189
    %2000 = vmatpush.msra.mxu0 %v188
    %2001 = vmatpush.msra.mxu0 %v187
    %2002 = vmatmul.f32.gmra.mxu0 %v1984
    %v2003 = vpop.f32.mrf.mxu0
    %v2004 = vadd.f32 %v511, %v2003
    %2005 = vdwg.mxu0
    %v2007 = vrot.slane %v1565, 3
    %2008 = vrot.lane.b32.xlu0 %v2007, 32
    %v2009 = vpop.permute.xlu0 %2008
    %v2010 = vsel %vm107, %v2009, 0
    %2012 = vmatpush.msra.mxu0 0.0
    %2013 = vmatpush.msra.mxu0 0.0
    %2014 = vmatpush.msra.mxu0 0.0
    %2015 = vmatpush.msra.mxu0 0.0
    %2016 = vmatpush.msra.mxu0 0.0
    %2017 = vmatpush.msra.mxu0 0.0
    %2018 = vmatpush.msra.mxu0 0.0
    %2019 = vmatpush.msra.mxu0 0.0
    %2020 = vmatpush.msra.mxu0 0.0
    %2021 = vmatpush.msra.mxu0 0.0
    %2022 = vmatpush.msra.mxu0 0.0
    %2023 = vmatpush.msra.mxu0 0.0
    %2024 = vmatpush.msra.mxu0 %v186
    %2025 = vmatpush.msra.mxu0 %v185
    %2026 = vmatpush.msra.mxu0 %v184
    %2027 = vmatpush.msra.mxu0 %v183
    %2028 = vmatmul.f32.gmra.mxu0 %v2010
    %v2029 = vpop.f32.mrf.mxu0
    %v2030 = vadd.f32 0.0, %v2029
    %2031 = vdwg.mxu0
    %v2032 = vadd.f32 %v2004, %v2030
    %v2033 = vxor.u32 %v2032, 2147483648
    %v2034 = vmul.f32 %v2033, 1.442695
    %v2035 = vpow.pop %v2034
    %v2036 = vadd.f32 %v2035, 1.0
    %v2037 = vrcp.pop %v2036
    %v2038 = vmul.f32 %v2036, %v2037
    %v2039 = vsub.f32 1.0, %v2038
    %v2040 = vmul.f32 %v2037, %v2039
    %v2041 = vadd.f32 %v2037, %v2040
    %vm2042 = vweird.f32 %v2036
    %vm2043 = vweird.f32 %v2037
    %vm2044 = vmor %vm2042, %vm2043
    %v2045 = vsel %vm2044, %v2037, %v2041
    %v2046 = vand.u32 2147483647, %v2036
    %vm2047 = vcmp.eq.f32.partialorder %v2046, 8.507059e+37
    %v2048 = vand.u32 %v2036, 2147483648
    %v2049 = vor.u32 1.1754944e-38, %v2048
    %v2050 = vsel %vm2047, %v2049, %v2045
    %v2051 = vmul.f32 1.0, %v2050
    %v2052 = vtanh.pop %v2032
    %v2054 = vrot.slane %v1559, 3
    %v2056 = vmul.f32 %v2051, %v2054
    %2058 = vrot.lane.b32.xlu0 %v2052, 64
    %v2059 = vpop.permute.xlu0 %2058
    %v2061 = vmul.f32 %v2051, %v2059
    %2063 = vrot.lane.b32.xlu0 %v2061, 32
    %v2064 = vpop.permute.xlu0 %2063
    %v2066 = vadd.f32 %v2056, %v2064
    %v2067 = vtanh.pop %v2066
    %2069 = vrot.lane.b32.xlu0 %v2067, 64
    %v2070 = vpop.permute.xlu0 %2069
    %v2072 = vmul.f32 %v2051, %v2070
    %v2073 = vperm.slane %v2072, 0
    %v2074 = vmul.f32 %v203, %v2073
    %v2075 = vadd.f32 %v2074, 0.0
    %2077 = vrot.lane.b32.xlu0 %v2072, 32
    %v2078 = vpop.permute.xlu0 %2077
    %v2079 = vsel %vm107, %v2078, 0
    %2081 = vmatpush.msra.mxu0 0.0
    %2082 = vmatpush.msra.mxu0 0.0
    %2083 = vmatpush.msra.mxu0 0.0
    %2084 = vmatpush.msra.mxu0 0.0
    %2085 = vmatpush.msra.mxu0 0.0
    %2086 = vmatpush.msra.mxu0 0.0
    %2087 = vmatpush.msra.mxu0 0.0
    %2088 = vmatpush.msra.mxu0 0.0
    %2089 = vmatpush.msra.mxu0 0.0
    %2090 = vmatpush.msra.mxu0 0.0
    %2091 = vmatpush.msra.mxu0 0.0
    %2092 = vmatpush.msra.mxu0 0.0
    %2093 = vmatpush.msra.mxu0 %v186
    %2094 = vmatpush.msra.mxu0 %v185
    %2095 = vmatpush.msra.mxu0 %v184
    %2096 = vmatpush.msra.mxu0 %v183
    %2097 = vmatmul.f32.gmra.mxu0 %v2079
    %v2098 = vpop.f32.mrf.mxu0
    %v2099 = vadd.f32 0.0, %v2098
    %2100 = vdwg.mxu0
    %v2102 = vrot.slane %v2099, 7
    %v2104 = vadd.f32 %v2004, %v2102
    %v2105 = vxor.u32 %v2104, 2147483648
    %v2106 = vmul.f32 %v2105, 1.442695
    %v2107 = vpow.pop %v2106
    %v2108 = vadd.f32 %v2107, 1.0
    %v2109 = vrcp.pop %v2108
    %v2110 = vmul.f32 %v2108, %v2109
    %v2111 = vsub.f32 1.0, %v2110
    %v2112 = vmul.f32 %v2109, %v2111
    %v2113 = vadd.f32 %v2109, %v2112
    %vm2114 = vweird.f32 %v2108
    %vm2115 = vweird.f32 %v2109
    %vm2116 = vmor %vm2114, %vm2115
    %v2117 = vsel %vm2116, %v2109, %v2113
    %v2118 = vand.u32 2147483647, %v2108
    %vm2119 = vcmp.eq.f32.partialorder %v2118, 8.507059e+37
    %v2120 = vand.u32 %v2108, 2147483648
    %v2121 = vor.u32 1.1754944e-38, %v2120
    %v2122 = vsel %vm2119, %v2121, %v2117
    %v2123 = vmul.f32 1.0, %v2122
    %v2124 = vtanh.pop %v2104
    %v2126 = vrot.slane %v2066, 7
    %v2128 = vmul.f32 %v2123, %v2126
    %2130 = vrot.lane.b32.xlu0 %v2124, 64
    %v2131 = vpop.permute.xlu0 %2130
    %v2133 = vmul.f32 %v2123, %v2131
    %2135 = vrot.lane.b32.xlu0 %v2133, 32
    %v2136 = vpop.permute.xlu0 %2135
    %v2138 = vadd.f32 %v2128, %v2136
    %v2139 = vtanh.pop %v2138
    %2141 = vrot.lane.b32.xlu0 %v2139, 64
    %v2142 = vpop.permute.xlu0 %2141
    %v2144 = vmul.f32 %v2123, %v2142
    %v2145 = vperm.slane %v2144, 1
    %v2146 = vmul.f32 %v206, %v2145
    %v2147 = vadd.f32 %v2075, %v2146
    %v2149 = vrot.slane %v2144, 1
    %2150 = vrot.lane.b32.xlu0 %v2149, 32
    %v2151 = vpop.permute.xlu0 %2150
    %v2152 = vsel %vm107, %v2151, 0
    %2154 = vmatpush.msra.mxu0 0.0
    %2155 = vmatpush.msra.mxu0 0.0
    %2156 = vmatpush.msra.mxu0 0.0
    %2157 = vmatpush.msra.mxu0 0.0
    %2158 = vmatpush.msra.mxu0 0.0
    %2159 = vmatpush.msra.mxu0 0.0
    %2160 = vmatpush.msra.mxu0 0.0
    %2161 = vmatpush.msra.mxu0 0.0
    %2162 = vmatpush.msra.mxu0 0.0
    %2163 = vmatpush.msra.mxu0 0.0
    %2164 = vmatpush.msra.mxu0 0.0
    %2165 = vmatpush.msra.mxu0 0.0
    %2166 = vmatpush.msra.mxu0 %v186
    %2167 = vmatpush.msra.mxu0 %v185
    %2168 = vmatpush.msra.mxu0 %v184
    %2169 = vmatpush.msra.mxu0 %v183
    %2170 = vmatmul.f32.gmra.mxu0 %v2152
    %v2171 = vpop.f32.mrf.mxu0
    %v2172 = vadd.f32 0.0, %v2171
    %2173 = vdwg.mxu0
    %v2175 = vrot.slane %v2172, 6
    %v2177 = vadd.f32 %v2004, %v2175
    %v2178 = vxor.u32 %v2177, 2147483648
    %v2179 = vmul.f32 %v2178, 1.442695
    %v2180 = vpow.pop %v2179
    %v2181 = vadd.f32 %v2180, 1.0
    %v2182 = vrcp.pop %v2181
    %v2183 = vmul.f32 %v2181, %v2182
    %v2184 = vsub.f32 1.0, %v2183
    %v2185 = vmul.f32 %v2182, %v2184
    %v2186 = vadd.f32 %v2182, %v2185
    %vm2187 = vweird.f32 %v2181
    %vm2188 = vweird.f32 %v2182
    %vm2189 = vmor %vm2187, %vm2188
    %v2190 = vsel %vm2189, %v2182, %v2186
    %v2191 = vand.u32 2147483647, %v2181
    %vm2192 = vcmp.eq.f32.partialorder %v2191, 8.507059e+37
    %v2193 = vand.u32 %v2181, 2147483648
    %v2194 = vor.u32 1.1754944e-38, %v2193
    %v2195 = vsel %vm2192, %v2194, %v2190
    %v2196 = vmul.f32 1.0, %v2195
    %v2197 = vtanh.pop %v2177
    %v2199 = vrot.slane %v2138, 7
    %v2201 = vmul.f32 %v2196, %v2199
    %2203 = vrot.lane.b32.xlu0 %v2197, 64
    %v2204 = vpop.permute.xlu0 %2203
    %v2206 = vmul.f32 %v2196, %v2204
    %2208 = vrot.lane.b32.xlu0 %v2206, 32
    %v2209 = vpop.permute.xlu0 %2208
    %v2211 = vadd.f32 %v2201, %v2209
    %v2212 = vtanh.pop %v2211
    %2214 = vrot.lane.b32.xlu0 %v2212, 64
    %v2215 = vpop.permute.xlu0 %2214
    %v2217 = vmul.f32 %v2196, %v2215
    %v2218 = vperm.slane %v2217, 2
    %v2219 = vmul.f32 %v209, %v2218
    %v2220 = vadd.f32 %v2147, %v2219
    %v2222 = vrot.slane %v2217, 2
    %2223 = vrot.lane.b32.xlu0 %v2222, 32
    %v2224 = vpop.permute.xlu0 %2223
    %v2225 = vsel %vm107, %v2224, 0
    %2227 = vmatpush.msra.mxu0 0.0
    %2228 = vmatpush.msra.mxu0 0.0
    %2229 = vmatpush.msra.mxu0 0.0
    %2230 = vmatpush.msra.mxu0 0.0
    %2231 = vmatpush.msra.mxu0 0.0
    %2232 = vmatpush.msra.mxu0 0.0
    %2233 = vmatpush.msra.mxu0 0.0
    %2234 = vmatpush.msra.mxu0 0.0
    %2235 = vmatpush.msra.mxu0 0.0
    %2236 = vmatpush.msra.mxu0 0.0
    %2237 = vmatpush.msra.mxu0 0.0
    %2238 = vmatpush.msra.mxu0 0.0
    %2239 = vmatpush.msra.mxu0 %v186
    %2240 = vmatpush.msra.mxu0 %v185
    %2241 = vmatpush.msra.mxu0 %v184
    %2242 = vmatpush.msra.mxu0 %v183
    %2243 = vmatmul.f32.gmra.mxu0 %v2225
    %v2244 = vpop.f32.mrf.mxu0
    %v2245 = vadd.f32 0.0, %v2244
    %2246 = vdwg.mxu0
    %v2248 = vrot.slane %v2245, 5
    %v2250 = vadd.f32 %v2004, %v2248
    %v2251 = vxor.u32 %v2250, 2147483648
    %v2252 = vmul.f32 %v2251, 1.442695
    %v2253 = vpow.pop %v2252
    %v2254 = vadd.f32 %v2253, 1.0
    %v2255 = vrcp.pop %v2254
    %v2256 = vmul.f32 %v2254, %v2255
    %v2257 = vsub.f32 1.0, %v2256
    %v2258 = vmul.f32 %v2255, %v2257
    %v2259 = vadd.f32 %v2255, %v2258
    %vm2260 = vweird.f32 %v2254
    %vm2261 = vweird.f32 %v2255
    %vm2262 = vmor %vm2260, %vm2261
    %v2263 = vsel %vm2262, %v2255, %v2259
    %v2264 = vand.u32 2147483647, %v2254
    %vm2265 = vcmp.eq.f32.partialorder %v2264, 8.507059e+37
    %v2266 = vand.u32 %v2254, 2147483648
    %v2267 = vor.u32 1.1754944e-38, %v2266
    %v2268 = vsel %vm2265, %v2267, %v2263
    %v2269 = vmul.f32 1.0, %v2268
    %v2270 = vtanh.pop %v2250
    %v2272 = vrot.slane %v2211, 7
    %v2274 = vmul.f32 %v2269, %v2272
    %2276 = vrot.lane.b32.xlu0 %v2270, 64
    %v2277 = vpop.permute.xlu0 %2276
    %v2279 = vmul.f32 %v2269, %v2277
    %2281 = vrot.lane.b32.xlu0 %v2279, 32
    %v2282 = vpop.permute.xlu0 %2281
    %v2284 = vadd.f32 %v2274, %v2282
    %v2285 = vtanh.pop %v2284
    %2287 = vrot.lane.b32.xlu0 %v2285, 64
    %v2288 = vpop.permute.xlu0 %2287
    %v2290 = vmul.f32 %v2269, %v2288
    %v2291 = vperm.slane %v2290, 3
    %v2292 = vmul.f32 %v212, %v2291
    %v2293 = vadd.f32 %v2220, %v2292
    %v2294 = vsel %vm824, %v2293, 0.0
    %v2295 = vrot.slane %v2294, 4
    %v2296 = vadd.f32 %v2294, %v2295
    %v2297 = vrot.slane %v2296, 2
    %v2298 = vadd.f32 %v2296, %v2297
    %v2299 = vrot.slane %v2298, 1
    %v2300 = vadd.f32 %v2298, %v2299
    %v2301 = vmul.f32 %v2300, %v838
    %v2302 = vsub.f32 %v2293, %v2301
    %v2303 = vmul.f32 %v2302, %v2302
    %v2304 = vsel %vm824, %v2303, 0.0
    %v2305 = vrot.slane %v2304, 4
    %v2306 = vadd.f32 %v2304, %v2305
    %v2307 = vrot.slane %v2306, 2
    %v2308 = vadd.f32 %v2306, %v2307
    %v2309 = vrot.slane %v2308, 1
    %v2310 = vadd.f32 %v2308, %v2309
    %v2311 = vmul.f32 %v2310, %v838
    %v2312 = vadd.f32 %v2311, 1e-05
    %v2313 = vrsqrt.pop %v2312
    %v2314 = vmul.f32 %v2313, %v2312
    %v2315 = vmul.f32 %v2314, %v2313
    %v2316 = vmul.f32 0.5, %v2315
    %v2317 = vsub.f32 1.5, %v2316
    %v2318 = vmul.f32 %v2313, %v2317
    %vm2319 = vweird.f32 %v2312
    %vm2320 = vweird.f32 %v2313
    %vm2321 = vmor %vm2319, %vm2320
    %v2322 = vsel %vm2321, %v2313, %v2318
    %2324 = vrot.lane.b32.xlu0 %v2322, 32
    %v2325 = vpop.permute.xlu0 %2324
    %v2327 = vmul.f32 %v192, %v2325
    %v2329 = vperm.slane %v2327, 0
    %2330 = vrot.lane.b32.xlu0 %v2329, 96
    %v2331 = vpop.permute.xlu0 %2330
    %v2333 = vmul.f32 %v2302, %v2331
    %v2334 = vadd.f32 %v2333, %v875
    %v2335 = vmul.f32 %v2334, %v2334
    %v2336 = vsub.f32 0.0, %v2335
    %v2337 = vmul.f32 %v2336, 1.442695
    %v2338 = vpow.pop %v2337
    %2340 = vrot.lane.b32.xlu0 %v2338, 32
    %v2341 = vpop.permute.xlu0 %2340
    %v2342 = vsel %vm107, %v2341, 0
    %2344 = vmatpush.msra.mxu0 0.0
    %2345 = vmatpush.msra.mxu0 0.0
    %2346 = vmatpush.msra.mxu0 0.0
    %2347 = vmatpush.msra.mxu0 0.0
    %2348 = vmatpush.msra.mxu0 0.0
    %2349 = vmatpush.msra.mxu0 0.0
    %2350 = vmatpush.msra.mxu0 0.0
    %2351 = vmatpush.msra.mxu0 0.0
    %2352 = vmatpush.msra.mxu0 0.0
    %2353 = vmatpush.msra.mxu0 0.0
    %2354 = vmatpush.msra.mxu0 0.0
    %2355 = vmatpush.msra.mxu0 0.0
    %2356 = vmatpush.msra.mxu0 %v197
    %2357 = vmatpush.msra.mxu0 %v196
    %2358 = vmatpush.msra.mxu0 %v195
    %2359 = vmatpush.msra.mxu0 %v194
    %2360 = vmatmul.f32.gmra.mxu0 %v2342
    %v2361 = vpop.f32.mrf.mxu0
    %v2362 = vadd.f32 %v883, %v2361
    %2363 = vdwg.mxu0
    %v2364 = vsel %vm911, %v2362, -1e+30
    %v2365 = vsel %vm914, %v2362, -1e+30
    %v2366 = vsel %vm916, %v2364, -inf
    %2367 = vmax.xlane.f32.xlu0 %v2366
    %v2368 = vpop.xlane.xlu0 %2367
    %v2369 = vsub.f32 %v2364, %v2368
    %v2370 = vmul.f32 %v2369, 1.442695
    %v2371 = vpow.pop %v2370
    %v2372 = vsel %vm916, %v2365, -inf
    %2373 = vmax.xlane.f32.xlu0 %v2372
    %v2374 = vpop.xlane.xlu0 %2373
    %v2375 = vsub.f32 %v2365, %v2374
    %v2376 = vmul.f32 %v2375, 1.442695
    %v2377 = vpow.pop %v2376
    %v2378 = vsel %vm916, %v2371, 0.0
    %2379 = vadd.xlane.f32.xlu0 %v2378
    %v2380 = vpop.xlane.xlu0 %2379
    %v2381 = vrcp.pop %v2380
    %v2382 = vmul.f32 %v2380, %v2381
    %v2383 = vsub.f32 1.0, %v2382
    %v2384 = vmul.f32 %v2381, %v2383
    %v2385 = vadd.f32 %v2381, %v2384
    %vm2386 = vweird.f32 %v2380
    %vm2387 = vweird.f32 %v2381
    %vm2388 = vmor %vm2386, %vm2387
    %v2389 = vsel %vm2388, %v2381, %v2385
    %v2390 = vand.u32 2147483647, %v2380
    %vm2391 = vcmp.eq.f32.partialorder %v2390, 8.507059e+37
    %v2392 = vand.u32 %v2380, 2147483648
    %v2393 = vor.u32 1.1754944e-38, %v2392
    %v2394 = vsel %vm2391, %v2393, %v2389
    %v2395 = vmul.f32 %v2371, %v2394
    %v2396 = vsel %vm916, %v2377, 0.0
    %2397 = vadd.xlane.f32.xlu0 %v2396
    %v2398 = vpop.xlane.xlu0 %2397
    %v2399 = vrcp.pop %v2398
    %v2400 = vmul.f32 %v2398, %v2399
    %v2401 = vsub.f32 1.0, %v2400
    %v2402 = vmul.f32 %v2399, %v2401
    %v2403 = vadd.f32 %v2399, %v2402
    %vm2404 = vweird.f32 %v2398
    %vm2405 = vweird.f32 %v2399
    %vm2406 = vmor %vm2404, %vm2405
    %v2407 = vsel %vm2406, %v2399, %v2403
    %v2408 = vand.u32 2147483647, %v2398
    %vm2409 = vcmp.eq.f32.partialorder %v2408, 8.507059e+37
    %v2410 = vand.u32 %v2398, 2147483648
    %v2411 = vor.u32 1.1754944e-38, %v2410
    %v2412 = vsel %vm2409, %v2411, %v2407
    %v2413 = vmul.f32 %v2377, %v2412
    %v2414 = vadd.f32 %v2395, %v2413
    %s2415 = scalar_lea.vmem %s16, 8
    %2416 = vst [vmem:[%s2415] sm:$0xf] %v2414
    %2418 = vrot.lane.b32.xlu0 %v1977, 32
    %v2419 = vpop.permute.xlu0 %2418
    %vm2421 = vcmask 257027
    %2422 = vst.msk [vmem:[#allocation3 - $0x3] sm:$0x8] %vm2421, %v2419
    %2424 = vrot.lane.b32.xlu0 %v1971, 96
    %v2425 = vpop.permute.xlu0 %2424
    %2427 = vst.msk [vmem:[#allocation5 - $0x3] sm:$0x8] %vm2421, %v2425
    %2429 = vrot.lane.b32.xlu0 %v2290, 32
    %v2430 = vpop.permute.xlu0 %2429
    %2432 = vst.msk [vmem:[#allocation3 - $0x2] sm:$0x8] %vm2421, %v2430
    %2434 = vrot.lane.b32.xlu0 %v2284, 96
    %v2435 = vpop.permute.xlu0 %2434
    %2437 = vst.msk [vmem:[#allocation5 - $0x2] sm:$0x8] %vm2421, %v2435
    // Predicated region
    $region66: #{run.1} parent=1 // pred_check
      _
    $region67: #{run.1} parent=1 // pred_check_branch
      %2439 = sbr.rel (0) target = $region69
    $region68: #{run.1} parent=1 // pred_region
      _
    $region69: #{run.1} parent=1 // pred_fallthru
      _
    // Predicated region
    $region70: #{run.1} parent=1 // pred_check
      _
    $region71: #{run.1} parent=1 // pred_check_branch
      %2441 = sbr.rel (0) target = $region73
    $region72: #{run.1} parent=1 // pred_region
      %2443 = vsyncadd [#allocation4], 0
      %s2445 = sshll.u32 [#allocation3], 4
      %s2446 = int_to_ptr.vmem [resolvable:$true] %s2445
      %s2447 = sshll.u32 %s17, 4
      %s2448 = int_to_ptr.hbm [resolvable:$true] %s2447
      %2450 = dma.vmem_to_hbm [thread:$0]  %s2446, 32, %s2448, [#allocation4]
    $region73: #{run.1} parent=1 // pred_fallthru
      _
    // Predicated region
    $region74: #{run.1} parent=1 // pred_check
      _
    $region75: #{run.1} parent=1 // pred_check_branch
      %2452 = sbr.rel (0) target = $region77
    $region76: #{run.1} parent=1 // pred_region
      %2454 = vsyncadd [#allocation6], 0
      %s2456 = sshll.u32 [#allocation5], 4
      %s2457 = int_to_ptr.vmem [resolvable:$true] %s2456
      %s2458 = sshll.u32 %s18, 4
      %s2459 = int_to_ptr.hbm [resolvable:$true] %s2458
      %2461 = dma.vmem_to_hbm [thread:$0]  %s2457, 32, %s2459, [#allocation6]
    $region77: #{run.1} parent=1 // pred_fallthru
      _
    // Predicated region
    $region78: #{run.1} parent=1 // pred_check
      _
    $region79: #{run.1} parent=1 // pred_check_branch
      %2463 = sbr.rel (0) target = $region81
    $region80: #{run.1} parent=1 // pred_region
      _
    $region81: #{run.1} parent=1 // pred_fallthru
      _
    // Predicated region
    $region82: #{run.1} parent=1 // pred_check
      _
    $region83: #{run.1} parent=1 // pred_check_branch
      %2465 = sbr.rel (0) target = $region85
    $region84: #{run.1} parent=1 // pred_region
      %2467 = dma.done [#allocation4], 32
    $region85: #{run.1} parent=1 // pred_fallthru
      _
    // Predicated region
    $region86: #{run.1} parent=1 // pred_check
      _
    $region87: #{run.1} parent=1 // pred_check_branch
      %2469 = sbr.rel (0) target = $region89
    $region88: #{run.1} parent=1 // pred_region
      %2471 = dma.done [#allocation6], 32
    $region89: #{run.1} parent=1 // pred_fallthru
      _
    %2472 = vsyncpa [#allocation4], 1
    %2473 = vsyncpa [#allocation6], 1

</llo_original>
